<compile_context>
chip_gen: v7x
topology: tpu7x:2x2x1
jax: 0.10.0
libtpu: 0.0.40
codegen_flags: <defaults>
</compile_context>

<pallas_src>
import jax
import jax.numpy as jnp
import numpy as np
from jax.experimental import pallas as pl
from jax.experimental.pallas import tpu as pltpu

# --- small, module-consistent sizes -----------------------------------------
N, H, W = 2, 16, 16
PLANES = 4
WIDTH = PLANES                 # int(planes * 64/64) * 1
COUT = PLANES * 4              # planes * expansion
INPLANES = COUT                # required for identity residual (downsample=None)
M = N * H * W
KTAPS = 9                      # 3x3 conv taps
EPS = 1e-5                     # PyTorch BatchNorm2d default eps


# --- the kernel ---------------------------------------------------------------
def bottleneck_kernel(x_ref, w1_ref, b1_ref, w2_ref, b2_ref, w3_ref, b3_ref,
                      out_ref, pad_ref, col_ref):
    x2d = x_ref[...]                                          # (M, INPLANES)

    # conv1 (1x1, bn1 scale folded into w1) + bias + relu -> (M, WIDTH)
    h1 = jnp.dot(x2d, w1_ref[...], preferred_element_type=jnp.float32)
    h1 = jnp.maximum(h1 + b1_ref[...], 0.0)

    # conv2 (3x3, pad=1, stride=1) via im2col + a single K=9*WIDTH matmul.
    # Zero only the 1-pixel border of the padded scratch (4 thin slabs cover
    # every border element across N and channels), then write the interior.
    pad_ref[:, 0:1, :, :] = jnp.zeros((N, 1, W + 2, WIDTH), jnp.float32)
    pad_ref[:, H + 1:H + 2, :, :] = jnp.zeros((N, 1, W + 2, WIDTH), jnp.float32)
    pad_ref[:, 1:H + 1, 0:1, :] = jnp.zeros((N, H, 1, WIDTH), jnp.float32)
    pad_ref[:, 1:H + 1, W + 1:W + 2, :] = jnp.zeros((N, H, 1, WIDTH), jnp.float32)
    pad_ref[:, 1:H + 1, 1:W + 1, :] = h1.reshape(N, H, W, WIDTH)

    # im2col: each of the 9 taps occupies a contiguous WIDTH-wide lane column.
    # The centre tap is exactly h1, so write it straight from registers and
    # read only the 8 border-touching windows back from the padded scratch.
    col_ref[:, 4 * WIDTH:5 * WIDTH] = h1
    for ky in range(3):
        for kx in range(3):
            if (ky, kx) == (1, 1):
                continue
            t = ky * 3 + kx
            col_ref[:, t * WIDTH:(t + 1) * WIDTH] = (
                pad_ref[:, ky:ky + H, kx:kx + W, :].reshape(M, WIDTH))

    # one (M, 36) @ (36, WIDTH) matmul (bn2 scale folded into w2) + bias + relu
    h2 = jnp.dot(col_ref[...], w2_ref[...], preferred_element_type=jnp.float32)
    h2 = jnp.maximum(h2 + b2_ref[...], 0.0)                   # (M, WIDTH)

    # conv3 (1x1, bn3 scale folded) + bias, identity residual, final relu
    h3 = jnp.dot(h2, w3_ref[...], preferred_element_type=jnp.float32)
    out_ref[...] = jnp.maximum(h3 + b3_ref[...] + x2d, 0.0)   # (M, COUT)


# --- wrapper ------------------------------------------------------------------
def bottleneck_forward(x_nhwc, params):
    w1, b1, w2, b2, w3, b3 = params
    x2d = x_nhwc.reshape(M, INPLANES)
    vmem = lambda: pl.BlockSpec(memory_space=pltpu.MemorySpace.VMEM)

    flops = 2 * M * (INPLANES * WIDTH + KTAPS * WIDTH * WIDTH + WIDTH * COUT)
    bytes_accessed = 4 * (M * INPLANES + M * COUT
                          + INPLANES * WIDTH + KTAPS * WIDTH * WIDTH
                          + WIDTH * COUT + 2 * WIDTH + COUT)

    out2d = pl.pallas_call(
        bottleneck_kernel,
        out_shape=jax.ShapeDtypeStruct((M, COUT), jnp.float32),
        in_specs=[vmem() for _ in range(7)],
        out_specs=vmem(),
        scratch_shapes=[
            pltpu.VMEM((N, H + 2, W + 2, WIDTH), jnp.float32),   # padded act
            pltpu.VMEM((M, KTAPS * WIDTH), jnp.float32),         # im2col slab
        ],
        cost_estimate=pl.CostEstimate(flops=flops, transcendentals=0,
                                      bytes_accessed=bytes_accessed),
    )(x2d, w1, b1, w2, b2, w3, b3)
    return out2d.reshape(N, H, W, COUT)


# --- deterministic parameter construction (synthetic, no checkpoint) ----------
def make_params(key):
    ks = jax.random.split(key, 15)

    w1 = 0.1 * jax.random.normal(ks[0], (INPLANES, WIDTH), jnp.float32)
    w2_hwio = 0.1 * jax.random.normal(ks[1], (3, 3, WIDTH, WIDTH), jnp.float32)
    w3 = 0.1 * jax.random.normal(ks[2], (WIDTH, COUT), jnp.float32)

    def bn_fold(kg, kb, km, kv, c):
        gamma = 1.0 + 0.1 * jax.random.normal(kg, (c,), jnp.float32)
        beta = 0.1 * jax.random.normal(kb, (c,), jnp.float32)
        mean = 0.1 * jax.random.normal(km, (c,), jnp.float32)
        var = jax.random.uniform(kv, (c,), jnp.float32, minval=0.5, maxval=1.5)
        scale = gamma / jnp.sqrt(var + EPS)
        bias = beta - mean * scale
        return scale, bias

    s1, b1 = bn_fold(ks[3], ks[4], ks[5], ks[6], WIDTH)
    s2, b2 = bn_fold(ks[7], ks[8], ks[9], ks[10], WIDTH)
    s3, b3 = bn_fold(ks[11], ks[12], ks[13], ks[14], COUT)

    # Fold eval-mode BN scale into the conv weights (free host-side math);
    # reshape w2 to (9*WIDTH, WIDTH) with row = tap*WIDTH + cin to match the
    # im2col column layout.
    w1f = w1 * s1[None, :]
    w2f = (w2_hwio * s2[None, None, None, :]).reshape(KTAPS * WIDTH, WIDTH)
    w3f = w3 * s3[None, :]

    kernel_params = (w1f, b1.reshape(1, WIDTH),
                     w2f, b2.reshape(1, WIDTH),
                     w3f, b3.reshape(1, COUT))
    ref_params = (w1, s1, b1, w2_hwio, s2, b2, w3, s3, b3)
    return kernel_params, ref_params


# --- pure-JAX reference (unfolded BN, same NHWC semantics) ---------------------
def reference_forward(x_nhwc, ref_params):
    w1, s1, b1, w2_hwio, s2, b2, w3, s3, b3 = ref_params

    def bn(y, s, b):
        return y * s.reshape(1, 1, 1, -1) + b.reshape(1, 1, 1, -1)

    h = jnp.einsum('nhwc,cd->nhwd', x_nhwc, w1)
    h = jax.nn.relu(bn(h, s1, b1))
    h = jax.lax.conv_general_dilated(
        h, w2_hwio, window_strides=(1, 1), padding=((1, 1), (1, 1)),
        dimension_numbers=('NHWC', 'HWIO', 'NHWC'))
    h = jax.nn.relu(bn(h, s2, b2))
    h = jnp.einsum('nhwc,cd->nhwd', h, w3)
    h = bn(h, s3, b3)
    return jax.nn.relu(h + x_nhwc)


if __name__ == "__main__":
    key = jax.random.PRNGKey(0)
    kx, kp = jax.random.split(key)

    # PyTorch-style NCHW input, transposed to NHWC for the kernel.
    x_nchw = jax.random.normal(kx, (N, INPLANES, H, W), jnp.float32)
    x_nhwc = jnp.transpose(x_nchw, (0, 2, 3, 1))

    kernel_params, ref_params = make_params(kp)

    out = bottleneck_forward(x_nhwc, kernel_params)
    out = jax.block_until_ready(out)

    ref = reference_forward(x_nhwc, ref_params)
    assert out.shape == (N, H, W, COUT)
    np.testing.assert_allclose(np.asarray(out), np.asarray(ref),
                               rtol=1e-3, atol=1e-3)

    print("KERNEL_OK")
</pallas_src>

<mosaic_0001>
module attributes {stable_mosaic.version = 11 : i64} {
  func.func @bottleneck_kernel(%arg0: memref<512x16xf32, #tpu.memory_space<vmem>>, %arg1: memref<16x4xf32, #tpu.memory_space<vmem>>, %arg2: memref<1x4xf32, #tpu.memory_space<vmem>>, %arg3: memref<36x4xf32, #tpu.memory_space<vmem>>, %arg4: memref<1x4xf32, #tpu.memory_space<vmem>>, %arg5: memref<4x16xf32, #tpu.memory_space<vmem>>, %arg6: memref<1x16xf32, #tpu.memory_space<vmem>>, %arg7: memref<512x16xf32, #tpu.memory_space<vmem>>, %arg8: memref<2x18x18x4xf32, #tpu.memory_space<vmem>>, %arg9: memref<512x36xf32, #tpu.memory_space<vmem>>) attributes {dimension_semantics = [], scalar_prefetch = 0 : i64, scratch_operands = 2 : i64, tpu.core_type = #tpu.core_type<tc>} {
    %c0 = arith.constant 0 : index
    %c0_0 = arith.constant 0 : index
    %0 = vector.load %arg0[%c0, %c0_0] : memref<512x16xf32, #tpu.memory_space<vmem>>, vector<512x16xf32>
    %c0_1 = arith.constant 0 : index
    %c0_2 = arith.constant 0 : index
    %1 = vector.load %arg1[%c0_1, %c0_2] : memref<16x4xf32, #tpu.memory_space<vmem>>, vector<16x4xf32>
    %cst = arith.constant dense<0.000000e+00> : vector<512x4xf32>
    %2 = tpu.matmul %0, %1, %cst {dimension_numbers = #tpu.dot_dimension_numbers<[1], [0], [0], [1], [0, 0, 1, 1], [], []>} : vector<512x16xf32>, vector<16x4xf32>, vector<512x4xf32> -> vector<512x4xf32>
    %c0_3 = arith.constant 0 : index
    %c0_4 = arith.constant 0 : index
    %3 = vector.load %arg2[%c0_3, %c0_4] : memref<1x4xf32, #tpu.memory_space<vmem>>, vector<1x4xf32>
    %4 = vector.broadcast %3 : vector<1x4xf32> to vector<512x4xf32>
    %5 = arith.addf %2, %4 : vector<512x4xf32>
    %cst_5 = arith.constant 0.000000e+00 : f32
    %6 = vector.broadcast %cst_5 : f32 to vector<512x4xf32>
    %7 = arith.maximumf %5, %6 : vector<512x4xf32>
    %cst_6 = arith.constant 0.000000e+00 : f32
    %8 = vector.broadcast %cst_6 : f32 to vector<2x1x18x4xf32>
    %c0_7 = arith.constant 0 : index
    %c0_8 = arith.constant 0 : index
    %c0_9 = arith.constant 0 : index
    %c0_10 = arith.constant 0 : index
    %9 = vector.load %arg8[%c0_7, %c0_8, %c0_9, %c0_10] : memref<2x18x18x4xf32, #tpu.memory_space<vmem>>, vector<2x1x18x4xf32>
    tpu.vector_store %arg8[%c0_7, %c0_8, %c0_9, %c0_10], %8 {strides = array<i32>} : memref<2x18x18x4xf32, #tpu.memory_space<vmem>>, vector<2x1x18x4xf32>,
    %cst_11 = arith.constant 0.000000e+00 : f32
    %10 = vector.broadcast %cst_11 : f32 to vector<2x1x18x4xf32>
    %c0_12 = arith.constant 0 : index
    %c17 = arith.constant 17 : index
    %c0_13 = arith.constant 0 : index
    %c0_14 = arith.constant 0 : index
    %11 = vector.load %arg8[%c0_12, %c17, %c0_13, %c0_14] : memref<2x18x18x4xf32, #tpu.memory_space<vmem>>, vector<2x1x18x4xf32>
    tpu.vector_store %arg8[%c0_12, %c17, %c0_13, %c0_14], %10 {strides = array<i32>} : memref<2x18x18x4xf32, #tpu.memory_space<vmem>>, vector<2x1x18x4xf32>,
    %cst_15 = arith.constant 0.000000e+00 : f32
    %12 = vector.broadcast %cst_15 : f32 to vector<2x16x1x4xf32>
    %c0_16 = arith.constant 0 : index
    %c1 = arith.constant 1 : index
    %c0_17 = arith.constant 0 : index
    %c0_18 = arith.constant 0 : index
    %13 = vector.load %arg8[%c0_16, %c1, %c0_17, %c0_18] : memref<2x18x18x4xf32, #tpu.memory_space<vmem>>, vector<2x16x1x4xf32>
    tpu.vector_store %arg8[%c0_16, %c1, %c0_17, %c0_18], %12 {strides = array<i32>} : memref<2x18x18x4xf32, #tpu.memory_space<vmem>>, vector<2x16x1x4xf32>,
    %cst_19 = arith.constant 0.000000e+00 : f32
    %14 = vector.broadcast %cst_19 : f32 to vector<2x16x1x4xf32>
    %c0_20 = arith.constant 0 : index
    %c1_21 = arith.constant 1 : index
    %c17_22 = arith.constant 17 : index
    %c0_23 = arith.constant 0 : index
    %15 = vector.load %arg8[%c0_20, %c1_21, %c17_22, %c0_23] : memref<2x18x18x4xf32, #tpu.memory_space<vmem>>, vector<2x16x1x4xf32>
    tpu.vector_store %arg8[%c0_20, %c1_21, %c17_22, %c0_23], %14 {strides = array<i32>} : memref<2x18x18x4xf32, #tpu.memory_space<vmem>>, vector<2x16x1x4xf32>,
    %16 = vector.shape_cast %7 : vector<512x4xf32> to vector<2x16x16x4xf32>
    %c0_24 = arith.constant 0 : index
    %c1_25 = arith.constant 1 : index
    %c1_26 = arith.constant 1 : index
    %c0_27 = arith.constant 0 : index
    %17 = vector.load %arg8[%c0_24, %c1_25, %c1_26, %c0_27] : memref<2x18x18x4xf32, #tpu.memory_space<vmem>>, vector<2x16x16x4xf32>
    tpu.vector_store %arg8[%c0_24, %c1_25, %c1_26, %c0_27], %16 {strides = array<i32>} : memref<2x18x18x4xf32, #tpu.memory_space<vmem>>, vector<2x16x16x4xf32>,
    %c0_28 = arith.constant 0 : index
    %c16 = arith.constant 16 : index
    %18 = vector.load %arg9[%c0_28, %c16] : memref<512x36xf32, #tpu.memory_space<vmem>>, vector<512x4xf32>
    tpu.vector_store %arg9[%c0_28, %c16], %7 {strides = array<i32>} : memref<512x36xf32, #tpu.memory_space<vmem>>, vector<512x4xf32>,
    %c0_29 = arith.constant 0 : index
    %c0_30 = arith.constant 0 : index
    %c0_31 = arith.constant 0 : index
    %c0_32 = arith.constant 0 : index
    %19 = vector.load %arg8[%c0_29, %c0_30, %c0_31, %c0_32] : memref<2x18x18x4xf32, #tpu.memory_space<vmem>>, vector<2x16x16x4xf32>
    %20 = vector.shape_cast %19 : vector<2x16x16x4xf32> to vector<512x4xf32>
    %c0_33 = arith.constant 0 : index
    %c0_34 = arith.constant 0 : index
    %21 = vector.load %arg9[%c0_33, %c0_34] : memref<512x36xf32, #tpu.memory_space<vmem>>, vector<512x4xf32>
    tpu.vector_store %arg9[%c0_33, %c0_34], %20 {strides = array<i32>} : memref<512x36xf32, #tpu.memory_space<vmem>>, vector<512x4xf32>,
    %c0_35 = arith.constant 0 : index
    %c0_36 = arith.constant 0 : index
    %c1_37 = arith.constant 1 : index
    %c0_38 = arith.constant 0 : index
    %22 = vector.load %arg8[%c0_35, %c0_36, %c1_37, %c0_38] : memref<2x18x18x4xf32, #tpu.memory_space<vmem>>, vector<2x16x16x4xf32>
    %23 = vector.shape_cast %22 : vector<2x16x16x4xf32> to vector<512x4xf32>
    %c0_39 = arith.constant 0 : index
    %c4 = arith.constant 4 : index
    %24 = vector.load %arg9[%c0_39, %c4] : memref<512x36xf32, #tpu.memory_space<vmem>>, vector<512x4xf32>
    tpu.vector_store %arg9[%c0_39, %c4], %23 {strides = array<i32>} : memref<512x36xf32, #tpu.memory_space<vmem>>, vector<512x4xf32>,
    %c0_40 = arith.constant 0 : index
    %c0_41 = arith.constant 0 : index
    %c2 = arith.constant 2 : index
    %c0_42 = arith.constant 0 : index
    %25 = vector.load %arg8[%c0_40, %c0_41, %c2, %c0_42] : memref<2x18x18x4xf32, #tpu.memory_space<vmem>>, vector<2x16x16x4xf32>
    %26 = vector.shape_cast %25 : vector<2x16x16x4xf32> to vector<512x4xf32>
    %c0_43 = arith.constant 0 : index
    %c8 = arith.constant 8 : index
    %27 = vector.load %arg9[%c0_43, %c8] : memref<512x36xf32, #tpu.memory_space<vmem>>, vector<512x4xf32>
    tpu.vector_store %arg9[%c0_43, %c8], %26 {strides = array<i32>} : memref<512x36xf32, #tpu.memory_space<vmem>>, vector<512x4xf32>,
    %c0_44 = arith.constant 0 : index
    %c1_45 = arith.constant 1 : index
    %c0_46 = arith.constant 0 : index
    %c0_47 = arith.constant 0 : index
    %28 = vector.load %arg8[%c0_44, %c1_45, %c0_46, %c0_47] : memref<2x18x18x4xf32, #tpu.memory_space<vmem>>, vector<2x16x16x4xf32>
    %29 = vector.shape_cast %28 : vector<2x16x16x4xf32> to vector<512x4xf32>
    %c0_48 = arith.constant 0 : index
    %c12 = arith.constant 12 : index
    %30 = vector.load %arg9[%c0_48, %c12] : memref<512x36xf32, #tpu.memory_space<vmem>>, vector<512x4xf32>
    tpu.vector_store %arg9[%c0_48, %c12], %29 {strides = array<i32>} : memref<512x36xf32, #tpu.memory_space<vmem>>, vector<512x4xf32>,
    %c0_49 = arith.constant 0 : index
    %c1_50 = arith.constant 1 : index
    %c2_51 = arith.constant 2 : index
    %c0_52 = arith.constant 0 : index
    %31 = vector.load %arg8[%c0_49, %c1_50, %c2_51, %c0_52] : memref<2x18x18x4xf32, #tpu.memory_space<vmem>>, vector<2x16x16x4xf32>
    %32 = vector.shape_cast %31 : vector<2x16x16x4xf32> to vector<512x4xf32>
    %c0_53 = arith.constant 0 : index
    %c20 = arith.constant 20 : index
    %33 = vector.load %arg9[%c0_53, %c20] : memref<512x36xf32, #tpu.memory_space<vmem>>, vector<512x4xf32>
    tpu.vector_store %arg9[%c0_53, %c20], %32 {strides = array<i32>} : memref<512x36xf32, #tpu.memory_space<vmem>>, vector<512x4xf32>,
    %c0_54 = arith.constant 0 : index
    %c2_55 = arith.constant 2 : index
    %c0_56 = arith.constant 0 : index
    %c0_57 = arith.constant 0 : index
    %34 = vector.load %arg8[%c0_54, %c2_55, %c0_56, %c0_57] : memref<2x18x18x4xf32, #tpu.memory_space<vmem>>, vector<2x16x16x4xf32>
    %35 = vector.shape_cast %34 : vector<2x16x16x4xf32> to vector<512x4xf32>
    %c0_58 = arith.constant 0 : index
    %c24 = arith.constant 24 : index
    %36 = vector.load %arg9[%c0_58, %c24] : memref<512x36xf32, #tpu.memory_space<vmem>>, vector<512x4xf32>
    tpu.vector_store %arg9[%c0_58, %c24], %35 {strides = array<i32>} : memref<512x36xf32, #tpu.memory_space<vmem>>, vector<512x4xf32>,
    %c0_59 = arith.constant 0 : index
    %c2_60 = arith.constant 2 : index
    %c1_61 = arith.constant 1 : index
    %c0_62 = arith.constant 0 : index
    %37 = vector.load %arg8[%c0_59, %c2_60, %c1_61, %c0_62] : memref<2x18x18x4xf32, #tpu.memory_space<vmem>>, vector<2x16x16x4xf32>
    %38 = vector.shape_cast %37 : vector<2x16x16x4xf32> to vector<512x4xf32>
    %c0_63 = arith.constant 0 : index
    %c28 = arith.constant 28 : index
    %39 = vector.load %arg9[%c0_63, %c28] : memref<512x36xf32, #tpu.memory_space<vmem>>, vector<512x4xf32>
    tpu.vector_store %arg9[%c0_63, %c28], %38 {strides = array<i32>} : memref<512x36xf32, #tpu.memory_space<vmem>>, vector<512x4xf32>,
    %c0_64 = arith.constant 0 : index
    %c2_65 = arith.constant 2 : index
    %c2_66 = arith.constant 2 : index
    %c0_67 = arith.constant 0 : index
    %40 = vector.load %arg8[%c0_64, %c2_65, %c2_66, %c0_67] : memref<2x18x18x4xf32, #tpu.memory_space<vmem>>, vector<2x16x16x4xf32>
    %41 = vector.shape_cast %40 : vector<2x16x16x4xf32> to vector<512x4xf32>
    %c0_68 = arith.constant 0 : index
    %c32 = arith.constant 32 : index
    %42 = vector.load %arg9[%c0_68, %c32] : memref<512x36xf32, #tpu.memory_space<vmem>>, vector<512x4xf32>
    tpu.vector_store %arg9[%c0_68, %c32], %41 {strides = array<i32>} : memref<512x36xf32, #tpu.memory_space<vmem>>, vector<512x4xf32>,
    %c0_69 = arith.constant 0 : index
    %c0_70 = arith.constant 0 : index
    %43 = vector.load %arg9[%c0_69, %c0_70] : memref<512x36xf32, #tpu.memory_space<vmem>>, vector<512x36xf32>
    %c0_71 = arith.constant 0 : index
    %c0_72 = arith.constant 0 : index
    %44 = vector.load %arg3[%c0_71, %c0_72] : memref<36x4xf32, #tpu.memory_space<vmem>>, vector<36x4xf32>
    %cst_73 = arith.constant dense<0.000000e+00> : vector<512x4xf32>
    %45 = tpu.matmul %43, %44, %cst_73 {dimension_numbers = #tpu.dot_dimension_numbers<[1], [0], [0], [1], [0, 0, 1, 1], [], []>} : vector<512x36xf32>, vector<36x4xf32>, vector<512x4xf32> -> vector<512x4xf32>
    %c0_74 = arith.constant 0 : index
    %c0_75 = arith.constant 0 : index
    %46 = vector.load %arg4[%c0_74, %c0_75] : memref<1x4xf32, #tpu.memory_space<vmem>>, vector<1x4xf32>
    %47 = vector.broadcast %46 : vector<1x4xf32> to vector<512x4xf32>
    %48 = arith.addf %45, %47 : vector<512x4xf32>
    %cst_76 = arith.constant 0.000000e+00 : f32
    %49 = vector.broadcast %cst_76 : f32 to vector<512x4xf32>
    %50 = arith.maximumf %48, %49 : vector<512x4xf32>
    %c0_77 = arith.constant 0 : index
    %c0_78 = arith.constant 0 : index
    %51 = vector.load %arg5[%c0_77, %c0_78] : memref<4x16xf32, #tpu.memory_space<vmem>>, vector<4x16xf32>
    %cst_79 = arith.constant dense<0.000000e+00> : vector<512x16xf32>
    %52 = tpu.matmul %50, %51, %cst_79 {dimension_numbers = #tpu.dot_dimension_numbers<[1], [0], [0], [1], [0, 0, 1, 1], [], []>} : vector<512x4xf32>, vector<4x16xf32>, vector<512x16xf32> -> vector<512x16xf32>
    %c0_80 = arith.constant 0 : index
    %c0_81 = arith.constant 0 : index
    %53 = vector.load %arg6[%c0_80, %c0_81] : memref<1x16xf32, #tpu.memory_space<vmem>>, vector<1x16xf32>
    %54 = vector.broadcast %53 : vector<1x16xf32> to vector<512x16xf32>
    %55 = arith.addf %52, %54 : vector<512x16xf32>
    %56 = arith.addf %55, %0 : vector<512x16xf32>
    %cst_82 = arith.constant 0.000000e+00 : f32
    %57 = vector.broadcast %cst_82 : f32 to vector<512x16xf32>
    %58 = arith.maximumf %56, %57 : vector<512x16xf32>
    %c0_83 = arith.constant 0 : index
    %c0_84 = arith.constant 0 : index
    %59 = vector.load %arg7[%c0_83, %c0_84] : memref<512x16xf32, #tpu.memory_space<vmem>>, vector<512x16xf32>
    tpu.vector_store %arg7[%c0_83, %c0_84], %58 {strides = array<i32>} : memref<512x16xf32, #tpu.memory_space<vmem>>, vector<512x16xf32>,
    return
  }
}

</mosaic_0001>

<llo_original>
// kernel: tpu_custom_call.1
$region0: #{tpu_custom_call.1}
  #allocation0 [shape = 'u32[]', space=smem, size = 0x4, offset = 0x4, fixed_abs, tag = 'smem constant byte address 0x4 - core index']
  #allocation1 [shape = 'u32[144,128]{1,0:T(1,128)}', space=vmem, size = 0x12000, scoped, tag = 'internal scratch']
  #allocation2 [shape = 'f32[2,18,18,4]{3,2,1,0:T(8,128)}', space=vmem, size = 0x6c000, scoped, tag = 'scratch operand']
  #allocation3 [shape = 'f32[512,36]{1,0:T(8,128)}', space=vmem, size = 0x40000, scoped, tag = 'scratch operand']
  %s0 = inlined_call_operand.vmem [shape: f32[512,16], index: 0, kind: input, shape index: {}]
  %s1 = inlined_call_operand.vmem [shape: f32[16,4], index: 1, kind: input, shape index: {}]
  %s2 = inlined_call_operand.vmem [shape: f32[1,4], index: 2, kind: input, shape index: {}]
  %s3 = inlined_call_operand.vmem [shape: f32[36,4], index: 3, kind: input, shape index: {}]
  %s4 = inlined_call_operand.vmem [shape: f32[1,4], index: 4, kind: input, shape index: {}]
  %s5 = inlined_call_operand.vmem [shape: f32[4,16], index: 5, kind: input, shape index: {}]
  %s6 = inlined_call_operand.vmem [shape: f32[1,16], index: 6, kind: input, shape index: {}]
  %s7 = inlined_call_operand.vmem [shape: f32[512,16], index: 7, kind: output, shape index: {}]
  %s8 = sld [smem:[#allocation0]]
  $region38: #{tpu_custom_call.1} parent=0
    _
  %s10 = ssub.s32 1, %s8
  %s11 = scalar_select 0, %s10, %s8
  // Predicated region
  $region2: #{tpu_custom_call.1} parent=0 // pred_check
    _
  $region3: #{tpu_custom_call.1} parent=0 // pred_check_branch
    %13 = sbr.rel (0) target = $region5
  $region4: #{tpu_custom_call.1} parent=0 // pred_region
    _
  $region5: #{tpu_custom_call.1} parent=0 // pred_fallthru
    _
  // Predicated region
  $region6: #{tpu_custom_call.1} parent=0 // pred_check
    _
  $region7: #{tpu_custom_call.1} parent=0 // pred_check_branch
    %15 = sbr.rel (0) target = $region9
  $region8: #{tpu_custom_call.1} parent=0 // pred_region
    _
  $region9: #{tpu_custom_call.1} parent=0 // pred_fallthru
    _
  // Predicated region
  $region10: #{tpu_custom_call.1} parent=0 // pred_check
    _
  $region11: #{tpu_custom_call.1} parent=0 // pred_check_branch
    %17 = sbr.rel (0) target = $region13
  $region12: #{tpu_custom_call.1} parent=0 // pred_region
    _
  $region13: #{tpu_custom_call.1} parent=0 // pred_fallthru
    _
  // Predicated region
  $region14: #{tpu_custom_call.1} parent=0 // pred_check
    _
  $region15: #{tpu_custom_call.1} parent=0 // pred_check_branch
    %19 = sbr.rel (0) target = $region17
  $region16: #{tpu_custom_call.1} parent=0 // pred_region
    _
  $region17: #{tpu_custom_call.1} parent=0 // pred_fallthru
    _
  // Predicated region
  $region18: #{tpu_custom_call.1} parent=0 // pred_check
    _
  $region19: #{tpu_custom_call.1} parent=0 // pred_check_branch
    %21 = sbr.rel (0) target = $region21
  $region20: #{tpu_custom_call.1} parent=0 // pred_region
    _
  $region21: #{tpu_custom_call.1} parent=0 // pred_fallthru
    _
  // Predicated region
  $region22: #{tpu_custom_call.1} parent=0 // pred_check
    _
  $region23: #{tpu_custom_call.1} parent=0 // pred_check_branch
    %23 = sbr.rel (0) target = $region25
  $region24: #{tpu_custom_call.1} parent=0 // pred_region
    _
  $region25: #{tpu_custom_call.1} parent=0 // pred_fallthru
    _
  // Predicated region
  $region26: #{tpu_custom_call.1} parent=0 // pred_check
    _
  $region27: #{tpu_custom_call.1} parent=0 // pred_check_branch
    %25 = sbr.rel (0) target = $region29
  $region28: #{tpu_custom_call.1} parent=0 // pred_region
    _
  $region29: #{tpu_custom_call.1} parent=0 // pred_fallthru
    _
  %v26 = vld [vmem:[%s0] sm:$0xff]
  %v27 = vld [vmem:[%s0 + $0x8] sm:$0xff]
  %v28 = vld [vmem:[%s0 + $0x10] sm:$0xff]
  %v29 = vld [vmem:[%s0 + $0x18] sm:$0xff]
  %v30 = vld [vmem:[%s0 + $0x20] sm:$0xff]
  %v31 = vld [vmem:[%s0 + $0x28] sm:$0xff]
  %v32 = vld [vmem:[%s0 + $0x30] sm:$0xff]
  %v33 = vld [vmem:[%s0 + $0x38] sm:$0xff]
  %v34 = vld [vmem:[%s0 + $0x40] sm:$0xff]
  %v35 = vld [vmem:[%s0 + $0x48] sm:$0xff]
  %v36 = vld [vmem:[%s0 + $0x50] sm:$0xff]
  %v37 = vld [vmem:[%s0 + $0x58] sm:$0xff]
  %v38 = vld [vmem:[%s0 + $0x60] sm:$0xff]
  %v39 = vld [vmem:[%s0 + $0x68] sm:$0xff]
  %v40 = vld [vmem:[%s0 + $0x70] sm:$0xff]
  %v41 = vld [vmem:[%s0 + $0x78] sm:$0xff]
  %v42 = vld [vmem:[%s0 + $0x80] sm:$0xff]
  %v43 = vld [vmem:[%s0 + $0x88] sm:$0xff]
  %v44 = vld [vmem:[%s0 + $0x90] sm:$0xff]
  %v45 = vld [vmem:[%s0 + $0x98] sm:$0xff]
  %v46 = vld [vmem:[%s0 + $0xa0] sm:$0xff]
  %v47 = vld [vmem:[%s0 + $0xa8] sm:$0xff]
  %v48 = vld [vmem:[%s0 + $0xb0] sm:$0xff]
  %v49 = vld [vmem:[%s0 + $0xb8] sm:$0xff]
  %v50 = vld [vmem:[%s0 + $0xc0] sm:$0xff]
  %v51 = vld [vmem:[%s0 + $0xc8] sm:$0xff]
  %v52 = vld [vmem:[%s0 + $0xd0] sm:$0xff]
  %v53 = vld [vmem:[%s0 + $0xd8] sm:$0xff]
  %v54 = vld [vmem:[%s0 + $0xe0] sm:$0xff]
  %v55 = vld [vmem:[%s0 + $0xe8] sm:$0xff]
  %v56 = vld [vmem:[%s0 + $0xf0] sm:$0xff]
  %v57 = vld [vmem:[%s0 + $0xf8] sm:$0xff]
  %v58 = vld [vmem:[%s0 + $0x100] sm:$0xff]
  %v59 = vld [vmem:[%s0 + $0x108] sm:$0xff]
  %v60 = vld [vmem:[%s0 + $0x110] sm:$0xff]
  %v61 = vld [vmem:[%s0 + $0x118] sm:$0xff]
  %v62 = vld [vmem:[%s0 + $0x120] sm:$0xff]
  %v63 = vld [vmem:[%s0 + $0x128] sm:$0xff]
  %v64 = vld [vmem:[%s0 + $0x130] sm:$0xff]
  %v65 = vld [vmem:[%s0 + $0x138] sm:$0xff]
  %v66 = vld [vmem:[%s0 + $0x140] sm:$0xff]
  %v67 = vld [vmem:[%s0 + $0x148] sm:$0xff]
  %v68 = vld [vmem:[%s0 + $0x150] sm:$0xff]
  %v69 = vld [vmem:[%s0 + $0x158] sm:$0xff]
  %v70 = vld [vmem:[%s0 + $0x160] sm:$0xff]
  %v71 = vld [vmem:[%s0 + $0x168] sm:$0xff]
  %v72 = vld [vmem:[%s0 + $0x170] sm:$0xff]
  %v73 = vld [vmem:[%s0 + $0x178] sm:$0xff]
  %v74 = vld [vmem:[%s0 + $0x180] sm:$0xff]
  %v75 = vld [vmem:[%s0 + $0x188] sm:$0xff]
  %v76 = vld [vmem:[%s0 + $0x190] sm:$0xff]
  %v77 = vld [vmem:[%s0 + $0x198] sm:$0xff]
  %v78 = vld [vmem:[%s0 + $0x1a0] sm:$0xff]
  %v79 = vld [vmem:[%s0 + $0x1a8] sm:$0xff]
  %v80 = vld [vmem:[%s0 + $0x1b0] sm:$0xff]
  %v81 = vld [vmem:[%s0 + $0x1b8] sm:$0xff]
  %v82 = vld [vmem:[%s0 + $0x1c0] sm:$0xff]
  %v83 = vld [vmem:[%s0 + $0x1c8] sm:$0xff]
  %v84 = vld [vmem:[%s0 + $0x1d0] sm:$0xff]
  %v85 = vld [vmem:[%s0 + $0x1d8] sm:$0xff]
  %v86 = vld [vmem:[%s0 + $0x1e0] sm:$0xff]
  %v87 = vld [vmem:[%s0 + $0x1e8] sm:$0xff]
  %v88 = vld [vmem:[%s0 + $0x1f0] sm:$0xff]
  %v89 = vld [vmem:[%s0 + $0x1f8] sm:$0xff]
  %v90 = vld [vmem:[%s1] sm:$0xff]
  %v91 = vld [vmem:[%s1 + $0x8] sm:$0xff]
  %v92 = vld [vmem:[%s2] sm:$0x1]
  %v94 = vlaneseq
  %v95 = vshrl.u32 %v94, 7
  %v96 = vsub.s32 0, %v95
  %v97 = vrot.slane %v92, %v96
  %vm99 = vcmask 130048
  %v101 = vsel %vm99, %v26, 0
  %v104 = vsel %vm99, %v27, 0
  %v107 = vsel %vm99, %v28, 0
  %v110 = vsel %vm99, %v29, 0
  %v113 = vsel %vm99, %v30, 0
  %v116 = vsel %vm99, %v31, 0
  %v119 = vsel %vm99, %v32, 0
  %v122 = vsel %vm99, %v33, 0
  %v125 = vsel %vm99, %v34, 0
  %v128 = vsel %vm99, %v35, 0
  %v131 = vsel %vm99, %v36, 0
  %v134 = vsel %vm99, %v37, 0
  %v137 = vsel %vm99, %v38, 0
  %v140 = vsel %vm99, %v39, 0
  %v143 = vsel %vm99, %v40, 0
  %v146 = vsel %vm99, %v41, 0
  %v149 = vsel %vm99, %v42, 0
  %v152 = vsel %vm99, %v43, 0
  %v155 = vsel %vm99, %v44, 0
  %v158 = vsel %vm99, %v45, 0
  %v161 = vsel %vm99, %v46, 0
  %v164 = vsel %vm99, %v47, 0
  %v167 = vsel %vm99, %v48, 0
  %v170 = vsel %vm99, %v49, 0
  %v173 = vsel %vm99, %v50, 0
  %v176 = vsel %vm99, %v51, 0
  %v179 = vsel %vm99, %v52, 0
  %v182 = vsel %vm99, %v53, 0
  %v185 = vsel %vm99, %v54, 0
  %v188 = vsel %vm99, %v55, 0
  %v191 = vsel %vm99, %v56, 0
  %v194 = vsel %vm99, %v57, 0
  %v197 = vsel %vm99, %v58, 0
  %v200 = vsel %vm99, %v59, 0
  %v203 = vsel %vm99, %v60, 0
  %v206 = vsel %vm99, %v61, 0
  %v209 = vsel %vm99, %v62, 0
  %v212 = vsel %vm99, %v63, 0
  %v215 = vsel %vm99, %v64, 0
  %v218 = vsel %vm99, %v65, 0
  %v221 = vsel %vm99, %v66, 0
  %v224 = vsel %vm99, %v67, 0
  %v227 = vsel %vm99, %v68, 0
  %v230 = vsel %vm99, %v69, 0
  %v233 = vsel %vm99, %v70, 0
  %v236 = vsel %vm99, %v71, 0
  %v239 = vsel %vm99, %v72, 0
  %v242 = vsel %vm99, %v73, 0
  %v245 = vsel %vm99, %v74, 0
  %v248 = vsel %vm99, %v75, 0
  %v251 = vsel %vm99, %v76, 0
  %v254 = vsel %vm99, %v77, 0
  %v257 = vsel %vm99, %v78, 0
  %v260 = vsel %vm99, %v79, 0
  %v263 = vsel %vm99, %v80, 0
  %v266 = vsel %vm99, %v81, 0
  %v269 = vsel %vm99, %v82, 0
  %v272 = vsel %vm99, %v83, 0
  %v275 = vsel %vm99, %v84, 0
  %v278 = vsel %vm99, %v85, 0
  %v281 = vsel %vm99, %v86, 0
  %v284 = vsel %vm99, %v87, 0
  %v287 = vsel %vm99, %v88, 0
  %v290 = vsel %vm99, %v89, 0
  %292 = vmatprep.subr.mxu0 0.0
  %293 = vmatpush1.msra.mxu0 %v90
  %294 = vmatprep.subr.mxu0 0.0
  %295 = vmatpush1.msra.mxu0 %v91
  %296 = vmatprep.subr.mxu0 0.0
  %297 = vmatpush1.msra.mxu0 0.0
  %298 = vmatprep.subr.mxu0 0.0
  %299 = vmatpush1.msra.mxu0 0.0
  %300 = vmatprep.subr.mxu0 0.0
  %301 = vmatpush1.msra.mxu0 0.0
  %302 = vmatprep.subr.mxu0 0.0
  %303 = vmatpush1.msra.mxu0 0.0
  %304 = vmatprep.subr.mxu0 0.0
  %305 = vmatpush1.msra.mxu0 0.0
  %306 = vmatprep.subr.mxu0 0.0
  %307 = vmatpush1.msra.mxu0 0.0
  %308 = vmatprep.subr.mxu0 0.0
  %309 = vmatpush1.msra.mxu0 0.0
  %310 = vmatprep.subr.mxu0 0.0
  %311 = vmatpush1.msra.mxu0 0.0
  %312 = vmatprep.subr.mxu0 0.0
  %313 = vmatpush1.msra.mxu0 0.0
  %314 = vmatprep.subr.mxu0 0.0
  %315 = vmatpush1.msra.mxu0 0.0
  %316 = vmatprep.subr.mxu0 0.0
  %317 = vmatpush1.msra.mxu0 0.0
  %318 = vmatprep.subr.mxu0 0.0
  %319 = vmatpush1.msra.mxu0 0.0
  %320 = vmatprep.subr.mxu0 0.0
  %321 = vmatpush1.msra.mxu0 0.0
  %322 = vmatprep.subr.mxu0 0.0
  %323 = vmatpush1.msra.mxu0 0.0
  %324 = vmatprep.subr.mxu0 0.0
  %325 = vmatpush1.msra.mxu0 0.0
  %326 = vmatprep.subr.mxu0 0.0
  %327 = vmatpush1.msra.mxu0 0.0
  %328 = vmatprep.subr.mxu0 0.0
  %329 = vmatpush1.msra.mxu0 0.0
  %330 = vmatprep.subr.mxu0 0.0
  %331 = vmatpush1.msra.mxu0 0.0
  %332 = vmatprep.subr.mxu0 0.0
  %333 = vmatpush1.msra.mxu0 0.0
  %334 = vmatprep.subr.mxu0 0.0
  %335 = vmatpush1.msra.mxu0 0.0
  %336 = vmatprep.subr.mxu0 0.0
  %337 = vmatpush1.msra.mxu0 0.0
  %338 = vmatprep.subr.mxu0 0.0
  %339 = vmatpush1.msra.mxu0 0.0
  %340 = vmatprep.subr.mxu0 0.0
  %341 = vmatpush1.msra.mxu0 0.0
  %342 = vmatprep.subr.mxu0 0.0
  %343 = vmatpush1.msra.mxu0 0.0
  %344 = vmatprep.subr.mxu0 0.0
  %345 = vmatpush1.msra.mxu0 0.0
  %346 = vmatprep.subr.mxu0 0.0
  %347 = vmatpush1.msra.mxu0 0.0
  %348 = vmatprep.subr.mxu0 0.0
  %349 = vmatpush1.msra.mxu0 0.0
  %350 = vmatprep.subr.mxu0 0.0
  %351 = vmatpush1.msra.mxu0 0.0
  %352 = vmatprep.subr.mxu0 0.0
  %353 = vmatpush1.msra.mxu0 0.0
  %354 = vmatprep.subr.mxu0 0.0
  %355 = vmatpush1.msra.mxu0 0.0
  %356 = vmatprep.mubr.f32.mxu0 0.0
  %357 = vmatmul.mubr.f32.gmra.mrb[0].mxu0 %v101
  %v358 = vpop.f32.mrb[0].mxu0
  %v359 = vadd.f32 %v97, %v358
  %v360 = vpop.f32.mrb[0].mxu0
  %361 = vmatprep.mubr.f32.mxu0 0.0
  %362 = vmatmul.mubr.f32.gmra.mrb[0].mxu0 %v104
  %v363 = vpop.f32.mrb[0].mxu0
  %v364 = vadd.f32 %v97, %v363
  %v365 = vpop.f32.mrb[0].mxu0
  %366 = vmatprep.mubr.f32.mxu0 0.0
  %367 = vmatmul.mubr.f32.gmra.mrb[0].mxu0 %v107
  %v368 = vpop.f32.mrb[0].mxu0
  %v369 = vadd.f32 %v97, %v368
  %v370 = vpop.f32.mrb[0].mxu0
  %371 = vmatprep.mubr.f32.mxu0 0.0
  %372 = vmatmul.mubr.f32.gmra.mrb[0].mxu0 %v110
  %v373 = vpop.f32.mrb[0].mxu0
  %v374 = vadd.f32 %v97, %v373
  %v375 = vpop.f32.mrb[0].mxu0
  %376 = vmatprep.mubr.f32.mxu0 0.0
  %377 = vmatmul.mubr.f32.gmra.mrb[0].mxu0 %v113
  %v378 = vpop.f32.mrb[0].mxu0
  %v379 = vadd.f32 %v97, %v378
  %v380 = vpop.f32.mrb[0].mxu0
  %381 = vmatprep.mubr.f32.mxu0 0.0
  %382 = vmatmul.mubr.f32.gmra.mrb[0].mxu0 %v116
  %v383 = vpop.f32.mrb[0].mxu0
  %v384 = vadd.f32 %v97, %v383
  %v385 = vpop.f32.mrb[0].mxu0
  %386 = vmatprep.mubr.f32.mxu0 0.0
  %387 = vmatmul.mubr.f32.gmra.mrb[0].mxu0 %v119
  %v388 = vpop.f32.mrb[0].mxu0
  %v389 = vadd.f32 %v97, %v388
  %v390 = vpop.f32.mrb[0].mxu0
  %391 = vmatprep.mubr.f32.mxu0 0.0
  %392 = vmatmul.mubr.f32.gmra.mrb[0].mxu0 %v122
  %v393 = vpop.f32.mrb[0].mxu0
  %v394 = vadd.f32 %v97, %v393
  %v395 = vpop.f32.mrb[0].mxu0
  %396 = vmatprep.mubr.f32.mxu0 0.0
  %397 = vmatmul.mubr.f32.gmra.mrb[0].mxu0 %v125
  %v398 = vpop.f32.mrb[0].mxu0
  %v399 = vadd.f32 %v97, %v398
  %v400 = vpop.f32.mrb[0].mxu0
  %401 = vmatprep.mubr.f32.mxu0 0.0
  %402 = vmatmul.mubr.f32.gmra.mrb[0].mxu0 %v128
  %v403 = vpop.f32.mrb[0].mxu0
  %v404 = vadd.f32 %v97, %v403
  %v405 = vpop.f32.mrb[0].mxu0
  %406 = vmatprep.mubr.f32.mxu0 0.0
  %407 = vmatmul.mubr.f32.gmra.mrb[0].mxu0 %v131
  %v408 = vpop.f32.mrb[0].mxu0
  %v409 = vadd.f32 %v97, %v408
  %v410 = vpop.f32.mrb[0].mxu0
  %411 = vmatprep.mubr.f32.mxu0 0.0
  %412 = vmatmul.mubr.f32.gmra.mrb[0].mxu0 %v134
  %v413 = vpop.f32.mrb[0].mxu0
  %v414 = vadd.f32 %v97, %v413
  %v415 = vpop.f32.mrb[0].mxu0
  %416 = vmatprep.mubr.f32.mxu0 0.0
  %417 = vmatmul.mubr.f32.gmra.mrb[0].mxu0 %v137
  %v418 = vpop.f32.mrb[0].mxu0
  %v419 = vadd.f32 %v97, %v418
  %v420 = vpop.f32.mrb[0].mxu0
  %421 = vmatprep.mubr.f32.mxu0 0.0
  %422 = vmatmul.mubr.f32.gmra.mrb[0].mxu0 %v140
  %v423 = vpop.f32.mrb[0].mxu0
  %v424 = vadd.f32 %v97, %v423
  %v425 = vpop.f32.mrb[0].mxu0
  %426 = vmatprep.mubr.f32.mxu0 0.0
  %427 = vmatmul.mubr.f32.gmra.mrb[0].mxu0 %v143
  %v428 = vpop.f32.mrb[0].mxu0
  %v429 = vadd.f32 %v97, %v428
  %v430 = vpop.f32.mrb[0].mxu0
  %431 = vmatprep.mubr.f32.mxu0 0.0
  %432 = vmatmul.mubr.f32.gmra.mrb[0].mxu0 %v146
  %v433 = vpop.f32.mrb[0].mxu0
  %v434 = vadd.f32 %v97, %v433
  %v435 = vpop.f32.mrb[0].mxu0
  %436 = vmatprep.mubr.f32.mxu0 0.0
  %437 = vmatmul.mubr.f32.gmra.mrb[0].mxu0 %v149
  %v438 = vpop.f32.mrb[0].mxu0
  %v439 = vadd.f32 %v97, %v438
  %v440 = vpop.f32.mrb[0].mxu0
  %441 = vmatprep.mubr.f32.mxu0 0.0
  %442 = vmatmul.mubr.f32.gmra.mrb[0].mxu0 %v152
  %v443 = vpop.f32.mrb[0].mxu0
  %v444 = vadd.f32 %v97, %v443
  %v445 = vpop.f32.mrb[0].mxu0
  %446 = vmatprep.mubr.f32.mxu0 0.0
  %447 = vmatmul.mubr.f32.gmra.mrb[0].mxu0 %v155
  %v448 = vpop.f32.mrb[0].mxu0
  %v449 = vadd.f32 %v97, %v448
  %v450 = vpop.f32.mrb[0].mxu0
  %451 = vmatprep.mubr.f32.mxu0 0.0
  %452 = vmatmul.mubr.f32.gmra.mrb[0].mxu0 %v158
  %v453 = vpop.f32.mrb[0].mxu0
  %v454 = vadd.f32 %v97, %v453
  %v455 = vpop.f32.mrb[0].mxu0
  %456 = vmatprep.mubr.f32.mxu0 0.0
  %457 = vmatmul.mubr.f32.gmra.mrb[0].mxu0 %v161
  %v458 = vpop.f32.mrb[0].mxu0
  %v459 = vadd.f32 %v97, %v458
  %v460 = vpop.f32.mrb[0].mxu0
  %461 = vmatprep.mubr.f32.mxu0 0.0
  %462 = vmatmul.mubr.f32.gmra.mrb[0].mxu0 %v164
  %v463 = vpop.f32.mrb[0].mxu0
  %v464 = vadd.f32 %v97, %v463
  %v465 = vpop.f32.mrb[0].mxu0
  %466 = vmatprep.mubr.f32.mxu0 0.0
  %467 = vmatmul.mubr.f32.gmra.mrb[0].mxu0 %v167
  %v468 = vpop.f32.mrb[0].mxu0
  %v469 = vadd.f32 %v97, %v468
  %v470 = vpop.f32.mrb[0].mxu0
  %471 = vmatprep.mubr.f32.mxu0 0.0
  %472 = vmatmul.mubr.f32.gmra.mrb[0].mxu0 %v170
  %v473 = vpop.f32.mrb[0].mxu0
  %v474 = vadd.f32 %v97, %v473
  %v475 = vpop.f32.mrb[0].mxu0
  %476 = vmatprep.mubr.f32.mxu0 0.0
  %477 = vmatmul.mubr.f32.gmra.mrb[0].mxu0 %v173
  %v478 = vpop.f32.mrb[0].mxu0
  %v479 = vadd.f32 %v97, %v478
  %v480 = vpop.f32.mrb[0].mxu0
  %481 = vmatprep.mubr.f32.mxu0 0.0
  %482 = vmatmul.mubr.f32.gmra.mrb[0].mxu0 %v176
  %v483 = vpop.f32.mrb[0].mxu0
  %v484 = vadd.f32 %v97, %v483
  %v485 = vpop.f32.mrb[0].mxu0
  %486 = vmatprep.mubr.f32.mxu0 0.0
  %487 = vmatmul.mubr.f32.gmra.mrb[0].mxu0 %v179
  %v488 = vpop.f32.mrb[0].mxu0
  %v489 = vadd.f32 %v97, %v488
  %v490 = vpop.f32.mrb[0].mxu0
  %491 = vmatprep.mubr.f32.mxu0 0.0
  %492 = vmatmul.mubr.f32.gmra.mrb[0].mxu0 %v182
  %v493 = vpop.f32.mrb[0].mxu0
  %v494 = vadd.f32 %v97, %v493
  %v495 = vpop.f32.mrb[0].mxu0
  %496 = vmatprep.mubr.f32.mxu0 0.0
  %497 = vmatmul.mubr.f32.gmra.mrb[0].mxu0 %v185
  %v498 = vpop.f32.mrb[0].mxu0
  %v499 = vadd.f32 %v97, %v498
  %v500 = vpop.f32.mrb[0].mxu0
  %501 = vmatprep.mubr.f32.mxu0 0.0
  %502 = vmatmul.mubr.f32.gmra.mrb[0].mxu0 %v188
  %v503 = vpop.f32.mrb[0].mxu0
  %v504 = vadd.f32 %v97, %v503
  %v505 = vpop.f32.mrb[0].mxu0
  %506 = vmatprep.mubr.f32.mxu0 0.0
  %507 = vmatmul.mubr.f32.gmra.mrb[0].mxu0 %v191
  %v508 = vpop.f32.mrb[0].mxu0
  %v509 = vadd.f32 %v97, %v508
  %v510 = vpop.f32.mrb[0].mxu0
  %511 = vmatprep.mubr.f32.mxu0 0.0
  %512 = vmatmul.mubr.f32.gmra.mrb[0].mxu0 %v194
  %v513 = vpop.f32.mrb[0].mxu0
  %v514 = vadd.f32 %v97, %v513
  %v515 = vpop.f32.mrb[0].mxu0
  %516 = vmatprep.mubr.f32.mxu0 0.0
  %517 = vmatmul.mubr.f32.gmra.mrb[0].mxu0 %v197
  %v518 = vpop.f32.mrb[0].mxu0
  %v519 = vadd.f32 %v97, %v518
  %v520 = vpop.f32.mrb[0].mxu0
  %521 = vmatprep.mubr.f32.mxu0 0.0
  %522 = vmatmul.mubr.f32.gmra.mrb[0].mxu0 %v200
  %v523 = vpop.f32.mrb[0].mxu0
  %v524 = vadd.f32 %v97, %v523
  %v525 = vpop.f32.mrb[0].mxu0
  %526 = vmatprep.mubr.f32.mxu0 0.0
  %527 = vmatmul.mubr.f32.gmra.mrb[0].mxu0 %v203
  %v528 = vpop.f32.mrb[0].mxu0
  %v529 = vadd.f32 %v97, %v528
  %v530 = vpop.f32.mrb[0].mxu0
  %531 = vmatprep.mubr.f32.mxu0 0.0
  %532 = vmatmul.mubr.f32.gmra.mrb[0].mxu0 %v206
  %v533 = vpop.f32.mrb[0].mxu0
  %v534 = vadd.f32 %v97, %v533
  %v535 = vpop.f32.mrb[0].mxu0
  %536 = vmatprep.mubr.f32.mxu0 0.0
  %537 = vmatmul.mubr.f32.gmra.mrb[0].mxu0 %v209
  %v538 = vpop.f32.mrb[0].mxu0
  %v539 = vadd.f32 %v97, %v538
  %v540 = vpop.f32.mrb[0].mxu0
  %541 = vmatprep.mubr.f32.mxu0 0.0
  %542 = vmatmul.mubr.f32.gmra.mrb[0].mxu0 %v212
  %v543 = vpop.f32.mrb[0].mxu0
  %v544 = vadd.f32 %v97, %v543
  %v545 = vpop.f32.mrb[0].mxu0
  %546 = vmatprep.mubr.f32.mxu0 0.0
  %547 = vmatmul.mubr.f32.gmra.mrb[0].mxu0 %v215
  %v548 = vpop.f32.mrb[0].mxu0
  %v549 = vadd.f32 %v97, %v548
  %v550 = vpop.f32.mrb[0].mxu0
  %551 = vmatprep.mubr.f32.mxu0 0.0
  %552 = vmatmul.mubr.f32.gmra.mrb[0].mxu0 %v218
  %v553 = vpop.f32.mrb[0].mxu0
  %v554 = vadd.f32 %v97, %v553
  %v555 = vpop.f32.mrb[0].mxu0
  %556 = vmatprep.mubr.f32.mxu0 0.0
  %557 = vmatmul.mubr.f32.gmra.mrb[0].mxu0 %v221
  %v558 = vpop.f32.mrb[0].mxu0
  %v559 = vadd.f32 %v97, %v558
  %v560 = vpop.f32.mrb[0].mxu0
  %561 = vmatprep.mubr.f32.mxu0 0.0
  %562 = vmatmul.mubr.f32.gmra.mrb[0].mxu0 %v224
  %v563 = vpop.f32.mrb[0].mxu0
  %v564 = vadd.f32 %v97, %v563
  %v565 = vpop.f32.mrb[0].mxu0
  %566 = vmatprep.mubr.f32.mxu0 0.0
  %567 = vmatmul.mubr.f32.gmra.mrb[0].mxu0 %v227
  %v568 = vpop.f32.mrb[0].mxu0
  %v569 = vadd.f32 %v97, %v568
  %v570 = vpop.f32.mrb[0].mxu0
  %571 = vmatprep.mubr.f32.mxu0 0.0
  %572 = vmatmul.mubr.f32.gmra.mrb[0].mxu0 %v230
  %v573 = vpop.f32.mrb[0].mxu0
  %v574 = vadd.f32 %v97, %v573
  %v575 = vpop.f32.mrb[0].mxu0
  %576 = vmatprep.mubr.f32.mxu0 0.0
  %577 = vmatmul.mubr.f32.gmra.mrb[0].mxu0 %v233
  %v578 = vpop.f32.mrb[0].mxu0
  %v579 = vadd.f32 %v97, %v578
  %v580 = vpop.f32.mrb[0].mxu0
  %581 = vmatprep.mubr.f32.mxu0 0.0
  %582 = vmatmul.mubr.f32.gmra.mrb[0].mxu0 %v236
  %v583 = vpop.f32.mrb[0].mxu0
  %v584 = vadd.f32 %v97, %v583
  %v585 = vpop.f32.mrb[0].mxu0
  %586 = vmatprep.mubr.f32.mxu0 0.0
  %587 = vmatmul.mubr.f32.gmra.mrb[0].mxu0 %v239
  %v588 = vpop.f32.mrb[0].mxu0
  %v589 = vadd.f32 %v97, %v588
  %v590 = vpop.f32.mrb[0].mxu0
  %591 = vmatprep.mubr.f32.mxu0 0.0
  %592 = vmatmul.mubr.f32.gmra.mrb[0].mxu0 %v242
  %v593 = vpop.f32.mrb[0].mxu0
  %v594 = vadd.f32 %v97, %v593
  %v595 = vpop.f32.mrb[0].mxu0
  %596 = vmatprep.mubr.f32.mxu0 0.0
  %597 = vmatmul.mubr.f32.gmra.mrb[0].mxu0 %v245
  %v598 = vpop.f32.mrb[0].mxu0
  %v599 = vadd.f32 %v97, %v598
  %v600 = vpop.f32.mrb[0].mxu0
  %601 = vmatprep.mubr.f32.mxu0 0.0
  %602 = vmatmul.mubr.f32.gmra.mrb[0].mxu0 %v248
  %v603 = vpop.f32.mrb[0].mxu0
  %v604 = vadd.f32 %v97, %v603
  %v605 = vpop.f32.mrb[0].mxu0
  %606 = vmatprep.mubr.f32.mxu0 0.0
  %607 = vmatmul.mubr.f32.gmra.mrb[0].mxu0 %v251
  %v608 = vpop.f32.mrb[0].mxu0
  %v609 = vadd.f32 %v97, %v608
  %v610 = vpop.f32.mrb[0].mxu0
  %611 = vmatprep.mubr.f32.mxu0 0.0
  %612 = vmatmul.mubr.f32.gmra.mrb[0].mxu0 %v254
  %v613 = vpop.f32.mrb[0].mxu0
  %v614 = vadd.f32 %v97, %v613
  %v615 = vpop.f32.mrb[0].mxu0
  %616 = vmatprep.mubr.f32.mxu0 0.0
  %617 = vmatmul.mubr.f32.gmra.mrb[0].mxu0 %v257
  %v618 = vpop.f32.mrb[0].mxu0
  %v619 = vadd.f32 %v97, %v618
  %v620 = vpop.f32.mrb[0].mxu0
  %621 = vmatprep.mubr.f32.mxu0 0.0
  %622 = vmatmul.mubr.f32.gmra.mrb[0].mxu0 %v260
  %v623 = vpop.f32.mrb[0].mxu0
  %v624 = vadd.f32 %v97, %v623
  %v625 = vpop.f32.mrb[0].mxu0
  %626 = vmatprep.mubr.f32.mxu0 0.0
  %627 = vmatmul.mubr.f32.gmra.mrb[0].mxu0 %v263
  %v628 = vpop.f32.mrb[0].mxu0
  %v629 = vadd.f32 %v97, %v628
  %v630 = vpop.f32.mrb[0].mxu0
  %631 = vmatprep.mubr.f32.mxu0 0.0
  %632 = vmatmul.mubr.f32.gmra.mrb[0].mxu0 %v266
  %v633 = vpop.f32.mrb[0].mxu0
  %v634 = vadd.f32 %v97, %v633
  %v635 = vpop.f32.mrb[0].mxu0
  %636 = vmatprep.mubr.f32.mxu0 0.0
  %637 = vmatmul.mubr.f32.gmra.mrb[0].mxu0 %v269
  %v638 = vpop.f32.mrb[0].mxu0
  %v639 = vadd.f32 %v97, %v638
  %v640 = vpop.f32.mrb[0].mxu0
  %641 = vmatprep.mubr.f32.mxu0 0.0
  %642 = vmatmul.mubr.f32.gmra.mrb[0].mxu0 %v272
  %v643 = vpop.f32.mrb[0].mxu0
  %v644 = vadd.f32 %v97, %v643
  %v645 = vpop.f32.mrb[0].mxu0
  %646 = vmatprep.mubr.f32.mxu0 0.0
  %647 = vmatmul.mubr.f32.gmra.mrb[0].mxu0 %v275
  %v648 = vpop.f32.mrb[0].mxu0
  %v649 = vadd.f32 %v97, %v648
  %v650 = vpop.f32.mrb[0].mxu0
  %651 = vmatprep.mubr.f32.mxu0 0.0
  %652 = vmatmul.mubr.f32.gmra.mrb[0].mxu0 %v278
  %v653 = vpop.f32.mrb[0].mxu0
  %v654 = vadd.f32 %v97, %v653
  %v655 = vpop.f32.mrb[0].mxu0
  %656 = vmatprep.mubr.f32.mxu0 0.0
  %657 = vmatmul.mubr.f32.gmra.mrb[0].mxu0 %v281
  %v658 = vpop.f32.mrb[0].mxu0
  %v659 = vadd.f32 %v97, %v658
  %v660 = vpop.f32.mrb[0].mxu0
  %661 = vmatprep.mubr.f32.mxu0 0.0
  %662 = vmatmul.mubr.f32.gmra.mrb[0].mxu0 %v284
  %v663 = vpop.f32.mrb[0].mxu0
  %v664 = vadd.f32 %v97, %v663
  %v665 = vpop.f32.mrb[0].mxu0
  %666 = vmatprep.mubr.f32.mxu0 0.0
  %667 = vmatmul.mubr.f32.gmra.mrb[0].mxu0 %v287
  %v668 = vpop.f32.mrb[0].mxu0
  %v669 = vadd.f32 %v97, %v668
  %v670 = vpop.f32.mrb[0].mxu0
  %671 = vmatprep.mubr.f32.mxu0 0.0
  %672 = vmatmul.mubr.f32.gmra.mrb[0].mxu0 %v290
  %v673 = vpop.f32.mrb[0].mxu0
  %v674 = vadd.f32 %v97, %v673
  %v675 = vpop.f32.mrb[0].mxu0
  %676 = vdwg.mxu0
  %v677 = vmax.f32 %v359, 0.0
  %v678 = vmax.f32 %v364, 0.0
  %v679 = vmax.f32 %v369, 0.0
  %v680 = vmax.f32 %v374, 0.0
  %v681 = vmax.f32 %v379, 0.0
  %v682 = vmax.f32 %v384, 0.0
  %v683 = vmax.f32 %v389, 0.0
  %v684 = vmax.f32 %v394, 0.0
  %v685 = vmax.f32 %v399, 0.0
  %v686 = vmax.f32 %v404, 0.0
  %v687 = vmax.f32 %v409, 0.0
  %v688 = vmax.f32 %v414, 0.0
  %v689 = vmax.f32 %v419, 0.0
  %v690 = vmax.f32 %v424, 0.0
  %v691 = vmax.f32 %v429, 0.0
  %v692 = vmax.f32 %v434, 0.0
  %v693 = vmax.f32 %v439, 0.0
  %v694 = vmax.f32 %v444, 0.0
  %v695 = vmax.f32 %v449, 0.0
  %v696 = vmax.f32 %v454, 0.0
  %v697 = vmax.f32 %v459, 0.0
  %v698 = vmax.f32 %v464, 0.0
  %v699 = vmax.f32 %v469, 0.0
  %v700 = vmax.f32 %v474, 0.0
  %v701 = vmax.f32 %v479, 0.0
  %v702 = vmax.f32 %v484, 0.0
  %v703 = vmax.f32 %v489, 0.0
  %v704 = vmax.f32 %v494, 0.0
  %v705 = vmax.f32 %v499, 0.0
  %v706 = vmax.f32 %v504, 0.0
  %v707 = vmax.f32 %v509, 0.0
  %v708 = vmax.f32 %v514, 0.0
  %v709 = vmax.f32 %v519, 0.0
  %v710 = vmax.f32 %v524, 0.0
  %v711 = vmax.f32 %v529, 0.0
  %v712 = vmax.f32 %v534, 0.0
  %v713 = vmax.f32 %v539, 0.0
  %v714 = vmax.f32 %v544, 0.0
  %v715 = vmax.f32 %v549, 0.0
  %v716 = vmax.f32 %v554, 0.0
  %v717 = vmax.f32 %v559, 0.0
  %v718 = vmax.f32 %v564, 0.0
  %v719 = vmax.f32 %v569, 0.0
  %v720 = vmax.f32 %v574, 0.0
  %v721 = vmax.f32 %v579, 0.0
  %v722 = vmax.f32 %v584, 0.0
  %v723 = vmax.f32 %v589, 0.0
  %v724 = vmax.f32 %v594, 0.0
  %v725 = vmax.f32 %v599, 0.0
  %v726 = vmax.f32 %v604, 0.0
  %v727 = vmax.f32 %v609, 0.0
  %v728 = vmax.f32 %v614, 0.0
  %v729 = vmax.f32 %v619, 0.0
  %v730 = vmax.f32 %v624, 0.0
  %v731 = vmax.f32 %v629, 0.0
  %v732 = vmax.f32 %v634, 0.0
  %v733 = vmax.f32 %v639, 0.0
  %v734 = vmax.f32 %v644, 0.0
  %v735 = vmax.f32 %v649, 0.0
  %v736 = vmax.f32 %v654, 0.0
  %v737 = vmax.f32 %v659, 0.0
  %v738 = vmax.f32 %v664, 0.0
  %v739 = vmax.f32 %v669, 0.0
  %v740 = vmax.f32 %v674, 0.0
  %vm741 = vcmask 31744
  %742 = vst.msk [vmem:[#allocation2] sm:$0xff] %vm741, 0.0
  %743 = vst.msk [vmem:[#allocation2 + $0x8] sm:$0xff] %vm741, 0.0
  %vm744 = vcmask 25600
  %745 = vst.msk [vmem:[#allocation2 + $0x10] sm:$0x3] %vm744, 0.0
  %746 = vst.msk [vmem:[#allocation2 + $0x1b0] sm:$0xff] %vm741, 0.0
  %747 = vst.msk [vmem:[#allocation2 + $0x1b8] sm:$0xff] %vm741, 0.0
  %748 = vst.msk [vmem:[#allocation2 + $0x1c0] sm:$0x3] %vm744, 0.0
  %s749 = scalar_lea.vmem [#allocation2], 408
  %750 = vst.msk [vmem:[%s749] sm:$0xff] %vm741, 0.0
  %751 = vst.msk [vmem:[%s749 + $0x8] sm:$0xff] %vm741, 0.0
  %752 = vst.msk [vmem:[%s749 + $0x10] sm:$0x3] %vm744, 0.0
  %753 = vst.msk [vmem:[%s749 + $0x1b0] sm:$0xff] %vm741, 0.0
  %754 = vst.msk [vmem:[%s749 + $0x1b8] sm:$0xff] %vm741, 0.0
  %755 = vst.msk [vmem:[%s749 + $0x1c0] sm:$0x3] %vm744, 0.0
  %s756 = scalar_lea.vmem [#allocation2], 24
  %vm757 = vcmask 24576
  %758 = vst.msk [vmem:[%s756] sm:$0x1] %vm757, 0.0
  %759 = vst.msk [vmem:[%s756 + $0x18] sm:$0x1] %vm757, 0.0
  %760 = vst.msk [vmem:[%s756 + $0x30] sm:$0x1] %vm757, 0.0
  %761 = vst.msk [vmem:[%s756 + $0x48] sm:$0x1] %vm757, 0.0
  %762 = vst.msk [vmem:[%s756 + $0x60] sm:$0x1] %vm757, 0.0
  %763 = vst.msk [vmem:[%s756 + $0x78] sm:$0x1] %vm757, 0.0
  %764 = vst.msk [vmem:[%s756 + $0x90] sm:$0x1] %vm757, 0.0
  %765 = vst.msk [vmem:[%s756 + $0xa8] sm:$0x1] %vm757, 0.0
  %766 = vst.msk [vmem:[%s756 + $0xc0] sm:$0x1] %vm757, 0.0
  %767 = vst.msk [vmem:[%s756 + $0xd8] sm:$0x1] %vm757, 0.0
  %768 = vst.msk [vmem:[%s756 + $0xf0] sm:$0x1] %vm757, 0.0
  %769 = vst.msk [vmem:[%s756 + $0x108] sm:$0x1] %vm757, 0.0
  %770 = vst.msk [vmem:[%s756 + $0x120] sm:$0x1] %vm757, 0.0
  %771 = vst.msk [vmem:[%s756 + $0x138] sm:$0x1] %vm757, 0.0
  %772 = vst.msk [vmem:[%s756 + $0x150] sm:$0x1] %vm757, 0.0
  %773 = vst.msk [vmem:[%s756 + $0x168] sm:$0x1] %vm757, 0.0
  %774 = vst.msk [vmem:[%s756 + $0x1b0] sm:$0x1] %vm757, 0.0
  %775 = vst.msk [vmem:[%s756 + $0x1c8] sm:$0x1] %vm757, 0.0
  %776 = vst.msk [vmem:[%s756 + $0x1e0] sm:$0x1] %vm757, 0.0
  %777 = vst.msk [vmem:[%s756 + $0x1f8] sm:$0x1] %vm757, 0.0
  %778 = vst.msk [vmem:[%s756 + $0x210] sm:$0x1] %vm757, 0.0
  %779 = vst.msk [vmem:[%s756 + $0x228] sm:$0x1] %vm757, 0.0
  %780 = vst.msk [vmem:[%s756 + $0x240] sm:$0x1] %vm757, 0.0
  %781 = vst.msk [vmem:[%s756 + $0x258] sm:$0x1] %vm757, 0.0
  %782 = vst.msk [vmem:[%s756 + $0x270] sm:$0x1] %vm757, 0.0
  %783 = vst.msk [vmem:[%s756 + $0x288] sm:$0x1] %vm757, 0.0
  %784 = vst.msk [vmem:[%s756 + $0x2a0] sm:$0x1] %vm757, 0.0
  %785 = vst.msk [vmem:[%s756 + $0x2b8] sm:$0x1] %vm757, 0.0
  %786 = vst.msk [vmem:[%s756 + $0x2d0] sm:$0x1] %vm757, 0.0
  %787 = vst.msk [vmem:[%s756 + $0x2e8] sm:$0x1] %vm757, 0.0
  %788 = vst.msk [vmem:[%s756 + $0x300] sm:$0x1] %vm757, 0.0
  %789 = vst.msk [vmem:[%s756 + $0x318] sm:$0x1] %vm757, 0.0
  %790 = vst.msk [vmem:[%s756 + $0x11] sm:$0x1] %vm757, 0.0
  %791 = vst.msk [vmem:[%s756 + $0x29] sm:$0x1] %vm757, 0.0
  %792 = vst.msk [vmem:[%s756 + $0x41] sm:$0x1] %vm757, 0.0
  %793 = vst.msk [vmem:[%s756 + $0x59] sm:$0x1] %vm757, 0.0
  %794 = vst.msk [vmem:[%s756 + $0x71] sm:$0x1] %vm757, 0.0
  %795 = vst.msk [vmem:[%s756 + $0x89] sm:$0x1] %vm757, 0.0
  %796 = vst.msk [vmem:[%s756 + $0xa1] sm:$0x1] %vm757, 0.0
  %797 = vst.msk [vmem:[%s756 + $0xb9] sm:$0x1] %vm757, 0.0
  %798 = vst.msk [vmem:[%s756 + $0xd1] sm:$0x1] %vm757, 0.0
  %799 = vst.msk [vmem:[%s756 + $0xe9] sm:$0x1] %vm757, 0.0
  %800 = vst.msk [vmem:[%s756 + $0x101] sm:$0x1] %vm757, 0.0
  %801 = vst.msk [vmem:[%s756 + $0x119] sm:$0x1] %vm757, 0.0
  %802 = vst.msk [vmem:[%s756 + $0x131] sm:$0x1] %vm757, 0.0
  %803 = vst.msk [vmem:[%s756 + $0x149] sm:$0x1] %vm757, 0.0
  %804 = vst.msk [vmem:[%s756 + $0x161] sm:$0x1] %vm757, 0.0
  %805 = vst.msk [vmem:[%s756 + $0x179] sm:$0x1] %vm757, 0.0
  %806 = vst.msk [vmem:[%s756 + $0x1c1] sm:$0x1] %vm757, 0.0
  %807 = vst.msk [vmem:[%s756 + $0x1d9] sm:$0x1] %vm757, 0.0
  %808 = vst.msk [vmem:[%s756 + $0x1f1] sm:$0x1] %vm757, 0.0
  %809 = vst.msk [vmem:[%s756 + $0x209] sm:$0x1] %vm757, 0.0
  %810 = vst.msk [vmem:[%s756 + $0x221] sm:$0x1] %vm757, 0.0
  %811 = vst.msk [vmem:[%s756 + $0x239] sm:$0x1] %vm757, 0.0
  %812 = vst.msk [vmem:[%s756 + $0x251] sm:$0x1] %vm757, 0.0
  %813 = vst.msk [vmem:[%s756 + $0x269] sm:$0x1] %vm757, 0.0
  %814 = vst.msk [vmem:[%s756 + $0x281] sm:$0x1] %vm757, 0.0
  %815 = vst.msk [vmem:[%s756 + $0x299] sm:$0x1] %vm757, 0.0
  %816 = vst.msk [vmem:[%s756 + $0x2b1] sm:$0x1] %vm757, 0.0
  %817 = vst.msk [vmem:[%s756 + $0x2c9] sm:$0x1] %vm757, 0.0
  %818 = vst.msk [vmem:[%s756 + $0x2e1] sm:$0x1] %vm757, 0.0
  %819 = vst.msk [vmem:[%s756 + $0x2f9] sm:$0x1] %vm757, 0.0
  %820 = vst.msk [vmem:[%s756 + $0x311] sm:$0x1] %vm757, 0.0
  %821 = vst.msk [vmem:[%s756 + $0x329] sm:$0x1] %vm757, 0.0
  %822 = vst.msk [vmem:[%s756 + $0x1] sm:$0xff] %vm741, %v677
  %823 = vst.msk [vmem:[%s756 + $0x9] sm:$0xff] %vm741, %v678
  %824 = vst.msk [vmem:[%s756 + $0x19] sm:$0xff] %vm741, %v679
  %825 = vst.msk [vmem:[%s756 + $0x21] sm:$0xff] %vm741, %v680
  %826 = vst.msk [vmem:[%s756 + $0x31] sm:$0xff] %vm741, %v681
  %827 = vst.msk [vmem:[%s756 + $0x39] sm:$0xff] %vm741, %v682
  %828 = vst.msk [vmem:[%s756 + $0x49] sm:$0xff] %vm741, %v683
  %829 = vst.msk [vmem:[%s756 + $0x51] sm:$0xff] %vm741, %v684
  %830 = vst.msk [vmem:[%s756 + $0x61] sm:$0xff] %vm741, %v685
  %831 = vst.msk [vmem:[%s756 + $0x69] sm:$0xff] %vm741, %v686
  %832 = vst.msk [vmem:[%s756 + $0x79] sm:$0xff] %vm741, %v687
  %833 = vst.msk [vmem:[%s756 + $0x81] sm:$0xff] %vm741, %v688
  %834 = vst.msk [vmem:[%s756 + $0x91] sm:$0xff] %vm741, %v689
  %835 = vst.msk [vmem:[%s756 + $0x99] sm:$0xff] %vm741, %v690
  %836 = vst.msk [vmem:[%s756 + $0xa9] sm:$0xff] %vm741, %v691
  %837 = vst.msk [vmem:[%s756 + $0xb1] sm:$0xff] %vm741, %v692
  %838 = vst.msk [vmem:[%s756 + $0xc1] sm:$0xff] %vm741, %v693
  %839 = vst.msk [vmem:[%s756 + $0xc9] sm:$0xff] %vm741, %v694
  %840 = vst.msk [vmem:[%s756 + $0xd9] sm:$0xff] %vm741, %v695
  %841 = vst.msk [vmem:[%s756 + $0xe1] sm:$0xff] %vm741, %v696
  %842 = vst.msk [vmem:[%s756 + $0xf1] sm:$0xff] %vm741, %v697
  %843 = vst.msk [vmem:[%s756 + $0xf9] sm:$0xff] %vm741, %v698
  %844 = vst.msk [vmem:[%s756 + $0x109] sm:$0xff] %vm741, %v699
  %845 = vst.msk [vmem:[%s756 + $0x111] sm:$0xff] %vm741, %v700
  %846 = vst.msk [vmem:[%s756 + $0x121] sm:$0xff] %vm741, %v701
  %847 = vst.msk [vmem:[%s756 + $0x129] sm:$0xff] %vm741, %v702
  %848 = vst.msk [vmem:[%s756 + $0x139] sm:$0xff] %vm741, %v703
  %849 = vst.msk [vmem:[%s756 + $0x141] sm:$0xff] %vm741, %v704
  %850 = vst.msk [vmem:[%s756 + $0x151] sm:$0xff] %vm741, %v705
  %851 = vst.msk [vmem:[%s756 + $0x159] sm:$0xff] %vm741, %v706
  %852 = vst.msk [vmem:[%s756 + $0x169] sm:$0xff] %vm741, %v707
  %853 = vst.msk [vmem:[%s756 + $0x171] sm:$0xff] %vm741, %v708
  %854 = vst.msk [vmem:[%s756 + $0x1b1] sm:$0xff] %vm741, %v709
  %855 = vst.msk [vmem:[%s756 + $0x1b9] sm:$0xff] %vm741, %v710
  %856 = vst.msk [vmem:[%s756 + $0x1c9] sm:$0xff] %vm741, %v711
  %857 = vst.msk [vmem:[%s756 + $0x1d1] sm:$0xff] %vm741, %v712
  %858 = vst.msk [vmem:[%s756 + $0x1e1] sm:$0xff] %vm741, %v713
  %859 = vst.msk [vmem:[%s756 + $0x1e9] sm:$0xff] %vm741, %v714
  %860 = vst.msk [vmem:[%s756 + $0x1f9] sm:$0xff] %vm741, %v715
  %861 = vst.msk [vmem:[%s756 + $0x201] sm:$0xff] %vm741, %v716
  %862 = vst.msk [vmem:[%s756 + $0x211] sm:$0xff] %vm741, %v717
  %863 = vst.msk [vmem:[%s756 + $0x219] sm:$0xff] %vm741, %v718
  %864 = vst.msk [vmem:[%s756 + $0x229] sm:$0xff] %vm741, %v719
  %865 = vst.msk [vmem:[%s756 + $0x231] sm:$0xff] %vm741, %v720
  %866 = vst.msk [vmem:[%s756 + $0x241] sm:$0xff] %vm741, %v721
  %867 = vst.msk [vmem:[%s756 + $0x249] sm:$0xff] %vm741, %v722
  %868 = vst.msk [vmem:[%s756 + $0x259] sm:$0xff] %vm741, %v723
  %869 = vst.msk [vmem:[%s756 + $0x261] sm:$0xff] %vm741, %v724
  %870 = vst.msk [vmem:[%s756 + $0x271] sm:$0xff] %vm741, %v725
  %871 = vst.msk [vmem:[%s756 + $0x279] sm:$0xff] %vm741, %v726
  %872 = vst.msk [vmem:[%s756 + $0x289] sm:$0xff] %vm741, %v727
  %873 = vst.msk [vmem:[%s756 + $0x291] sm:$0xff] %vm741, %v728
  %874 = vst.msk [vmem:[%s756 + $0x2a1] sm:$0xff] %vm741, %v729
  %875 = vst.msk [vmem:[%s756 + $0x2a9] sm:$0xff] %vm741, %v730
  %876 = vst.msk [vmem:[%s756 + $0x2b9] sm:$0xff] %vm741, %v731
  %877 = vst.msk [vmem:[%s756 + $0x2c1] sm:$0xff] %vm741, %v732
  %878 = vst.msk [vmem:[%s756 + $0x2d1] sm:$0xff] %vm741, %v733
  %879 = vst.msk [vmem:[%s756 + $0x2d9] sm:$0xff] %vm741, %v734
  %880 = vst.msk [vmem:[%s756 + $0x2e9] sm:$0xff] %vm741, %v735
  %881 = vst.msk [vmem:[%s756 + $0x2f1] sm:$0xff] %vm741, %v736
  %882 = vst.msk [vmem:[%s756 + $0x301] sm:$0xff] %vm741, %v737
  %883 = vst.msk [vmem:[%s756 + $0x309] sm:$0xff] %vm741, %v738
  %884 = vst.msk [vmem:[%s756 + $0x319] sm:$0xff] %vm741, %v739
  %885 = vst.msk [vmem:[%s756 + $0x321] sm:$0xff] %vm741, %v740
  %950 = vrot.lane.b32.xlu0 %v677, 16
  %v951 = vpop.permute.xlu0 %950
  %952 = vrot.lane.b32.xlu0 %v678, 16
  %v953 = vpop.permute.xlu0 %952
  %954 = vrot.lane.b32.xlu0 %v679, 16
  %v955 = vpop.permute.xlu0 %954
  %956 = vrot.lane.b32.xlu0 %v680, 16
  %v957 = vpop.permute.xlu0 %956
  %958 = vrot.lane.b32.xlu0 %v681, 16
  %v959 = vpop.permute.xlu0 %958
  %960 = vrot.lane.b32.xlu0 %v682, 16
  %v961 = vpop.permute.xlu0 %960
  %962 = vrot.lane.b32.xlu0 %v683, 16
  %v963 = vpop.permute.xlu0 %962
  %964 = vrot.lane.b32.xlu0 %v684, 16
  %v965 = vpop.permute.xlu0 %964
  %966 = vrot.lane.b32.xlu0 %v685, 16
  %v967 = vpop.permute.xlu0 %966
  %968 = vrot.lane.b32.xlu0 %v686, 16
  %v969 = vpop.permute.xlu0 %968
  %970 = vrot.lane.b32.xlu0 %v687, 16
  %v971 = vpop.permute.xlu0 %970
  %972 = vrot.lane.b32.xlu0 %v688, 16
  %v973 = vpop.permute.xlu0 %972
  %974 = vrot.lane.b32.xlu0 %v689, 16
  %v975 = vpop.permute.xlu0 %974
  %976 = vrot.lane.b32.xlu0 %v690, 16
  %v977 = vpop.permute.xlu0 %976
  %978 = vrot.lane.b32.xlu0 %v691, 16
  %v979 = vpop.permute.xlu0 %978
  %980 = vrot.lane.b32.xlu0 %v692, 16
  %v981 = vpop.permute.xlu0 %980
  %982 = vrot.lane.b32.xlu0 %v693, 16
  %v983 = vpop.permute.xlu0 %982
  %984 = vrot.lane.b32.xlu0 %v694, 16
  %v985 = vpop.permute.xlu0 %984
  %986 = vrot.lane.b32.xlu0 %v695, 16
  %v987 = vpop.permute.xlu0 %986
  %988 = vrot.lane.b32.xlu0 %v696, 16
  %v989 = vpop.permute.xlu0 %988
  %990 = vrot.lane.b32.xlu0 %v697, 16
  %v991 = vpop.permute.xlu0 %990
  %992 = vrot.lane.b32.xlu0 %v698, 16
  %v993 = vpop.permute.xlu0 %992
  %994 = vrot.lane.b32.xlu0 %v699, 16
  %v995 = vpop.permute.xlu0 %994
  %996 = vrot.lane.b32.xlu0 %v700, 16
  %v997 = vpop.permute.xlu0 %996
  %998 = vrot.lane.b32.xlu0 %v701, 16
  %v999 = vpop.permute.xlu0 %998
  %1000 = vrot.lane.b32.xlu0 %v702, 16
  %v1001 = vpop.permute.xlu0 %1000
  %1002 = vrot.lane.b32.xlu0 %v703, 16
  %v1003 = vpop.permute.xlu0 %1002
  %1004 = vrot.lane.b32.xlu0 %v704, 16
  %v1005 = vpop.permute.xlu0 %1004
  %1006 = vrot.lane.b32.xlu0 %v705, 16
  %v1007 = vpop.permute.xlu0 %1006
  %1008 = vrot.lane.b32.xlu0 %v706, 16
  %v1009 = vpop.permute.xlu0 %1008
  %1010 = vrot.lane.b32.xlu0 %v707, 16
  %v1011 = vpop.permute.xlu0 %1010
  %1012 = vrot.lane.b32.xlu0 %v708, 16
  %v1013 = vpop.permute.xlu0 %1012
  %1014 = vrot.lane.b32.xlu0 %v709, 16
  %v1015 = vpop.permute.xlu0 %1014
  %1016 = vrot.lane.b32.xlu0 %v710, 16
  %v1017 = vpop.permute.xlu0 %1016
  %1018 = vrot.lane.b32.xlu0 %v711, 16
  %v1019 = vpop.permute.xlu0 %1018
  %1020 = vrot.lane.b32.xlu0 %v712, 16
  %v1021 = vpop.permute.xlu0 %1020
  %1022 = vrot.lane.b32.xlu0 %v713, 16
  %v1023 = vpop.permute.xlu0 %1022
  %1024 = vrot.lane.b32.xlu0 %v714, 16
  %v1025 = vpop.permute.xlu0 %1024
  %1026 = vrot.lane.b32.xlu0 %v715, 16
  %v1027 = vpop.permute.xlu0 %1026
  %1028 = vrot.lane.b32.xlu0 %v716, 16
  %v1029 = vpop.permute.xlu0 %1028
  %1030 = vrot.lane.b32.xlu0 %v717, 16
  %v1031 = vpop.permute.xlu0 %1030
  %1032 = vrot.lane.b32.xlu0 %v718, 16
  %v1033 = vpop.permute.xlu0 %1032
  %1034 = vrot.lane.b32.xlu0 %v719, 16
  %v1035 = vpop.permute.xlu0 %1034
  %1036 = vrot.lane.b32.xlu0 %v720, 16
  %v1037 = vpop.permute.xlu0 %1036
  %1038 = vrot.lane.b32.xlu0 %v721, 16
  %v1039 = vpop.permute.xlu0 %1038
  %1040 = vrot.lane.b32.xlu0 %v722, 16
  %v1041 = vpop.permute.xlu0 %1040
  %1042 = vrot.lane.b32.xlu0 %v723, 16
  %v1043 = vpop.permute.xlu0 %1042
  %1044 = vrot.lane.b32.xlu0 %v724, 16
  %v1045 = vpop.permute.xlu0 %1044
  %1046 = vrot.lane.b32.xlu0 %v725, 16
  %v1047 = vpop.permute.xlu0 %1046
  %1048 = vrot.lane.b32.xlu0 %v726, 16
  %v1049 = vpop.permute.xlu0 %1048
  %1050 = vrot.lane.b32.xlu0 %v727, 16
  %v1051 = vpop.permute.xlu0 %1050
  %1052 = vrot.lane.b32.xlu0 %v728, 16
  %v1053 = vpop.permute.xlu0 %1052
  %1054 = vrot.lane.b32.xlu0 %v729, 16
  %v1055 = vpop.permute.xlu0 %1054
  %1056 = vrot.lane.b32.xlu0 %v730, 16
  %v1057 = vpop.permute.xlu0 %1056
  %1058 = vrot.lane.b32.xlu0 %v731, 16
  %v1059 = vpop.permute.xlu0 %1058
  %1060 = vrot.lane.b32.xlu0 %v732, 16
  %v1061 = vpop.permute.xlu0 %1060
  %1062 = vrot.lane.b32.xlu0 %v733, 16
  %v1063 = vpop.permute.xlu0 %1062
  %1064 = vrot.lane.b32.xlu0 %v734, 16
  %v1065 = vpop.permute.xlu0 %1064
  %1066 = vrot.lane.b32.xlu0 %v735, 16
  %v1067 = vpop.permute.xlu0 %1066
  %1068 = vrot.lane.b32.xlu0 %v736, 16
  %v1069 = vpop.permute.xlu0 %1068
  %1070 = vrot.lane.b32.xlu0 %v737, 16
  %v1071 = vpop.permute.xlu0 %1070
  %1072 = vrot.lane.b32.xlu0 %v738, 16
  %v1073 = vpop.permute.xlu0 %1072
  %1074 = vrot.lane.b32.xlu0 %v739, 16
  %v1075 = vpop.permute.xlu0 %1074
  %1076 = vrot.lane.b32.xlu0 %v740, 16
  %v1077 = vpop.permute.xlu0 %1076
  %vm1142 = vcmask 162944
  %1143 = vst.msk [vmem:[#allocation3] sm:$0xff] %vm1142, %v951
  %1144 = vst.msk [vmem:[#allocation3 + $0x8] sm:$0xff] %vm1142, %v953
  %1145 = vst.msk [vmem:[#allocation3 + $0x10] sm:$0xff] %vm1142, %v955
  %1146 = vst.msk [vmem:[#allocation3 + $0x18] sm:$0xff] %vm1142, %v957
  %1147 = vst.msk [vmem:[#allocation3 + $0x20] sm:$0xff] %vm1142, %v959
  %1148 = vst.msk [vmem:[#allocation3 + $0x28] sm:$0xff] %vm1142, %v961
  %1149 = vst.msk [vmem:[#allocation3 + $0x30] sm:$0xff] %vm1142, %v963
  %1150 = vst.msk [vmem:[#allocation3 + $0x38] sm:$0xff] %vm1142, %v965
  %1151 = vst.msk [vmem:[#allocation3 + $0x40] sm:$0xff] %vm1142, %v967
  %1152 = vst.msk [vmem:[#allocation3 + $0x48] sm:$0xff] %vm1142, %v969
  %1153 = vst.msk [vmem:[#allocation3 + $0x50] sm:$0xff] %vm1142, %v971
  %1154 = vst.msk [vmem:[#allocation3 + $0x58] sm:$0xff] %vm1142, %v973
  %1155 = vst.msk [vmem:[#allocation3 + $0x60] sm:$0xff] %vm1142, %v975
  %1156 = vst.msk [vmem:[#allocation3 + $0x68] sm:$0xff] %vm1142, %v977
  %1157 = vst.msk [vmem:[#allocation3 + $0x70] sm:$0xff] %vm1142, %v979
  %1158 = vst.msk [vmem:[#allocation3 + $0x78] sm:$0xff] %vm1142, %v981
  %1159 = vst.msk [vmem:[#allocation3 + $0x80] sm:$0xff] %vm1142, %v983
  %1160 = vst.msk [vmem:[#allocation3 + $0x88] sm:$0xff] %vm1142, %v985
  %1161 = vst.msk [vmem:[#allocation3 + $0x90] sm:$0xff] %vm1142, %v987
  %1162 = vst.msk [vmem:[#allocation3 + $0x98] sm:$0xff] %vm1142, %v989
  %1163 = vst.msk [vmem:[#allocation3 + $0xa0] sm:$0xff] %vm1142, %v991
  %1164 = vst.msk [vmem:[#allocation3 + $0xa8] sm:$0xff] %vm1142, %v993
  %1165 = vst.msk [vmem:[#allocation3 + $0xb0] sm:$0xff] %vm1142, %v995
  %1166 = vst.msk [vmem:[#allocation3 + $0xb8] sm:$0xff] %vm1142, %v997
  %1167 = vst.msk [vmem:[#allocation3 + $0xc0] sm:$0xff] %vm1142, %v999
  %1168 = vst.msk [vmem:[#allocation3 + $0xc8] sm:$0xff] %vm1142, %v1001
  %1169 = vst.msk [vmem:[#allocation3 + $0xd0] sm:$0xff] %vm1142, %v1003
  %1170 = vst.msk [vmem:[#allocation3 + $0xd8] sm:$0xff] %vm1142, %v1005
  %1171 = vst.msk [vmem:[#allocation3 + $0xe0] sm:$0xff] %vm1142, %v1007
  %1172 = vst.msk [vmem:[#allocation3 + $0xe8] sm:$0xff] %vm1142, %v1009
  %1173 = vst.msk [vmem:[#allocation3 + $0xf0] sm:$0xff] %vm1142, %v1011
  %1174 = vst.msk [vmem:[#allocation3 + $0xf8] sm:$0xff] %vm1142, %v1013
  %1175 = vst.msk [vmem:[#allocation3 + $0x100] sm:$0xff] %vm1142, %v1015
  %1176 = vst.msk [vmem:[#allocation3 + $0x108] sm:$0xff] %vm1142, %v1017
  %1177 = vst.msk [vmem:[#allocation3 + $0x110] sm:$0xff] %vm1142, %v1019
  %1178 = vst.msk [vmem:[#allocation3 + $0x118] sm:$0xff] %vm1142, %v1021
  %1179 = vst.msk [vmem:[#allocation3 + $0x120] sm:$0xff] %vm1142, %v1023
  %1180 = vst.msk [vmem:[#allocation3 + $0x128] sm:$0xff] %vm1142, %v1025
  %1181 = vst.msk [vmem:[#allocation3 + $0x130] sm:$0xff] %vm1142, %v1027
  %1182 = vst.msk [vmem:[#allocation3 + $0x138] sm:$0xff] %vm1142, %v1029
  %1183 = vst.msk [vmem:[#allocation3 + $0x140] sm:$0xff] %vm1142, %v1031
  %1184 = vst.msk [vmem:[#allocation3 + $0x148] sm:$0xff] %vm1142, %v1033
  %1185 = vst.msk [vmem:[#allocation3 + $0x150] sm:$0xff] %vm1142, %v1035
  %1186 = vst.msk [vmem:[#allocation3 + $0x158] sm:$0xff] %vm1142, %v1037
  %1187 = vst.msk [vmem:[#allocation3 + $0x160] sm:$0xff] %vm1142, %v1039
  %1188 = vst.msk [vmem:[#allocation3 + $0x168] sm:$0xff] %vm1142, %v1041
  %1189 = vst.msk [vmem:[#allocation3 + $0x170] sm:$0xff] %vm1142, %v1043
  %1190 = vst.msk [vmem:[#allocation3 + $0x178] sm:$0xff] %vm1142, %v1045
  %1191 = vst.msk [vmem:[#allocation3 + $0x180] sm:$0xff] %vm1142, %v1047
  %1192 = vst.msk [vmem:[#allocation3 + $0x188] sm:$0xff] %vm1142, %v1049
  %1193 = vst.msk [vmem:[#allocation3 + $0x190] sm:$0xff] %vm1142, %v1051
  %1194 = vst.msk [vmem:[#allocation3 + $0x198] sm:$0xff] %vm1142, %v1053
  %1195 = vst.msk [vmem:[#allocation3 + $0x1a0] sm:$0xff] %vm1142, %v1055
  %1196 = vst.msk [vmem:[#allocation3 + $0x1a8] sm:$0xff] %vm1142, %v1057
  %1197 = vst.msk [vmem:[#allocation3 + $0x1b0] sm:$0xff] %vm1142, %v1059
  %1198 = vst.msk [vmem:[#allocation3 + $0x1b8] sm:$0xff] %vm1142, %v1061
  %1199 = vst.msk [vmem:[#allocation3 + $0x1c0] sm:$0xff] %vm1142, %v1063
  %1200 = vst.msk [vmem:[#allocation3 + $0x1c8] sm:$0xff] %vm1142, %v1065
  %1201 = vst.msk [vmem:[#allocation3 + $0x1d0] sm:$0xff] %vm1142, %v1067
  %1202 = vst.msk [vmem:[#allocation3 + $0x1d8] sm:$0xff] %vm1142, %v1069
  %1203 = vst.msk [vmem:[#allocation3 + $0x1e0] sm:$0xff] %vm1142, %v1071
  %1204 = vst.msk [vmem:[#allocation3 + $0x1e8] sm:$0xff] %vm1142, %v1073
  %1205 = vst.msk [vmem:[#allocation3 + $0x1f0] sm:$0xff] %vm1142, %v1075
  %1206 = vst.msk [vmem:[#allocation3 + $0x1f8] sm:$0xff] %vm1142, %v1077
  %v1207 = vld [vmem:[#allocation2] sm:$0xff]
  %v1208 = vld [vmem:[#allocation2 + $0x8] sm:$0xff]
  %v1209 = vld [vmem:[#allocation2 + $0x18] sm:$0xff]
  %v1210 = vld [vmem:[#allocation2 + $0x20] sm:$0xff]
  %v1211 = vld [vmem:[#allocation2 + $0x30] sm:$0xff]
  %v1212 = vld [vmem:[#allocation2 + $0x38] sm:$0xff]
  %v1213 = vld [vmem:[#allocation2 + $0x48] sm:$0xff]
  %v1214 = vld [vmem:[#allocation2 + $0x50] sm:$0xff]
  %v1215 = vld [vmem:[#allocation2 + $0x60] sm:$0xff]
  %v1216 = vld [vmem:[#allocation2 + $0x68] sm:$0xff]
  %v1217 = vld [vmem:[#allocation2 + $0x78] sm:$0xff]
  %v1218 = vld [vmem:[#allocation2 + $0x80] sm:$0xff]
  %v1219 = vld [vmem:[#allocation2 + $0x90] sm:$0xff]
  %v1220 = vld [vmem:[#allocation2 + $0x98] sm:$0xff]
  %v1221 = vld [vmem:[#allocation2 + $0xa8] sm:$0xff]
  %v1222 = vld [vmem:[#allocation2 + $0xb0] sm:$0xff]
  %v1223 = vld [vmem:[#allocation2 + $0xc0] sm:$0xff]
  %v1224 = vld [vmem:[#allocation2 + $0xc8] sm:$0xff]
  %v1225 = vld [vmem:[#allocation2 + $0xd8] sm:$0xff]
  %v1226 = vld [vmem:[#allocation2 + $0xe0] sm:$0xff]
  %v1227 = vld [vmem:[#allocation2 + $0xf0] sm:$0xff]
  %v1228 = vld [vmem:[#allocation2 + $0xf8] sm:$0xff]
  %v1229 = vld [vmem:[#allocation2 + $0x108] sm:$0xff]
  %v1230 = vld [vmem:[#allocation2 + $0x110] sm:$0xff]
  %v1231 = vld [vmem:[#allocation2 + $0x120] sm:$0xff]
  %v1232 = vld [vmem:[#allocation2 + $0x128] sm:$0xff]
  %v1233 = vld [vmem:[#allocation2 + $0x138] sm:$0xff]
  %v1234 = vld [vmem:[#allocation2 + $0x140] sm:$0xff]
  %v1235 = vld [vmem:[#allocation2 + $0x150] sm:$0xff]
  %v1236 = vld [vmem:[#allocation2 + $0x158] sm:$0xff]
  %v1237 = vld [vmem:[#allocation2 + $0x168] sm:$0xff]
  %v1238 = vld [vmem:[#allocation2 + $0x170] sm:$0xff]
  %v1239 = vld [vmem:[#allocation2 + $0x1b0] sm:$0xff]
  %v1240 = vld [vmem:[#allocation2 + $0x1b8] sm:$0xff]
  %v1241 = vld [vmem:[#allocation2 + $0x1c8] sm:$0xff]
  %v1242 = vld [vmem:[#allocation2 + $0x1d0] sm:$0xff]
  %v1243 = vld [vmem:[#allocation2 + $0x1e0] sm:$0xff]
  %v1244 = vld [vmem:[#allocation2 + $0x1e8] sm:$0xff]
  %v1245 = vld [vmem:[#allocation2 + $0x1f8] sm:$0xff]
  %v1246 = vld [vmem:[#allocation2 + $0x200] sm:$0xff]
  %v1247 = vld [vmem:[#allocation2 + $0x210] sm:$0xff]
  %v1248 = vld [vmem:[#allocation2 + $0x218] sm:$0xff]
  %v1249 = vld [vmem:[#allocation2 + $0x228] sm:$0xff]
  %v1250 = vld [vmem:[#allocation2 + $0x230] sm:$0xff]
  %v1251 = vld [vmem:[#allocation2 + $0x240] sm:$0xff]
  %v1252 = vld [vmem:[#allocation2 + $0x248] sm:$0xff]
  %v1253 = vld [vmem:[#allocation2 + $0x258] sm:$0xff]
  %v1254 = vld [vmem:[#allocation2 + $0x260] sm:$0xff]
  %v1255 = vld [vmem:[#allocation2 + $0x270] sm:$0xff]
  %v1256 = vld [vmem:[#allocation2 + $0x278] sm:$0xff]
  %v1257 = vld [vmem:[#allocation2 + $0x288] sm:$0xff]
  %v1258 = vld [vmem:[#allocation2 + $0x290] sm:$0xff]
  %v1259 = vld [vmem:[#allocation2 + $0x2a0] sm:$0xff]
  %v1260 = vld [vmem:[#allocation2 + $0x2a8] sm:$0xff]
  %v1261 = vld [vmem:[#allocation2 + $0x2b8] sm:$0xff]
  %v1262 = vld [vmem:[#allocation2 + $0x2c0] sm:$0xff]
  %v1263 = vld [vmem:[#allocation2 + $0x2d0] sm:$0xff]
  %v1264 = vld [vmem:[#allocation2 + $0x2d8] sm:$0xff]
  %v1265 = vld [vmem:[#allocation2 + $0x2e8] sm:$0xff]
  %v1266 = vld [vmem:[#allocation2 + $0x2f0] sm:$0xff]
  %v1267 = vld [vmem:[#allocation2 + $0x300] sm:$0xff]
  %v1268 = vld [vmem:[#allocation2 + $0x308] sm:$0xff]
  %v1269 = vld [vmem:[#allocation2 + $0x318] sm:$0xff]
  %v1270 = vld [vmem:[#allocation2 + $0x320] sm:$0xff]
  %1271 = vst.msk [vmem:[#allocation3] sm:$0xff] %vm741, %v1207
  %1272 = vst.msk [vmem:[#allocation3 + $0x8] sm:$0xff] %vm741, %v1208
  %1273 = vst.msk [vmem:[#allocation3 + $0x10] sm:$0xff] %vm741, %v1209
  %1274 = vst.msk [vmem:[#allocation3 + $0x18] sm:$0xff] %vm741, %v1210
  %1275 = vst.msk [vmem:[#allocation3 + $0x20] sm:$0xff] %vm741, %v1211
  %1276 = vst.msk [vmem:[#allocation3 + $0x28] sm:$0xff] %vm741, %v1212
  %1277 = vst.msk [vmem:[#allocation3 + $0x30] sm:$0xff] %vm741, %v1213
  %1278 = vst.msk [vmem:[#allocation3 + $0x38] sm:$0xff] %vm741, %v1214
  %1279 = vst.msk [vmem:[#allocation3 + $0x40] sm:$0xff] %vm741, %v1215
  %1280 = vst.msk [vmem:[#allocation3 + $0x48] sm:$0xff] %vm741, %v1216
  %1281 = vst.msk [vmem:[#allocation3 + $0x50] sm:$0xff] %vm741, %v1217
  %1282 = vst.msk [vmem:[#allocation3 + $0x58] sm:$0xff] %vm741, %v1218
  %1283 = vst.msk [vmem:[#allocation3 + $0x60] sm:$0xff] %vm741, %v1219
  %1284 = vst.msk [vmem:[#allocation3 + $0x68] sm:$0xff] %vm741, %v1220
  %1285 = vst.msk [vmem:[#allocation3 + $0x70] sm:$0xff] %vm741, %v1221
  %1286 = vst.msk [vmem:[#allocation3 + $0x78] sm:$0xff] %vm741, %v1222
  %1287 = vst.msk [vmem:[#allocation3 + $0x80] sm:$0xff] %vm741, %v1223
  %1288 = vst.msk [vmem:[#allocation3 + $0x88] sm:$0xff] %vm741, %v1224
  %1289 = vst.msk [vmem:[#allocation3 + $0x90] sm:$0xff] %vm741, %v1225
  %1290 = vst.msk [vmem:[#allocation3 + $0x98] sm:$0xff] %vm741, %v1226
  %1291 = vst.msk [vmem:[#allocation3 + $0xa0] sm:$0xff] %vm741, %v1227
  %1292 = vst.msk [vmem:[#allocation3 + $0xa8] sm:$0xff] %vm741, %v1228
  %1293 = vst.msk [vmem:[#allocation3 + $0xb0] sm:$0xff] %vm741, %v1229
  %1294 = vst.msk [vmem:[#allocation3 + $0xb8] sm:$0xff] %vm741, %v1230
  %1295 = vst.msk [vmem:[#allocation3 + $0xc0] sm:$0xff] %vm741, %v1231
  %1296 = vst.msk [vmem:[#allocation3 + $0xc8] sm:$0xff] %vm741, %v1232
  %1297 = vst.msk [vmem:[#allocation3 + $0xd0] sm:$0xff] %vm741, %v1233
  %1298 = vst.msk [vmem:[#allocation3 + $0xd8] sm:$0xff] %vm741, %v1234
  %1299 = vst.msk [vmem:[#allocation3 + $0xe0] sm:$0xff] %vm741, %v1235
  %1300 = vst.msk [vmem:[#allocation3 + $0xe8] sm:$0xff] %vm741, %v1236
  %1301 = vst.msk [vmem:[#allocation3 + $0xf0] sm:$0xff] %vm741, %v1237
  %1302 = vst.msk [vmem:[#allocation3 + $0xf8] sm:$0xff] %vm741, %v1238
  %1303 = vst.msk [vmem:[#allocation3 + $0x100] sm:$0xff] %vm741, %v1239
  %1304 = vst.msk [vmem:[#allocation3 + $0x108] sm:$0xff] %vm741, %v1240
  %1305 = vst.msk [vmem:[#allocation3 + $0x110] sm:$0xff] %vm741, %v1241
  %1306 = vst.msk [vmem:[#allocation3 + $0x118] sm:$0xff] %vm741, %v1242
  %1307 = vst.msk [vmem:[#allocation3 + $0x120] sm:$0xff] %vm741, %v1243
  %1308 = vst.msk [vmem:[#allocation3 + $0x128] sm:$0xff] %vm741, %v1244
  %1309 = vst.msk [vmem:[#allocation3 + $0x130] sm:$0xff] %vm741, %v1245
  %1310 = vst.msk [vmem:[#allocation3 + $0x138] sm:$0xff] %vm741, %v1246
  %1311 = vst.msk [vmem:[#allocation3 + $0x140] sm:$0xff] %vm741, %v1247
  %1312 = vst.msk [vmem:[#allocation3 + $0x148] sm:$0xff] %vm741, %v1248
  %1313 = vst.msk [vmem:[#allocation3 + $0x150] sm:$0xff] %vm741, %v1249
  %1314 = vst.msk [vmem:[#allocation3 + $0x158] sm:$0xff] %vm741, %v1250
  %1315 = vst.msk [vmem:[#allocation3 + $0x160] sm:$0xff] %vm741, %v1251
  %1316 = vst.msk [vmem:[#allocation3 + $0x168] sm:$0xff] %vm741, %v1252
  %1317 = vst.msk [vmem:[#allocation3 + $0x170] sm:$0xff] %vm741, %v1253
  %1318 = vst.msk [vmem:[#allocation3 + $0x178] sm:$0xff] %vm741, %v1254
  %1319 = vst.msk [vmem:[#allocation3 + $0x180] sm:$0xff] %vm741, %v1255
  %1320 = vst.msk [vmem:[#allocation3 + $0x188] sm:$0xff] %vm741, %v1256
  %1321 = vst.msk [vmem:[#allocation3 + $0x190] sm:$0xff] %vm741, %v1257
  %1322 = vst.msk [vmem:[#allocation3 + $0x198] sm:$0xff] %vm741, %v1258
  %1323 = vst.msk [vmem:[#allocation3 + $0x1a0] sm:$0xff] %vm741, %v1259
  %1324 = vst.msk [vmem:[#allocation3 + $0x1a8] sm:$0xff] %vm741, %v1260
  %1325 = vst.msk [vmem:[#allocation3 + $0x1b0] sm:$0xff] %vm741, %v1261
  %1326 = vst.msk [vmem:[#allocation3 + $0x1b8] sm:$0xff] %vm741, %v1262
  %1327 = vst.msk [vmem:[#allocation3 + $0x1c0] sm:$0xff] %vm741, %v1263
  %1328 = vst.msk [vmem:[#allocation3 + $0x1c8] sm:$0xff] %vm741, %v1264
  %1329 = vst.msk [vmem:[#allocation3 + $0x1d0] sm:$0xff] %vm741, %v1265
  %1330 = vst.msk [vmem:[#allocation3 + $0x1d8] sm:$0xff] %vm741, %v1266
  %1331 = vst.msk [vmem:[#allocation3 + $0x1e0] sm:$0xff] %vm741, %v1267
  %1332 = vst.msk [vmem:[#allocation3 + $0x1e8] sm:$0xff] %vm741, %v1268
  %1333 = vst.msk [vmem:[#allocation3 + $0x1f0] sm:$0xff] %vm741, %v1269
  %1334 = vst.msk [vmem:[#allocation3 + $0x1f8] sm:$0xff] %vm741, %v1270
  %v1335 = vld [vmem:[#allocation2 + $0x1] sm:$0xff]
  %v1336 = vld [vmem:[#allocation2 + $0x9] sm:$0xff]
  %v1337 = vld [vmem:[#allocation2 + $0x19] sm:$0xff]
  %v1338 = vld [vmem:[#allocation2 + $0x21] sm:$0xff]
  %v1339 = vld [vmem:[#allocation2 + $0x31] sm:$0xff]
  %v1340 = vld [vmem:[#allocation2 + $0x39] sm:$0xff]
  %v1341 = vld [vmem:[#allocation2 + $0x49] sm:$0xff]
  %v1342 = vld [vmem:[#allocation2 + $0x51] sm:$0xff]
  %v1343 = vld [vmem:[#allocation2 + $0x61] sm:$0xff]
  %v1344 = vld [vmem:[#allocation2 + $0x69] sm:$0xff]
  %v1345 = vld [vmem:[#allocation2 + $0x79] sm:$0xff]
  %v1346 = vld [vmem:[#allocation2 + $0x81] sm:$0xff]
  %v1347 = vld [vmem:[#allocation2 + $0x91] sm:$0xff]
  %v1348 = vld [vmem:[#allocation2 + $0x99] sm:$0xff]
  %v1349 = vld [vmem:[#allocation2 + $0xa9] sm:$0xff]
  %v1350 = vld [vmem:[#allocation2 + $0xb1] sm:$0xff]
  %v1351 = vld [vmem:[#allocation2 + $0xc1] sm:$0xff]
  %v1352 = vld [vmem:[#allocation2 + $0xc9] sm:$0xff]
  %v1353 = vld [vmem:[#allocation2 + $0xd9] sm:$0xff]
  %v1354 = vld [vmem:[#allocation2 + $0xe1] sm:$0xff]
  %v1355 = vld [vmem:[#allocation2 + $0xf1] sm:$0xff]
  %v1356 = vld [vmem:[#allocation2 + $0xf9] sm:$0xff]
  %v1357 = vld [vmem:[#allocation2 + $0x109] sm:$0xff]
  %v1358 = vld [vmem:[#allocation2 + $0x111] sm:$0xff]
  %v1359 = vld [vmem:[#allocation2 + $0x121] sm:$0xff]
  %v1360 = vld [vmem:[#allocation2 + $0x129] sm:$0xff]
  %v1361 = vld [vmem:[#allocation2 + $0x139] sm:$0xff]
  %v1362 = vld [vmem:[#allocation2 + $0x141] sm:$0xff]
  %v1363 = vld [vmem:[#allocation2 + $0x151] sm:$0xff]
  %v1364 = vld [vmem:[#allocation2 + $0x159] sm:$0xff]
  %v1365 = vld [vmem:[#allocation2 + $0x169] sm:$0xff]
  %v1366 = vld [vmem:[#allocation2 + $0x171] sm:$0xff]
  %v1367 = vld [vmem:[#allocation2 + $0x1b1] sm:$0xff]
  %v1368 = vld [vmem:[#allocation2 + $0x1b9] sm:$0xff]
  %v1369 = vld [vmem:[#allocation2 + $0x1c9] sm:$0xff]
  %v1370 = vld [vmem:[#allocation2 + $0x1d1] sm:$0xff]
  %v1371 = vld [vmem:[#allocation2 + $0x1e1] sm:$0xff]
  %v1372 = vld [vmem:[#allocation2 + $0x1e9] sm:$0xff]
  %v1373 = vld [vmem:[#allocation2 + $0x1f9] sm:$0xff]
  %v1374 = vld [vmem:[#allocation2 + $0x201] sm:$0xff]
  %v1375 = vld [vmem:[#allocation2 + $0x211] sm:$0xff]
  %v1376 = vld [vmem:[#allocation2 + $0x219] sm:$0xff]
  %v1377 = vld [vmem:[#allocation2 + $0x229] sm:$0xff]
  %v1378 = vld [vmem:[#allocation2 + $0x231] sm:$0xff]
  %v1379 = vld [vmem:[#allocation2 + $0x241] sm:$0xff]
  %v1380 = vld [vmem:[#allocation2 + $0x249] sm:$0xff]
  %v1381 = vld [vmem:[#allocation2 + $0x259] sm:$0xff]
  %v1382 = vld [vmem:[#allocation2 + $0x261] sm:$0xff]
  %v1383 = vld [vmem:[#allocation2 + $0x271] sm:$0xff]
  %v1384 = vld [vmem:[#allocation2 + $0x279] sm:$0xff]
  %v1385 = vld [vmem:[#allocation2 + $0x289] sm:$0xff]
  %v1386 = vld [vmem:[#allocation2 + $0x291] sm:$0xff]
  %v1387 = vld [vmem:[#allocation2 + $0x2a1] sm:$0xff]
  %v1388 = vld [vmem:[#allocation2 + $0x2a9] sm:$0xff]
  %v1389 = vld [vmem:[#allocation2 + $0x2b9] sm:$0xff]
  %v1390 = vld [vmem:[#allocation2 + $0x2c1] sm:$0xff]
  %v1391 = vld [vmem:[#allocation2 + $0x2d1] sm:$0xff]
  %v1392 = vld [vmem:[#allocation2 + $0x2d9] sm:$0xff]
  %v1393 = vld [vmem:[#allocation2 + $0x2e9] sm:$0xff]
  %v1394 = vld [vmem:[#allocation2 + $0x2f1] sm:$0xff]
  %v1395 = vld [vmem:[#allocation2 + $0x301] sm:$0xff]
  %v1396 = vld [vmem:[#allocation2 + $0x309] sm:$0xff]
  %v1397 = vld [vmem:[#allocation2 + $0x319] sm:$0xff]
  %v1398 = vld [vmem:[#allocation2 + $0x321] sm:$0xff]
  %1463 = vrot.lane.b32.xlu0 %v1335, 4
  %v1464 = vpop.permute.xlu0 %1463
  %1465 = vrot.lane.b32.xlu0 %v1336, 4
  %v1466 = vpop.permute.xlu0 %1465
  %1467 = vrot.lane.b32.xlu0 %v1337, 4
  %v1468 = vpop.permute.xlu0 %1467
  %1469 = vrot.lane.b32.xlu0 %v1338, 4
  %v1470 = vpop.permute.xlu0 %1469
  %1471 = vrot.lane.b32.xlu0 %v1339, 4
  %v1472 = vpop.permute.xlu0 %1471
  %1473 = vrot.lane.b32.xlu0 %v1340, 4
  %v1474 = vpop.permute.xlu0 %1473
  %1475 = vrot.lane.b32.xlu0 %v1341, 4
  %v1476 = vpop.permute.xlu0 %1475
  %1477 = vrot.lane.b32.xlu0 %v1342, 4
  %v1478 = vpop.permute.xlu0 %1477
  %1479 = vrot.lane.b32.xlu0 %v1343, 4
  %v1480 = vpop.permute.xlu0 %1479
  %1481 = vrot.lane.b32.xlu0 %v1344, 4
  %v1482 = vpop.permute.xlu0 %1481
  %1483 = vrot.lane.b32.xlu0 %v1345, 4
  %v1484 = vpop.permute.xlu0 %1483
  %1485 = vrot.lane.b32.xlu0 %v1346, 4
  %v1486 = vpop.permute.xlu0 %1485
  %1487 = vrot.lane.b32.xlu0 %v1347, 4
  %v1488 = vpop.permute.xlu0 %1487
  %1489 = vrot.lane.b32.xlu0 %v1348, 4
  %v1490 = vpop.permute.xlu0 %1489
  %1491 = vrot.lane.b32.xlu0 %v1349, 4
  %v1492 = vpop.permute.xlu0 %1491
  %1493 = vrot.lane.b32.xlu0 %v1350, 4
  %v1494 = vpop.permute.xlu0 %1493
  %1495 = vrot.lane.b32.xlu0 %v1351, 4
  %v1496 = vpop.permute.xlu0 %1495
  %1497 = vrot.lane.b32.xlu0 %v1352, 4
  %v1498 = vpop.permute.xlu0 %1497
  %1499 = vrot.lane.b32.xlu0 %v1353, 4
  %v1500 = vpop.permute.xlu0 %1499
  %1501 = vrot.lane.b32.xlu0 %v1354, 4
  %v1502 = vpop.permute.xlu0 %1501
  %1503 = vrot.lane.b32.xlu0 %v1355, 4
  %v1504 = vpop.permute.xlu0 %1503
  %1505 = vrot.lane.b32.xlu0 %v1356, 4
  %v1506 = vpop.permute.xlu0 %1505
  %1507 = vrot.lane.b32.xlu0 %v1357, 4
  %v1508 = vpop.permute.xlu0 %1507
  %1509 = vrot.lane.b32.xlu0 %v1358, 4
  %v1510 = vpop.permute.xlu0 %1509
  %1511 = vrot.lane.b32.xlu0 %v1359, 4
  %v1512 = vpop.permute.xlu0 %1511
  %1513 = vrot.lane.b32.xlu0 %v1360, 4
  %v1514 = vpop.permute.xlu0 %1513
  %1515 = vrot.lane.b32.xlu0 %v1361, 4
  %v1516 = vpop.permute.xlu0 %1515
  %1517 = vrot.lane.b32.xlu0 %v1362, 4
  %v1518 = vpop.permute.xlu0 %1517
  %1519 = vrot.lane.b32.xlu0 %v1363, 4
  %v1520 = vpop.permute.xlu0 %1519
  %1521 = vrot.lane.b32.xlu0 %v1364, 4
  %v1522 = vpop.permute.xlu0 %1521
  %1523 = vrot.lane.b32.xlu0 %v1365, 4
  %v1524 = vpop.permute.xlu0 %1523
  %1525 = vrot.lane.b32.xlu0 %v1366, 4
  %v1526 = vpop.permute.xlu0 %1525
  %1527 = vrot.lane.b32.xlu0 %v1367, 4
  %v1528 = vpop.permute.xlu0 %1527
  %1529 = vrot.lane.b32.xlu0 %v1368, 4
  %v1530 = vpop.permute.xlu0 %1529
  %1531 = vrot.lane.b32.xlu0 %v1369, 4
  %v1532 = vpop.permute.xlu0 %1531
  %1533 = vrot.lane.b32.xlu0 %v1370, 4
  %v1534 = vpop.permute.xlu0 %1533
  %1535 = vrot.lane.b32.xlu0 %v1371, 4
  %v1536 = vpop.permute.xlu0 %1535
  %1537 = vrot.lane.b32.xlu0 %v1372, 4
  %v1538 = vpop.permute.xlu0 %1537
  %1539 = vrot.lane.b32.xlu0 %v1373, 4
  %v1540 = vpop.permute.xlu0 %1539
  %1541 = vrot.lane.b32.xlu0 %v1374, 4
  %v1542 = vpop.permute.xlu0 %1541
  %1543 = vrot.lane.b32.xlu0 %v1375, 4
  %v1544 = vpop.permute.xlu0 %1543
  %1545 = vrot.lane.b32.xlu0 %v1376, 4
  %v1546 = vpop.permute.xlu0 %1545
  %1547 = vrot.lane.b32.xlu0 %v1377, 4
  %v1548 = vpop.permute.xlu0 %1547
  %1549 = vrot.lane.b32.xlu0 %v1378, 4
  %v1550 = vpop.permute.xlu0 %1549
  %1551 = vrot.lane.b32.xlu0 %v1379, 4
  %v1552 = vpop.permute.xlu0 %1551
  %1553 = vrot.lane.b32.xlu0 %v1380, 4
  %v1554 = vpop.permute.xlu0 %1553
  %1555 = vrot.lane.b32.xlu0 %v1381, 4
  %v1556 = vpop.permute.xlu0 %1555
  %1557 = vrot.lane.b32.xlu0 %v1382, 4
  %v1558 = vpop.permute.xlu0 %1557
  %1559 = vrot.lane.b32.xlu0 %v1383, 4
  %v1560 = vpop.permute.xlu0 %1559
  %1561 = vrot.lane.b32.xlu0 %v1384, 4
  %v1562 = vpop.permute.xlu0 %1561
  %1563 = vrot.lane.b32.xlu0 %v1385, 4
  %v1564 = vpop.permute.xlu0 %1563
  %1565 = vrot.lane.b32.xlu0 %v1386, 4
  %v1566 = vpop.permute.xlu0 %1565
  %1567 = vrot.lane.b32.xlu0 %v1387, 4
  %v1568 = vpop.permute.xlu0 %1567
  %1569 = vrot.lane.b32.xlu0 %v1388, 4
  %v1570 = vpop.permute.xlu0 %1569
  %1571 = vrot.lane.b32.xlu0 %v1389, 4
  %v1572 = vpop.permute.xlu0 %1571
  %1573 = vrot.lane.b32.xlu0 %v1390, 4
  %v1574 = vpop.permute.xlu0 %1573
  %1575 = vrot.lane.b32.xlu0 %v1391, 4
  %v1576 = vpop.permute.xlu0 %1575
  %1577 = vrot.lane.b32.xlu0 %v1392, 4
  %v1578 = vpop.permute.xlu0 %1577
  %1579 = vrot.lane.b32.xlu0 %v1393, 4
  %v1580 = vpop.permute.xlu0 %1579
  %1581 = vrot.lane.b32.xlu0 %v1394, 4
  %v1582 = vpop.permute.xlu0 %1581
  %1583 = vrot.lane.b32.xlu0 %v1395, 4
  %v1584 = vpop.permute.xlu0 %1583
  %1585 = vrot.lane.b32.xlu0 %v1396, 4
  %v1586 = vpop.permute.xlu0 %1585
  %1587 = vrot.lane.b32.xlu0 %v1397, 4
  %v1588 = vpop.permute.xlu0 %1587
  %1589 = vrot.lane.b32.xlu0 %v1398, 4
  %v1590 = vpop.permute.xlu0 %1589
  %vm1655 = vcmask 64544
  %1656 = vst.msk [vmem:[#allocation3] sm:$0xff] %vm1655, %v1464
  %1657 = vst.msk [vmem:[#allocation3 + $0x8] sm:$0xff] %vm1655, %v1466
  %1658 = vst.msk [vmem:[#allocation3 + $0x10] sm:$0xff] %vm1655, %v1468
  %1659 = vst.msk [vmem:[#allocation3 + $0x18] sm:$0xff] %vm1655, %v1470
  %1660 = vst.msk [vmem:[#allocation3 + $0x20] sm:$0xff] %vm1655, %v1472
  %1661 = vst.msk [vmem:[#allocation3 + $0x28] sm:$0xff] %vm1655, %v1474
  %1662 = vst.msk [vmem:[#allocation3 + $0x30] sm:$0xff] %vm1655, %v1476
  %1663 = vst.msk [vmem:[#allocation3 + $0x38] sm:$0xff] %vm1655, %v1478
  %1664 = vst.msk [vmem:[#allocation3 + $0x40] sm:$0xff] %vm1655, %v1480
  %1665 = vst.msk [vmem:[#allocation3 + $0x48] sm:$0xff] %vm1655, %v1482
  %1666 = vst.msk [vmem:[#allocation3 + $0x50] sm:$0xff] %vm1655, %v1484
  %1667 = vst.msk [vmem:[#allocation3 + $0x58] sm:$0xff] %vm1655, %v1486
  %1668 = vst.msk [vmem:[#allocation3 + $0x60] sm:$0xff] %vm1655, %v1488
  %1669 = vst.msk [vmem:[#allocation3 + $0x68] sm:$0xff] %vm1655, %v1490
  %1670 = vst.msk [vmem:[#allocation3 + $0x70] sm:$0xff] %vm1655, %v1492
  %1671 = vst.msk [vmem:[#allocation3 + $0x78] sm:$0xff] %vm1655, %v1494
  %1672 = vst.msk [vmem:[#allocation3 + $0x80] sm:$0xff] %vm1655, %v1496
  %1673 = vst.msk [vmem:[#allocation3 + $0x88] sm:$0xff] %vm1655, %v1498
  %1674 = vst.msk [vmem:[#allocation3 + $0x90] sm:$0xff] %vm1655, %v1500
  %1675 = vst.msk [vmem:[#allocation3 + $0x98] sm:$0xff] %vm1655, %v1502
  %1676 = vst.msk [vmem:[#allocation3 + $0xa0] sm:$0xff] %vm1655, %v1504
  %1677 = vst.msk [vmem:[#allocation3 + $0xa8] sm:$0xff] %vm1655, %v1506
  %1678 = vst.msk [vmem:[#allocation3 + $0xb0] sm:$0xff] %vm1655, %v1508
  %1679 = vst.msk [vmem:[#allocation3 + $0xb8] sm:$0xff] %vm1655, %v1510
  %1680 = vst.msk [vmem:[#allocation3 + $0xc0] sm:$0xff] %vm1655, %v1512
  %1681 = vst.msk [vmem:[#allocation3 + $0xc8] sm:$0xff] %vm1655, %v1514
  %1682 = vst.msk [vmem:[#allocation3 + $0xd0] sm:$0xff] %vm1655, %v1516
  %1683 = vst.msk [vmem:[#allocation3 + $0xd8] sm:$0xff] %vm1655, %v1518
  %1684 = vst.msk [vmem:[#allocation3 + $0xe0] sm:$0xff] %vm1655, %v1520
  %1685 = vst.msk [vmem:[#allocation3 + $0xe8] sm:$0xff] %vm1655, %v1522
  %1686 = vst.msk [vmem:[#allocation3 + $0xf0] sm:$0xff] %vm1655, %v1524
  %1687 = vst.msk [vmem:[#allocation3 + $0xf8] sm:$0xff] %vm1655, %v1526
  %1688 = vst.msk [vmem:[#allocation3 + $0x100] sm:$0xff] %vm1655, %v1528
  %1689 = vst.msk [vmem:[#allocation3 + $0x108] sm:$0xff] %vm1655, %v1530
  %1690 = vst.msk [vmem:[#allocation3 + $0x110] sm:$0xff] %vm1655, %v1532
  %1691 = vst.msk [vmem:[#allocation3 + $0x118] sm:$0xff] %vm1655, %v1534
  %1692 = vst.msk [vmem:[#allocation3 + $0x120] sm:$0xff] %vm1655, %v1536
  %1693 = vst.msk [vmem:[#allocation3 + $0x128] sm:$0xff] %vm1655, %v1538
  %1694 = vst.msk [vmem:[#allocation3 + $0x130] sm:$0xff] %vm1655, %v1540
  %1695 = vst.msk [vmem:[#allocation3 + $0x138] sm:$0xff] %vm1655, %v1542
  %1696 = vst.msk [vmem:[#allocation3 + $0x140] sm:$0xff] %vm1655, %v1544
  %1697 = vst.msk [vmem:[#allocation3 + $0x148] sm:$0xff] %vm1655, %v1546
  %1698 = vst.msk [vmem:[#allocation3 + $0x150] sm:$0xff] %vm1655, %v1548
  %1699 = vst.msk [vmem:[#allocation3 + $0x158] sm:$0xff] %vm1655, %v1550
  %1700 = vst.msk [vmem:[#allocation3 + $0x160] sm:$0xff] %vm1655, %v1552
  %1701 = vst.msk [vmem:[#allocation3 + $0x168] sm:$0xff] %vm1655, %v1554
  %1702 = vst.msk [vmem:[#allocation3 + $0x170] sm:$0xff] %vm1655, %v1556
  %1703 = vst.msk [vmem:[#allocation3 + $0x178] sm:$0xff] %vm1655, %v1558
  %1704 = vst.msk [vmem:[#allocation3 + $0x180] sm:$0xff] %vm1655, %v1560
  %1705 = vst.msk [vmem:[#allocation3 + $0x188] sm:$0xff] %vm1655, %v1562
  %1706 = vst.msk [vmem:[#allocation3 + $0x190] sm:$0xff] %vm1655, %v1564
  %1707 = vst.msk [vmem:[#allocation3 + $0x198] sm:$0xff] %vm1655, %v1566
  %1708 = vst.msk [vmem:[#allocation3 + $0x1a0] sm:$0xff] %vm1655, %v1568
  %1709 = vst.msk [vmem:[#allocation3 + $0x1a8] sm:$0xff] %vm1655, %v1570
  %1710 = vst.msk [vmem:[#allocation3 + $0x1b0] sm:$0xff] %vm1655, %v1572
  %1711 = vst.msk [vmem:[#allocation3 + $0x1b8] sm:$0xff] %vm1655, %v1574
  %1712 = vst.msk [vmem:[#allocation3 + $0x1c0] sm:$0xff] %vm1655, %v1576
  %1713 = vst.msk [vmem:[#allocation3 + $0x1c8] sm:$0xff] %vm1655, %v1578
  %1714 = vst.msk [vmem:[#allocation3 + $0x1d0] sm:$0xff] %vm1655, %v1580
  %1715 = vst.msk [vmem:[#allocation3 + $0x1d8] sm:$0xff] %vm1655, %v1582
  %1716 = vst.msk [vmem:[#allocation3 + $0x1e0] sm:$0xff] %vm1655, %v1584
  %1717 = vst.msk [vmem:[#allocation3 + $0x1e8] sm:$0xff] %vm1655, %v1586
  %1718 = vst.msk [vmem:[#allocation3 + $0x1f0] sm:$0xff] %vm1655, %v1588
  %1719 = vst.msk [vmem:[#allocation3 + $0x1f8] sm:$0xff] %vm1655, %v1590
  %v1720 = vld [vmem:[#allocation2 + $0x2] sm:$0xff]
  %v1721 = vld [vmem:[#allocation2 + $0xa] sm:$0xff]
  %v1722 = vld [vmem:[#allocation2 + $0x1a] sm:$0xff]
  %v1723 = vld [vmem:[#allocation2 + $0x22] sm:$0xff]
  %v1724 = vld [vmem:[#allocation2 + $0x32] sm:$0xff]
  %v1725 = vld [vmem:[#allocation2 + $0x3a] sm:$0xff]
  %v1726 = vld [vmem:[#allocation2 + $0x4a] sm:$0xff]
  %v1727 = vld [vmem:[#allocation2 + $0x52] sm:$0xff]
  %v1728 = vld [vmem:[#allocation2 + $0x62] sm:$0xff]
  %v1729 = vld [vmem:[#allocation2 + $0x6a] sm:$0xff]
  %v1730 = vld [vmem:[#allocation2 + $0x7a] sm:$0xff]
  %v1731 = vld [vmem:[#allocation2 + $0x82] sm:$0xff]
  %v1732 = vld [vmem:[#allocation2 + $0x92] sm:$0xff]
  %v1733 = vld [vmem:[#allocation2 + $0x9a] sm:$0xff]
  %v1734 = vld [vmem:[#allocation2 + $0xaa] sm:$0xff]
  %v1735 = vld [vmem:[#allocation2 + $0xb2] sm:$0xff]
  %v1736 = vld [vmem:[#allocation2 + $0xc2] sm:$0xff]
  %v1737 = vld [vmem:[#allocation2 + $0xca] sm:$0xff]
  %v1738 = vld [vmem:[#allocation2 + $0xda] sm:$0xff]
  %v1739 = vld [vmem:[#allocation2 + $0xe2] sm:$0xff]
  %v1740 = vld [vmem:[#allocation2 + $0xf2] sm:$0xff]
  %v1741 = vld [vmem:[#allocation2 + $0xfa] sm:$0xff]
  %v1742 = vld [vmem:[#allocation2 + $0x10a] sm:$0xff]
  %v1743 = vld [vmem:[#allocation2 + $0x112] sm:$0xff]
  %v1744 = vld [vmem:[#allocation2 + $0x122] sm:$0xff]
  %v1745 = vld [vmem:[#allocation2 + $0x12a] sm:$0xff]
  %v1746 = vld [vmem:[#allocation2 + $0x13a] sm:$0xff]
  %v1747 = vld [vmem:[#allocation2 + $0x142] sm:$0xff]
  %v1748 = vld [vmem:[#allocation2 + $0x152] sm:$0xff]
  %v1749 = vld [vmem:[#allocation2 + $0x15a] sm:$0xff]
  %v1750 = vld [vmem:[#allocation2 + $0x16a] sm:$0xff]
  %v1751 = vld [vmem:[#allocation2 + $0x172] sm:$0xff]
  %v1752 = vld [vmem:[#allocation2 + $0x1b2] sm:$0xff]
  %v1753 = vld [vmem:[#allocation2 + $0x1ba] sm:$0xff]
  %v1754 = vld [vmem:[#allocation2 + $0x1ca] sm:$0xff]
  %v1755 = vld [vmem:[#allocation2 + $0x1d2] sm:$0xff]
  %v1756 = vld [vmem:[#allocation2 + $0x1e2] sm:$0xff]
  %v1757 = vld [vmem:[#allocation2 + $0x1ea] sm:$0xff]
  %v1758 = vld [vmem:[#allocation2 + $0x1fa] sm:$0xff]
  %v1759 = vld [vmem:[#allocation2 + $0x202] sm:$0xff]
  %v1760 = vld [vmem:[#allocation2 + $0x212] sm:$0xff]
  %v1761 = vld [vmem:[#allocation2 + $0x21a] sm:$0xff]
  %v1762 = vld [vmem:[#allocation2 + $0x22a] sm:$0xff]
  %v1763 = vld [vmem:[#allocation2 + $0x232] sm:$0xff]
  %v1764 = vld [vmem:[#allocation2 + $0x242] sm:$0xff]
  %v1765 = vld [vmem:[#allocation2 + $0x24a] sm:$0xff]
  %v1766 = vld [vmem:[#allocation2 + $0x25a] sm:$0xff]
  %v1767 = vld [vmem:[#allocation2 + $0x262] sm:$0xff]
  %v1768 = vld [vmem:[#allocation2 + $0x272] sm:$0xff]
  %v1769 = vld [vmem:[#allocation2 + $0x27a] sm:$0xff]
  %v1770 = vld [vmem:[#allocation2 + $0x28a] sm:$0xff]
  %v1771 = vld [vmem:[#allocation2 + $0x292] sm:$0xff]
  %v1772 = vld [vmem:[#allocation2 + $0x2a2] sm:$0xff]
  %v1773 = vld [vmem:[#allocation2 + $0x2aa] sm:$0xff]
  %v1774 = vld [vmem:[#allocation2 + $0x2ba] sm:$0xff]
  %v1775 = vld [vmem:[#allocation2 + $0x2c2] sm:$0xff]
  %v1776 = vld [vmem:[#allocation2 + $0x2d2] sm:$0xff]
  %v1777 = vld [vmem:[#allocation2 + $0x2da] sm:$0xff]
  %v1778 = vld [vmem:[#allocation2 + $0x2ea] sm:$0xff]
  %v1779 = vld [vmem:[#allocation2 + $0x2f2] sm:$0xff]
  %v1780 = vld [vmem:[#allocation2 + $0x302] sm:$0xff]
  %v1781 = vld [vmem:[#allocation2 + $0x30a] sm:$0xff]
  %v1782 = vld [vmem:[#allocation2 + $0x31a] sm:$0xff]
  %v1783 = vld [vmem:[#allocation2 + $0x322] sm:$0xff]
  %1848 = vrot.lane.b32.xlu0 %v1720, 8
  %v1849 = vpop.permute.xlu0 %1848
  %1850 = vrot.lane.b32.xlu0 %v1721, 8
  %v1851 = vpop.permute.xlu0 %1850
  %1852 = vrot.lane.b32.xlu0 %v1722, 8
  %v1853 = vpop.permute.xlu0 %1852
  %1854 = vrot.lane.b32.xlu0 %v1723, 8
  %v1855 = vpop.permute.xlu0 %1854
  %1856 = vrot.lane.b32.xlu0 %v1724, 8
  %v1857 = vpop.permute.xlu0 %1856
  %1858 = vrot.lane.b32.xlu0 %v1725, 8
  %v1859 = vpop.permute.xlu0 %1858
  %1860 = vrot.lane.b32.xlu0 %v1726, 8
  %v1861 = vpop.permute.xlu0 %1860
  %1862 = vrot.lane.b32.xlu0 %v1727, 8
  %v1863 = vpop.permute.xlu0 %1862
  %1864 = vrot.lane.b32.xlu0 %v1728, 8
  %v1865 = vpop.permute.xlu0 %1864
  %1866 = vrot.lane.b32.xlu0 %v1729, 8
  %v1867 = vpop.permute.xlu0 %1866
  %1868 = vrot.lane.b32.xlu0 %v1730, 8
  %v1869 = vpop.permute.xlu0 %1868
  %1870 = vrot.lane.b32.xlu0 %v1731, 8
  %v1871 = vpop.permute.xlu0 %1870
  %1872 = vrot.lane.b32.xlu0 %v1732, 8
  %v1873 = vpop.permute.xlu0 %1872
  %1874 = vrot.lane.b32.xlu0 %v1733, 8
  %v1875 = vpop.permute.xlu0 %1874
  %1876 = vrot.lane.b32.xlu0 %v1734, 8
  %v1877 = vpop.permute.xlu0 %1876
  %1878 = vrot.lane.b32.xlu0 %v1735, 8
  %v1879 = vpop.permute.xlu0 %1878
  %1880 = vrot.lane.b32.xlu0 %v1736, 8
  %v1881 = vpop.permute.xlu0 %1880
  %1882 = vrot.lane.b32.xlu0 %v1737, 8
  %v1883 = vpop.permute.xlu0 %1882
  %1884 = vrot.lane.b32.xlu0 %v1738, 8
  %v1885 = vpop.permute.xlu0 %1884
  %1886 = vrot.lane.b32.xlu0 %v1739, 8
  %v1887 = vpop.permute.xlu0 %1886
  %1888 = vrot.lane.b32.xlu0 %v1740, 8
  %v1889 = vpop.permute.xlu0 %1888
  %1890 = vrot.lane.b32.xlu0 %v1741, 8
  %v1891 = vpop.permute.xlu0 %1890
  %1892 = vrot.lane.b32.xlu0 %v1742, 8
  %v1893 = vpop.permute.xlu0 %1892
  %1894 = vrot.lane.b32.xlu0 %v1743, 8
  %v1895 = vpop.permute.xlu0 %1894
  %1896 = vrot.lane.b32.xlu0 %v1744, 8
  %v1897 = vpop.permute.xlu0 %1896
  %1898 = vrot.lane.b32.xlu0 %v1745, 8
  %v1899 = vpop.permute.xlu0 %1898
  %1900 = vrot.lane.b32.xlu0 %v1746, 8
  %v1901 = vpop.permute.xlu0 %1900
  %1902 = vrot.lane.b32.xlu0 %v1747, 8
  %v1903 = vpop.permute.xlu0 %1902
  %1904 = vrot.lane.b32.xlu0 %v1748, 8
  %v1905 = vpop.permute.xlu0 %1904
  %1906 = vrot.lane.b32.xlu0 %v1749, 8
  %v1907 = vpop.permute.xlu0 %1906
  %1908 = vrot.lane.b32.xlu0 %v1750, 8
  %v1909 = vpop.permute.xlu0 %1908
  %1910 = vrot.lane.b32.xlu0 %v1751, 8
  %v1911 = vpop.permute.xlu0 %1910
  %1912 = vrot.lane.b32.xlu0 %v1752, 8
  %v1913 = vpop.permute.xlu0 %1912
  %1914 = vrot.lane.b32.xlu0 %v1753, 8
  %v1915 = vpop.permute.xlu0 %1914
  %1916 = vrot.lane.b32.xlu0 %v1754, 8
  %v1917 = vpop.permute.xlu0 %1916
  %1918 = vrot.lane.b32.xlu0 %v1755, 8
  %v1919 = vpop.permute.xlu0 %1918
  %1920 = vrot.lane.b32.xlu0 %v1756, 8
  %v1921 = vpop.permute.xlu0 %1920
  %1922 = vrot.lane.b32.xlu0 %v1757, 8
  %v1923 = vpop.permute.xlu0 %1922
  %1924 = vrot.lane.b32.xlu0 %v1758, 8
  %v1925 = vpop.permute.xlu0 %1924
  %1926 = vrot.lane.b32.xlu0 %v1759, 8
  %v1927 = vpop.permute.xlu0 %1926
  %1928 = vrot.lane.b32.xlu0 %v1760, 8
  %v1929 = vpop.permute.xlu0 %1928
  %1930 = vrot.lane.b32.xlu0 %v1761, 8
  %v1931 = vpop.permute.xlu0 %1930
  %1932 = vrot.lane.b32.xlu0 %v1762, 8
  %v1933 = vpop.permute.xlu0 %1932
  %1934 = vrot.lane.b32.xlu0 %v1763, 8
  %v1935 = vpop.permute.xlu0 %1934
  %1936 = vrot.lane.b32.xlu0 %v1764, 8
  %v1937 = vpop.permute.xlu0 %1936
  %1938 = vrot.lane.b32.xlu0 %v1765, 8
  %v1939 = vpop.permute.xlu0 %1938
  %1940 = vrot.lane.b32.xlu0 %v1766, 8
  %v1941 = vpop.permute.xlu0 %1940
  %1942 = vrot.lane.b32.xlu0 %v1767, 8
  %v1943 = vpop.permute.xlu0 %1942
  %1944 = vrot.lane.b32.xlu0 %v1768, 8
  %v1945 = vpop.permute.xlu0 %1944
  %1946 = vrot.lane.b32.xlu0 %v1769, 8
  %v1947 = vpop.permute.xlu0 %1946
  %1948 = vrot.lane.b32.xlu0 %v1770, 8
  %v1949 = vpop.permute.xlu0 %1948
  %1950 = vrot.lane.b32.xlu0 %v1771, 8
  %v1951 = vpop.permute.xlu0 %1950
  %1952 = vrot.lane.b32.xlu0 %v1772, 8
  %v1953 = vpop.permute.xlu0 %1952
  %1954 = vrot.lane.b32.xlu0 %v1773, 8
  %v1955 = vpop.permute.xlu0 %1954
  %1956 = vrot.lane.b32.xlu0 %v1774, 8
  %v1957 = vpop.permute.xlu0 %1956
  %1958 = vrot.lane.b32.xlu0 %v1775, 8
  %v1959 = vpop.permute.xlu0 %1958
  %1960 = vrot.lane.b32.xlu0 %v1776, 8
  %v1961 = vpop.permute.xlu0 %1960
  %1962 = vrot.lane.b32.xlu0 %v1777, 8
  %v1963 = vpop.permute.xlu0 %1962
  %1964 = vrot.lane.b32.xlu0 %v1778, 8
  %v1965 = vpop.permute.xlu0 %1964
  %1966 = vrot.lane.b32.xlu0 %v1779, 8
  %v1967 = vpop.permute.xlu0 %1966
  %1968 = vrot.lane.b32.xlu0 %v1780, 8
  %v1969 = vpop.permute.xlu0 %1968
  %1970 = vrot.lane.b32.xlu0 %v1781, 8
  %v1971 = vpop.permute.xlu0 %1970
  %1972 = vrot.lane.b32.xlu0 %v1782, 8
  %v1973 = vpop.permute.xlu0 %1972
  %1974 = vrot.lane.b32.xlu0 %v1783, 8
  %v1975 = vpop.permute.xlu0 %1974
  %vm2040 = vcmask 97344
  %2041 = vst.msk [vmem:[#allocation3] sm:$0xff] %vm2040, %v1849
  %2042 = vst.msk [vmem:[#allocation3 + $0x8] sm:$0xff] %vm2040, %v1851
  %2043 = vst.msk [vmem:[#allocation3 + $0x10] sm:$0xff] %vm2040, %v1853
  %2044 = vst.msk [vmem:[#allocation3 + $0x18] sm:$0xff] %vm2040, %v1855
  %2045 = vst.msk [vmem:[#allocation3 + $0x20] sm:$0xff] %vm2040, %v1857
  %2046 = vst.msk [vmem:[#allocation3 + $0x28] sm:$0xff] %vm2040, %v1859
  %2047 = vst.msk [vmem:[#allocation3 + $0x30] sm:$0xff] %vm2040, %v1861
  %2048 = vst.msk [vmem:[#allocation3 + $0x38] sm:$0xff] %vm2040, %v1863
  %2049 = vst.msk [vmem:[#allocation3 + $0x40] sm:$0xff] %vm2040, %v1865
  %2050 = vst.msk [vmem:[#allocation3 + $0x48] sm:$0xff] %vm2040, %v1867
  %2051 = vst.msk [vmem:[#allocation3 + $0x50] sm:$0xff] %vm2040, %v1869
  %2052 = vst.msk [vmem:[#allocation3 + $0x58] sm:$0xff] %vm2040, %v1871
  %2053 = vst.msk [vmem:[#allocation3 + $0x60] sm:$0xff] %vm2040, %v1873
  %2054 = vst.msk [vmem:[#allocation3 + $0x68] sm:$0xff] %vm2040, %v1875
  %2055 = vst.msk [vmem:[#allocation3 + $0x70] sm:$0xff] %vm2040, %v1877
  %2056 = vst.msk [vmem:[#allocation3 + $0x78] sm:$0xff] %vm2040, %v1879
  %2057 = vst.msk [vmem:[#allocation3 + $0x80] sm:$0xff] %vm2040, %v1881
  %2058 = vst.msk [vmem:[#allocation3 + $0x88] sm:$0xff] %vm2040, %v1883
  %2059 = vst.msk [vmem:[#allocation3 + $0x90] sm:$0xff] %vm2040, %v1885
  %2060 = vst.msk [vmem:[#allocation3 + $0x98] sm:$0xff] %vm2040, %v1887
  %2061 = vst.msk [vmem:[#allocation3 + $0xa0] sm:$0xff] %vm2040, %v1889
  %2062 = vst.msk [vmem:[#allocation3 + $0xa8] sm:$0xff] %vm2040, %v1891
  %2063 = vst.msk [vmem:[#allocation3 + $0xb0] sm:$0xff] %vm2040, %v1893
  %2064 = vst.msk [vmem:[#allocation3 + $0xb8] sm:$0xff] %vm2040, %v1895
  %2065 = vst.msk [vmem:[#allocation3 + $0xc0] sm:$0xff] %vm2040, %v1897
  %2066 = vst.msk [vmem:[#allocation3 + $0xc8] sm:$0xff] %vm2040, %v1899
  %2067 = vst.msk [vmem:[#allocation3 + $0xd0] sm:$0xff] %vm2040, %v1901
  %2068 = vst.msk [vmem:[#allocation3 + $0xd8] sm:$0xff] %vm2040, %v1903
  %2069 = vst.msk [vmem:[#allocation3 + $0xe0] sm:$0xff] %vm2040, %v1905
  %2070 = vst.msk [vmem:[#allocation3 + $0xe8] sm:$0xff] %vm2040, %v1907
  %2071 = vst.msk [vmem:[#allocation3 + $0xf0] sm:$0xff] %vm2040, %v1909
  %2072 = vst.msk [vmem:[#allocation3 + $0xf8] sm:$0xff] %vm2040, %v1911
  %2073 = vst.msk [vmem:[#allocation3 + $0x100] sm:$0xff] %vm2040, %v1913
  %2074 = vst.msk [vmem:[#allocation3 + $0x108] sm:$0xff] %vm2040, %v1915
  %2075 = vst.msk [vmem:[#allocation3 + $0x110] sm:$0xff] %vm2040, %v1917
  %2076 = vst.msk [vmem:[#allocation3 + $0x118] sm:$0xff] %vm2040, %v1919
  %2077 = vst.msk [vmem:[#allocation3 + $0x120] sm:$0xff] %vm2040, %v1921
  %2078 = vst.msk [vmem:[#allocation3 + $0x128] sm:$0xff] %vm2040, %v1923
  %2079 = vst.msk [vmem:[#allocation3 + $0x130] sm:$0xff] %vm2040, %v1925
  %2080 = vst.msk [vmem:[#allocation3 + $0x138] sm:$0xff] %vm2040, %v1927
  %2081 = vst.msk [vmem:[#allocation3 + $0x140] sm:$0xff] %vm2040, %v1929
  %2082 = vst.msk [vmem:[#allocation3 + $0x148] sm:$0xff] %vm2040, %v1931
  %2083 = vst.msk [vmem:[#allocation3 + $0x150] sm:$0xff] %vm2040, %v1933
  %2084 = vst.msk [vmem:[#allocation3 + $0x158] sm:$0xff] %vm2040, %v1935
  %2085 = vst.msk [vmem:[#allocation3 + $0x160] sm:$0xff] %vm2040, %v1937
  %2086 = vst.msk [vmem:[#allocation3 + $0x168] sm:$0xff] %vm2040, %v1939
  %2087 = vst.msk [vmem:[#allocation3 + $0x170] sm:$0xff] %vm2040, %v1941
  %2088 = vst.msk [vmem:[#allocation3 + $0x178] sm:$0xff] %vm2040, %v1943
  %2089 = vst.msk [vmem:[#allocation3 + $0x180] sm:$0xff] %vm2040, %v1945
  %2090 = vst.msk [vmem:[#allocation3 + $0x188] sm:$0xff] %vm2040, %v1947
  %2091 = vst.msk [vmem:[#allocation3 + $0x190] sm:$0xff] %vm2040, %v1949
  %2092 = vst.msk [vmem:[#allocation3 + $0x198] sm:$0xff] %vm2040, %v1951
  %2093 = vst.msk [vmem:[#allocation3 + $0x1a0] sm:$0xff] %vm2040, %v1953
  %2094 = vst.msk [vmem:[#allocation3 + $0x1a8] sm:$0xff] %vm2040, %v1955
  %2095 = vst.msk [vmem:[#allocation3 + $0x1b0] sm:$0xff] %vm2040, %v1957
  %2096 = vst.msk [vmem:[#allocation3 + $0x1b8] sm:$0xff] %vm2040, %v1959
  %2097 = vst.msk [vmem:[#allocation3 + $0x1c0] sm:$0xff] %vm2040, %v1961
  %2098 = vst.msk [vmem:[#allocation3 + $0x1c8] sm:$0xff] %vm2040, %v1963
  %2099 = vst.msk [vmem:[#allocation3 + $0x1d0] sm:$0xff] %vm2040, %v1965
  %2100 = vst.msk [vmem:[#allocation3 + $0x1d8] sm:$0xff] %vm2040, %v1967
  %2101 = vst.msk [vmem:[#allocation3 + $0x1e0] sm:$0xff] %vm2040, %v1969
  %2102 = vst.msk [vmem:[#allocation3 + $0x1e8] sm:$0xff] %vm2040, %v1971
  %2103 = vst.msk [vmem:[#allocation3 + $0x1f0] sm:$0xff] %vm2040, %v1973
  %2104 = vst.msk [vmem:[#allocation3 + $0x1f8] sm:$0xff] %vm2040, %v1975
  %v2105 = vld [vmem:[%s756] sm:$0xff]
  %v2106 = vld [vmem:[%s756 + $0x8] sm:$0xff]
  %v2107 = vld [vmem:[%s756 + $0x18] sm:$0xff]
  %v2108 = vld [vmem:[%s756 + $0x20] sm:$0xff]
  %v2109 = vld [vmem:[%s756 + $0x30] sm:$0xff]
  %v2110 = vld [vmem:[%s756 + $0x38] sm:$0xff]
  %v2111 = vld [vmem:[%s756 + $0x48] sm:$0xff]
  %v2112 = vld [vmem:[%s756 + $0x50] sm:$0xff]
  %v2113 = vld [vmem:[%s756 + $0x60] sm:$0xff]
  %v2114 = vld [vmem:[%s756 + $0x68] sm:$0xff]
  %v2115 = vld [vmem:[%s756 + $0x78] sm:$0xff]
  %v2116 = vld [vmem:[%s756 + $0x80] sm:$0xff]
  %v2117 = vld [vmem:[%s756 + $0x90] sm:$0xff]
  %v2118 = vld [vmem:[%s756 + $0x98] sm:$0xff]
  %v2119 = vld [vmem:[%s756 + $0xa8] sm:$0xff]
  %v2120 = vld [vmem:[%s756 + $0xb0] sm:$0xff]
  %v2121 = vld [vmem:[%s756 + $0xc0] sm:$0xff]
  %v2122 = vld [vmem:[%s756 + $0xc8] sm:$0xff]
  %v2123 = vld [vmem:[%s756 + $0xd8] sm:$0xff]
  %v2124 = vld [vmem:[%s756 + $0xe0] sm:$0xff]
  %v2125 = vld [vmem:[%s756 + $0xf0] sm:$0xff]
  %v2126 = vld [vmem:[%s756 + $0xf8] sm:$0xff]
  %v2127 = vld [vmem:[%s756 + $0x108] sm:$0xff]
  %v2128 = vld [vmem:[%s756 + $0x110] sm:$0xff]
  %v2129 = vld [vmem:[%s756 + $0x120] sm:$0xff]
  %v2130 = vld [vmem:[%s756 + $0x128] sm:$0xff]
  %v2131 = vld [vmem:[%s756 + $0x138] sm:$0xff]
  %v2132 = vld [vmem:[%s756 + $0x140] sm:$0xff]
  %v2133 = vld [vmem:[%s756 + $0x150] sm:$0xff]
  %v2134 = vld [vmem:[%s756 + $0x158] sm:$0xff]
  %v2135 = vld [vmem:[%s756 + $0x168] sm:$0xff]
  %v2136 = vld [vmem:[%s756 + $0x170] sm:$0xff]
  %v2137 = vld [vmem:[%s756 + $0x1b0] sm:$0xff]
  %v2138 = vld [vmem:[%s756 + $0x1b8] sm:$0xff]
  %v2139 = vld [vmem:[%s756 + $0x1c8] sm:$0xff]
  %v2140 = vld [vmem:[%s756 + $0x1d0] sm:$0xff]
  %v2141 = vld [vmem:[%s756 + $0x1e0] sm:$0xff]
  %v2142 = vld [vmem:[%s756 + $0x1e8] sm:$0xff]
  %v2143 = vld [vmem:[%s756 + $0x1f8] sm:$0xff]
  %v2144 = vld [vmem:[%s756 + $0x200] sm:$0xff]
  %v2145 = vld [vmem:[%s756 + $0x210] sm:$0xff]
  %v2146 = vld [vmem:[%s756 + $0x218] sm:$0xff]
  %v2147 = vld [vmem:[%s756 + $0x228] sm:$0xff]
  %v2148 = vld [vmem:[%s756 + $0x230] sm:$0xff]
  %v2149 = vld [vmem:[%s756 + $0x240] sm:$0xff]
  %v2150 = vld [vmem:[%s756 + $0x248] sm:$0xff]
  %v2151 = vld [vmem:[%s756 + $0x258] sm:$0xff]
  %v2152 = vld [vmem:[%s756 + $0x260] sm:$0xff]
  %v2153 = vld [vmem:[%s756 + $0x270] sm:$0xff]
  %v2154 = vld [vmem:[%s756 + $0x278] sm:$0xff]
  %v2155 = vld [vmem:[%s756 + $0x288] sm:$0xff]
  %v2156 = vld [vmem:[%s756 + $0x290] sm:$0xff]
  %v2157 = vld [vmem:[%s756 + $0x2a0] sm:$0xff]
  %v2158 = vld [vmem:[%s756 + $0x2a8] sm:$0xff]
  %v2159 = vld [vmem:[%s756 + $0x2b8] sm:$0xff]
  %v2160 = vld [vmem:[%s756 + $0x2c0] sm:$0xff]
  %v2161 = vld [vmem:[%s756 + $0x2d0] sm:$0xff]
  %v2162 = vld [vmem:[%s756 + $0x2d8] sm:$0xff]
  %v2163 = vld [vmem:[%s756 + $0x2e8] sm:$0xff]
  %v2164 = vld [vmem:[%s756 + $0x2f0] sm:$0xff]
  %v2165 = vld [vmem:[%s756 + $0x300] sm:$0xff]
  %v2166 = vld [vmem:[%s756 + $0x308] sm:$0xff]
  %v2167 = vld [vmem:[%s756 + $0x318] sm:$0xff]
  %v2168 = vld [vmem:[%s756 + $0x320] sm:$0xff]
  %2233 = vrot.lane.b32.xlu0 %v2105, 12
  %v2234 = vpop.permute.xlu0 %2233
  %2235 = vrot.lane.b32.xlu0 %v2106, 12
  %v2236 = vpop.permute.xlu0 %2235
  %2237 = vrot.lane.b32.xlu0 %v2107, 12
  %v2238 = vpop.permute.xlu0 %2237
  %2239 = vrot.lane.b32.xlu0 %v2108, 12
  %v2240 = vpop.permute.xlu0 %2239
  %2241 = vrot.lane.b32.xlu0 %v2109, 12
  %v2242 = vpop.permute.xlu0 %2241
  %2243 = vrot.lane.b32.xlu0 %v2110, 12
  %v2244 = vpop.permute.xlu0 %2243
  %2245 = vrot.lane.b32.xlu0 %v2111, 12
  %v2246 = vpop.permute.xlu0 %2245
  %2247 = vrot.lane.b32.xlu0 %v2112, 12
  %v2248 = vpop.permute.xlu0 %2247
  %2249 = vrot.lane.b32.xlu0 %v2113, 12
  %v2250 = vpop.permute.xlu0 %2249
  %2251 = vrot.lane.b32.xlu0 %v2114, 12
  %v2252 = vpop.permute.xlu0 %2251
  %2253 = vrot.lane.b32.xlu0 %v2115, 12
  %v2254 = vpop.permute.xlu0 %2253
  %2255 = vrot.lane.b32.xlu0 %v2116, 12
  %v2256 = vpop.permute.xlu0 %2255
  %2257 = vrot.lane.b32.xlu0 %v2117, 12
  %v2258 = vpop.permute.xlu0 %2257
  %2259 = vrot.lane.b32.xlu0 %v2118, 12
  %v2260 = vpop.permute.xlu0 %2259
  %2261 = vrot.lane.b32.xlu0 %v2119, 12
  %v2262 = vpop.permute.xlu0 %2261
  %2263 = vrot.lane.b32.xlu0 %v2120, 12
  %v2264 = vpop.permute.xlu0 %2263
  %2265 = vrot.lane.b32.xlu0 %v2121, 12
  %v2266 = vpop.permute.xlu0 %2265
  %2267 = vrot.lane.b32.xlu0 %v2122, 12
  %v2268 = vpop.permute.xlu0 %2267
  %2269 = vrot.lane.b32.xlu0 %v2123, 12
  %v2270 = vpop.permute.xlu0 %2269
  %2271 = vrot.lane.b32.xlu0 %v2124, 12
  %v2272 = vpop.permute.xlu0 %2271
  %2273 = vrot.lane.b32.xlu0 %v2125, 12
  %v2274 = vpop.permute.xlu0 %2273
  %2275 = vrot.lane.b32.xlu0 %v2126, 12
  %v2276 = vpop.permute.xlu0 %2275
  %2277 = vrot.lane.b32.xlu0 %v2127, 12
  %v2278 = vpop.permute.xlu0 %2277
  %2279 = vrot.lane.b32.xlu0 %v2128, 12
  %v2280 = vpop.permute.xlu0 %2279
  %2281 = vrot.lane.b32.xlu0 %v2129, 12
  %v2282 = vpop.permute.xlu0 %2281
  %2283 = vrot.lane.b32.xlu0 %v2130, 12
  %v2284 = vpop.permute.xlu0 %2283
  %2285 = vrot.lane.b32.xlu0 %v2131, 12
  %v2286 = vpop.permute.xlu0 %2285
  %2287 = vrot.lane.b32.xlu0 %v2132, 12
  %v2288 = vpop.permute.xlu0 %2287
  %2289 = vrot.lane.b32.xlu0 %v2133, 12
  %v2290 = vpop.permute.xlu0 %2289
  %2291 = vrot.lane.b32.xlu0 %v2134, 12
  %v2292 = vpop.permute.xlu0 %2291
  %2293 = vrot.lane.b32.xlu0 %v2135, 12
  %v2294 = vpop.permute.xlu0 %2293
  %2295 = vrot.lane.b32.xlu0 %v2136, 12
  %v2296 = vpop.permute.xlu0 %2295
  %2297 = vrot.lane.b32.xlu0 %v2137, 12
  %v2298 = vpop.permute.xlu0 %2297
  %2299 = vrot.lane.b32.xlu0 %v2138, 12
  %v2300 = vpop.permute.xlu0 %2299
  %2301 = vrot.lane.b32.xlu0 %v2139, 12
  %v2302 = vpop.permute.xlu0 %2301
  %2303 = vrot.lane.b32.xlu0 %v2140, 12
  %v2304 = vpop.permute.xlu0 %2303
  %2305 = vrot.lane.b32.xlu0 %v2141, 12
  %v2306 = vpop.permute.xlu0 %2305
  %2307 = vrot.lane.b32.xlu0 %v2142, 12
  %v2308 = vpop.permute.xlu0 %2307
  %2309 = vrot.lane.b32.xlu0 %v2143, 12
  %v2310 = vpop.permute.xlu0 %2309
  %2311 = vrot.lane.b32.xlu0 %v2144, 12
  %v2312 = vpop.permute.xlu0 %2311
  %2313 = vrot.lane.b32.xlu0 %v2145, 12
  %v2314 = vpop.permute.xlu0 %2313
  %2315 = vrot.lane.b32.xlu0 %v2146, 12
  %v2316 = vpop.permute.xlu0 %2315
  %2317 = vrot.lane.b32.xlu0 %v2147, 12
  %v2318 = vpop.permute.xlu0 %2317
  %2319 = vrot.lane.b32.xlu0 %v2148, 12
  %v2320 = vpop.permute.xlu0 %2319
  %2321 = vrot.lane.b32.xlu0 %v2149, 12
  %v2322 = vpop.permute.xlu0 %2321
  %2323 = vrot.lane.b32.xlu0 %v2150, 12
  %v2324 = vpop.permute.xlu0 %2323
  %2325 = vrot.lane.b32.xlu0 %v2151, 12
  %v2326 = vpop.permute.xlu0 %2325
  %2327 = vrot.lane.b32.xlu0 %v2152, 12
  %v2328 = vpop.permute.xlu0 %2327
  %2329 = vrot.lane.b32.xlu0 %v2153, 12
  %v2330 = vpop.permute.xlu0 %2329
  %2331 = vrot.lane.b32.xlu0 %v2154, 12
  %v2332 = vpop.permute.xlu0 %2331
  %2333 = vrot.lane.b32.xlu0 %v2155, 12
  %v2334 = vpop.permute.xlu0 %2333
  %2335 = vrot.lane.b32.xlu0 %v2156, 12
  %v2336 = vpop.permute.xlu0 %2335
  %2337 = vrot.lane.b32.xlu0 %v2157, 12
  %v2338 = vpop.permute.xlu0 %2337
  %2339 = vrot.lane.b32.xlu0 %v2158, 12
  %v2340 = vpop.permute.xlu0 %2339
  %2341 = vrot.lane.b32.xlu0 %v2159, 12
  %v2342 = vpop.permute.xlu0 %2341
  %2343 = vrot.lane.b32.xlu0 %v2160, 12
  %v2344 = vpop.permute.xlu0 %2343
  %2345 = vrot.lane.b32.xlu0 %v2161, 12
  %v2346 = vpop.permute.xlu0 %2345
  %2347 = vrot.lane.b32.xlu0 %v2162, 12
  %v2348 = vpop.permute.xlu0 %2347
  %2349 = vrot.lane.b32.xlu0 %v2163, 12
  %v2350 = vpop.permute.xlu0 %2349
  %2351 = vrot.lane.b32.xlu0 %v2164, 12
  %v2352 = vpop.permute.xlu0 %2351
  %2353 = vrot.lane.b32.xlu0 %v2165, 12
  %v2354 = vpop.permute.xlu0 %2353
  %2355 = vrot.lane.b32.xlu0 %v2166, 12
  %v2356 = vpop.permute.xlu0 %2355
  %2357 = vrot.lane.b32.xlu0 %v2167, 12
  %v2358 = vpop.permute.xlu0 %2357
  %2359 = vrot.lane.b32.xlu0 %v2168, 12
  %v2360 = vpop.permute.xlu0 %2359
  %vm2425 = vcmask 130144
  %2426 = vst.msk [vmem:[#allocation3] sm:$0xff] %vm2425, %v2234
  %2427 = vst.msk [vmem:[#allocation3 + $0x8] sm:$0xff] %vm2425, %v2236
  %2428 = vst.msk [vmem:[#allocation3 + $0x10] sm:$0xff] %vm2425, %v2238
  %2429 = vst.msk [vmem:[#allocation3 + $0x18] sm:$0xff] %vm2425, %v2240
  %2430 = vst.msk [vmem:[#allocation3 + $0x20] sm:$0xff] %vm2425, %v2242
  %2431 = vst.msk [vmem:[#allocation3 + $0x28] sm:$0xff] %vm2425, %v2244
  %2432 = vst.msk [vmem:[#allocation3 + $0x30] sm:$0xff] %vm2425, %v2246
  %2433 = vst.msk [vmem:[#allocation3 + $0x38] sm:$0xff] %vm2425, %v2248
  %2434 = vst.msk [vmem:[#allocation3 + $0x40] sm:$0xff] %vm2425, %v2250
  %2435 = vst.msk [vmem:[#allocation3 + $0x48] sm:$0xff] %vm2425, %v2252
  %2436 = vst.msk [vmem:[#allocation3 + $0x50] sm:$0xff] %vm2425, %v2254
  %2437 = vst.msk [vmem:[#allocation3 + $0x58] sm:$0xff] %vm2425, %v2256
  %2438 = vst.msk [vmem:[#allocation3 + $0x60] sm:$0xff] %vm2425, %v2258
  %2439 = vst.msk [vmem:[#allocation3 + $0x68] sm:$0xff] %vm2425, %v2260
  %2440 = vst.msk [vmem:[#allocation3 + $0x70] sm:$0xff] %vm2425, %v2262
  %2441 = vst.msk [vmem:[#allocation3 + $0x78] sm:$0xff] %vm2425, %v2264
  %2442 = vst.msk [vmem:[#allocation3 + $0x80] sm:$0xff] %vm2425, %v2266
  %2443 = vst.msk [vmem:[#allocation3 + $0x88] sm:$0xff] %vm2425, %v2268
  %2444 = vst.msk [vmem:[#allocation3 + $0x90] sm:$0xff] %vm2425, %v2270
  %2445 = vst.msk [vmem:[#allocation3 + $0x98] sm:$0xff] %vm2425, %v2272
  %2446 = vst.msk [vmem:[#allocation3 + $0xa0] sm:$0xff] %vm2425, %v2274
  %2447 = vst.msk [vmem:[#allocation3 + $0xa8] sm:$0xff] %vm2425, %v2276
  %2448 = vst.msk [vmem:[#allocation3 + $0xb0] sm:$0xff] %vm2425, %v2278
  %2449 = vst.msk [vmem:[#allocation3 + $0xb8] sm:$0xff] %vm2425, %v2280
  %2450 = vst.msk [vmem:[#allocation3 + $0xc0] sm:$0xff] %vm2425, %v2282
  %2451 = vst.msk [vmem:[#allocation3 + $0xc8] sm:$0xff] %vm2425, %v2284
  %2452 = vst.msk [vmem:[#allocation3 + $0xd0] sm:$0xff] %vm2425, %v2286
  %2453 = vst.msk [vmem:[#allocation3 + $0xd8] sm:$0xff] %vm2425, %v2288
  %2454 = vst.msk [vmem:[#allocation3 + $0xe0] sm:$0xff] %vm2425, %v2290
  %2455 = vst.msk [vmem:[#allocation3 + $0xe8] sm:$0xff] %vm2425, %v2292
  %2456 = vst.msk [vmem:[#allocation3 + $0xf0] sm:$0xff] %vm2425, %v2294
  %2457 = vst.msk [vmem:[#allocation3 + $0xf8] sm:$0xff] %vm2425, %v2296
  %2458 = vst.msk [vmem:[#allocation3 + $0x100] sm:$0xff] %vm2425, %v2298
  %2459 = vst.msk [vmem:[#allocation3 + $0x108] sm:$0xff] %vm2425, %v2300
  %2460 = vst.msk [vmem:[#allocation3 + $0x110] sm:$0xff] %vm2425, %v2302
  %2461 = vst.msk [vmem:[#allocation3 + $0x118] sm:$0xff] %vm2425, %v2304
  %2462 = vst.msk [vmem:[#allocation3 + $0x120] sm:$0xff] %vm2425, %v2306
  %2463 = vst.msk [vmem:[#allocation3 + $0x128] sm:$0xff] %vm2425, %v2308
  %2464 = vst.msk [vmem:[#allocation3 + $0x130] sm:$0xff] %vm2425, %v2310
  %2465 = vst.msk [vmem:[#allocation3 + $0x138] sm:$0xff] %vm2425, %v2312
  %2466 = vst.msk [vmem:[#allocation3 + $0x140] sm:$0xff] %vm2425, %v2314
  %2467 = vst.msk [vmem:[#allocation3 + $0x148] sm:$0xff] %vm2425, %v2316
  %2468 = vst.msk [vmem:[#allocation3 + $0x150] sm:$0xff] %vm2425, %v2318
  %2469 = vst.msk [vmem:[#allocation3 + $0x158] sm:$0xff] %vm2425, %v2320
  %2470 = vst.msk [vmem:[#allocation3 + $0x160] sm:$0xff] %vm2425, %v2322
  %2471 = vst.msk [vmem:[#allocation3 + $0x168] sm:$0xff] %vm2425, %v2324
  %2472 = vst.msk [vmem:[#allocation3 + $0x170] sm:$0xff] %vm2425, %v2326
  %2473 = vst.msk [vmem:[#allocation3 + $0x178] sm:$0xff] %vm2425, %v2328
  %2474 = vst.msk [vmem:[#allocation3 + $0x180] sm:$0xff] %vm2425, %v2330
  %2475 = vst.msk [vmem:[#allocation3 + $0x188] sm:$0xff] %vm2425, %v2332
  %2476 = vst.msk [vmem:[#allocation3 + $0x190] sm:$0xff] %vm2425, %v2334
  %2477 = vst.msk [vmem:[#allocation3 + $0x198] sm:$0xff] %vm2425, %v2336
  %2478 = vst.msk [vmem:[#allocation3 + $0x1a0] sm:$0xff] %vm2425, %v2338
  %2479 = vst.msk [vmem:[#allocation3 + $0x1a8] sm:$0xff] %vm2425, %v2340
  %2480 = vst.msk [vmem:[#allocation3 + $0x1b0] sm:$0xff] %vm2425, %v2342
  %2481 = vst.msk [vmem:[#allocation3 + $0x1b8] sm:$0xff] %vm2425, %v2344
  %2482 = vst.msk [vmem:[#allocation3 + $0x1c0] sm:$0xff] %vm2425, %v2346
  %2483 = vst.msk [vmem:[#allocation3 + $0x1c8] sm:$0xff] %vm2425, %v2348
  %2484 = vst.msk [vmem:[#allocation3 + $0x1d0] sm:$0xff] %vm2425, %v2350
  %2485 = vst.msk [vmem:[#allocation3 + $0x1d8] sm:$0xff] %vm2425, %v2352
  %2486 = vst.msk [vmem:[#allocation3 + $0x1e0] sm:$0xff] %vm2425, %v2354
  %2487 = vst.msk [vmem:[#allocation3 + $0x1e8] sm:$0xff] %vm2425, %v2356
  %2488 = vst.msk [vmem:[#allocation3 + $0x1f0] sm:$0xff] %vm2425, %v2358
  %2489 = vst.msk [vmem:[#allocation3 + $0x1f8] sm:$0xff] %vm2425, %v2360
  %v2490 = vld [vmem:[%s756 + $0x2] sm:$0xff]
  %v2491 = vld [vmem:[%s756 + $0xa] sm:$0xff]
  %v2492 = vld [vmem:[%s756 + $0x1a] sm:$0xff]
  %v2493 = vld [vmem:[%s756 + $0x22] sm:$0xff]
  %v2494 = vld [vmem:[%s756 + $0x32] sm:$0xff]
  %v2495 = vld [vmem:[%s756 + $0x3a] sm:$0xff]
  %v2496 = vld [vmem:[%s756 + $0x4a] sm:$0xff]
  %v2497 = vld [vmem:[%s756 + $0x52] sm:$0xff]
  %v2498 = vld [vmem:[%s756 + $0x62] sm:$0xff]
  %v2499 = vld [vmem:[%s756 + $0x6a] sm:$0xff]
  %v2500 = vld [vmem:[%s756 + $0x7a] sm:$0xff]
  %v2501 = vld [vmem:[%s756 + $0x82] sm:$0xff]
  %v2502 = vld [vmem:[%s756 + $0x92] sm:$0xff]
  %v2503 = vld [vmem:[%s756 + $0x9a] sm:$0xff]
  %v2504 = vld [vmem:[%s756 + $0xaa] sm:$0xff]
  %v2505 = vld [vmem:[%s756 + $0xb2] sm:$0xff]
  %v2506 = vld [vmem:[%s756 + $0xc2] sm:$0xff]
  %v2507 = vld [vmem:[%s756 + $0xca] sm:$0xff]
  %v2508 = vld [vmem:[%s756 + $0xda] sm:$0xff]
  %v2509 = vld [vmem:[%s756 + $0xe2] sm:$0xff]
  %v2510 = vld [vmem:[%s756 + $0xf2] sm:$0xff]
  %v2511 = vld [vmem:[%s756 + $0xfa] sm:$0xff]
  %v2512 = vld [vmem:[%s756 + $0x10a] sm:$0xff]
  %v2513 = vld [vmem:[%s756 + $0x112] sm:$0xff]
  %v2514 = vld [vmem:[%s756 + $0x122] sm:$0xff]
  %v2515 = vld [vmem:[%s756 + $0x12a] sm:$0xff]
  %v2516 = vld [vmem:[%s756 + $0x13a] sm:$0xff]
  %v2517 = vld [vmem:[%s756 + $0x142] sm:$0xff]
  %v2518 = vld [vmem:[%s756 + $0x152] sm:$0xff]
  %v2519 = vld [vmem:[%s756 + $0x15a] sm:$0xff]
  %v2520 = vld [vmem:[%s756 + $0x16a] sm:$0xff]
  %v2521 = vld [vmem:[%s756 + $0x172] sm:$0xff]
  %v2522 = vld [vmem:[%s756 + $0x1b2] sm:$0xff]
  %v2523 = vld [vmem:[%s756 + $0x1ba] sm:$0xff]
  %v2524 = vld [vmem:[%s756 + $0x1ca] sm:$0xff]
  %v2525 = vld [vmem:[%s756 + $0x1d2] sm:$0xff]
  %v2526 = vld [vmem:[%s756 + $0x1e2] sm:$0xff]
  %v2527 = vld [vmem:[%s756 + $0x1ea] sm:$0xff]
  %v2528 = vld [vmem:[%s756 + $0x1fa] sm:$0xff]
  %v2529 = vld [vmem:[%s756 + $0x202] sm:$0xff]
  %v2530 = vld [vmem:[%s756 + $0x212] sm:$0xff]
  %v2531 = vld [vmem:[%s756 + $0x21a] sm:$0xff]
  %v2532 = vld [vmem:[%s756 + $0x22a] sm:$0xff]
  %v2533 = vld [vmem:[%s756 + $0x232] sm:$0xff]
  %v2534 = vld [vmem:[%s756 + $0x242] sm:$0xff]
  %v2535 = vld [vmem:[%s756 + $0x24a] sm:$0xff]
  %v2536 = vld [vmem:[%s756 + $0x25a] sm:$0xff]
  %v2537 = vld [vmem:[%s756 + $0x262] sm:$0xff]
  %v2538 = vld [vmem:[%s756 + $0x272] sm:$0xff]
  %v2539 = vld [vmem:[%s756 + $0x27a] sm:$0xff]
  %v2540 = vld [vmem:[%s756 + $0x28a] sm:$0xff]
  %v2541 = vld [vmem:[%s756 + $0x292] sm:$0xff]
  %v2542 = vld [vmem:[%s756 + $0x2a2] sm:$0xff]
  %v2543 = vld [vmem:[%s756 + $0x2aa] sm:$0xff]
  %v2544 = vld [vmem:[%s756 + $0x2ba] sm:$0xff]
  %v2545 = vld [vmem:[%s756 + $0x2c2] sm:$0xff]
  %v2546 = vld [vmem:[%s756 + $0x2d2] sm:$0xff]
  %v2547 = vld [vmem:[%s756 + $0x2da] sm:$0xff]
  %v2548 = vld [vmem:[%s756 + $0x2ea] sm:$0xff]
  %v2549 = vld [vmem:[%s756 + $0x2f2] sm:$0xff]
  %v2550 = vld [vmem:[%s756 + $0x302] sm:$0xff]
  %v2551 = vld [vmem:[%s756 + $0x30a] sm:$0xff]
  %v2552 = vld [vmem:[%s756 + $0x31a] sm:$0xff]
  %v2553 = vld [vmem:[%s756 + $0x322] sm:$0xff]
  %2618 = vrot.lane.b32.xlu0 %v2490, 20
  %v2619 = vpop.permute.xlu0 %2618
  %2620 = vrot.lane.b32.xlu0 %v2491, 20
  %v2621 = vpop.permute.xlu0 %2620
  %2622 = vrot.lane.b32.xlu0 %v2492, 20
  %v2623 = vpop.permute.xlu0 %2622
  %2624 = vrot.lane.b32.xlu0 %v2493, 20
  %v2625 = vpop.permute.xlu0 %2624
  %2626 = vrot.lane.b32.xlu0 %v2494, 20
  %v2627 = vpop.permute.xlu0 %2626
  %2628 = vrot.lane.b32.xlu0 %v2495, 20
  %v2629 = vpop.permute.xlu0 %2628
  %2630 = vrot.lane.b32.xlu0 %v2496, 20
  %v2631 = vpop.permute.xlu0 %2630
  %2632 = vrot.lane.b32.xlu0 %v2497, 20
  %v2633 = vpop.permute.xlu0 %2632
  %2634 = vrot.lane.b32.xlu0 %v2498, 20
  %v2635 = vpop.permute.xlu0 %2634
  %2636 = vrot.lane.b32.xlu0 %v2499, 20
  %v2637 = vpop.permute.xlu0 %2636
  %2638 = vrot.lane.b32.xlu0 %v2500, 20
  %v2639 = vpop.permute.xlu0 %2638
  %2640 = vrot.lane.b32.xlu0 %v2501, 20
  %v2641 = vpop.permute.xlu0 %2640
  %2642 = vrot.lane.b32.xlu0 %v2502, 20
  %v2643 = vpop.permute.xlu0 %2642
  %2644 = vrot.lane.b32.xlu0 %v2503, 20
  %v2645 = vpop.permute.xlu0 %2644
  %2646 = vrot.lane.b32.xlu0 %v2504, 20
  %v2647 = vpop.permute.xlu0 %2646
  %2648 = vrot.lane.b32.xlu0 %v2505, 20
  %v2649 = vpop.permute.xlu0 %2648
  %2650 = vrot.lane.b32.xlu0 %v2506, 20
  %v2651 = vpop.permute.xlu0 %2650
  %2652 = vrot.lane.b32.xlu0 %v2507, 20
  %v2653 = vpop.permute.xlu0 %2652
  %2654 = vrot.lane.b32.xlu0 %v2508, 20
  %v2655 = vpop.permute.xlu0 %2654
  %2656 = vrot.lane.b32.xlu0 %v2509, 20
  %v2657 = vpop.permute.xlu0 %2656
  %2658 = vrot.lane.b32.xlu0 %v2510, 20
  %v2659 = vpop.permute.xlu0 %2658
  %2660 = vrot.lane.b32.xlu0 %v2511, 20
  %v2661 = vpop.permute.xlu0 %2660
  %2662 = vrot.lane.b32.xlu0 %v2512, 20
  %v2663 = vpop.permute.xlu0 %2662
  %2664 = vrot.lane.b32.xlu0 %v2513, 20
  %v2665 = vpop.permute.xlu0 %2664
  %2666 = vrot.lane.b32.xlu0 %v2514, 20
  %v2667 = vpop.permute.xlu0 %2666
  %2668 = vrot.lane.b32.xlu0 %v2515, 20
  %v2669 = vpop.permute.xlu0 %2668
  %2670 = vrot.lane.b32.xlu0 %v2516, 20
  %v2671 = vpop.permute.xlu0 %2670
  %2672 = vrot.lane.b32.xlu0 %v2517, 20
  %v2673 = vpop.permute.xlu0 %2672
  %2674 = vrot.lane.b32.xlu0 %v2518, 20
  %v2675 = vpop.permute.xlu0 %2674
  %2676 = vrot.lane.b32.xlu0 %v2519, 20
  %v2677 = vpop.permute.xlu0 %2676
  %2678 = vrot.lane.b32.xlu0 %v2520, 20
  %v2679 = vpop.permute.xlu0 %2678
  %2680 = vrot.lane.b32.xlu0 %v2521, 20
  %v2681 = vpop.permute.xlu0 %2680
  %2682 = vrot.lane.b32.xlu0 %v2522, 20
  %v2683 = vpop.permute.xlu0 %2682
  %2684 = vrot.lane.b32.xlu0 %v2523, 20
  %v2685 = vpop.permute.xlu0 %2684
  %2686 = vrot.lane.b32.xlu0 %v2524, 20
  %v2687 = vpop.permute.xlu0 %2686
  %2688 = vrot.lane.b32.xlu0 %v2525, 20
  %v2689 = vpop.permute.xlu0 %2688
  %2690 = vrot.lane.b32.xlu0 %v2526, 20
  %v2691 = vpop.permute.xlu0 %2690
  %2692 = vrot.lane.b32.xlu0 %v2527, 20
  %v2693 = vpop.permute.xlu0 %2692
  %2694 = vrot.lane.b32.xlu0 %v2528, 20
  %v2695 = vpop.permute.xlu0 %2694
  %2696 = vrot.lane.b32.xlu0 %v2529, 20
  %v2697 = vpop.permute.xlu0 %2696
  %2698 = vrot.lane.b32.xlu0 %v2530, 20
  %v2699 = vpop.permute.xlu0 %2698
  %2700 = vrot.lane.b32.xlu0 %v2531, 20
  %v2701 = vpop.permute.xlu0 %2700
  %2702 = vrot.lane.b32.xlu0 %v2532, 20
  %v2703 = vpop.permute.xlu0 %2702
  %2704 = vrot.lane.b32.xlu0 %v2533, 20
  %v2705 = vpop.permute.xlu0 %2704
  %2706 = vrot.lane.b32.xlu0 %v2534, 20
  %v2707 = vpop.permute.xlu0 %2706
  %2708 = vrot.lane.b32.xlu0 %v2535, 20
  %v2709 = vpop.permute.xlu0 %2708
  %2710 = vrot.lane.b32.xlu0 %v2536, 20
  %v2711 = vpop.permute.xlu0 %2710
  %2712 = vrot.lane.b32.xlu0 %v2537, 20
  %v2713 = vpop.permute.xlu0 %2712
  %2714 = vrot.lane.b32.xlu0 %v2538, 20
  %v2715 = vpop.permute.xlu0 %2714
  %2716 = vrot.lane.b32.xlu0 %v2539, 20
  %v2717 = vpop.permute.xlu0 %2716
  %2718 = vrot.lane.b32.xlu0 %v2540, 20
  %v2719 = vpop.permute.xlu0 %2718
  %2720 = vrot.lane.b32.xlu0 %v2541, 20
  %v2721 = vpop.permute.xlu0 %2720
  %2722 = vrot.lane.b32.xlu0 %v2542, 20
  %v2723 = vpop.permute.xlu0 %2722
  %2724 = vrot.lane.b32.xlu0 %v2543, 20
  %v2725 = vpop.permute.xlu0 %2724
  %2726 = vrot.lane.b32.xlu0 %v2544, 20
  %v2727 = vpop.permute.xlu0 %2726
  %2728 = vrot.lane.b32.xlu0 %v2545, 20
  %v2729 = vpop.permute.xlu0 %2728
  %2730 = vrot.lane.b32.xlu0 %v2546, 20
  %v2731 = vpop.permute.xlu0 %2730
  %2732 = vrot.lane.b32.xlu0 %v2547, 20
  %v2733 = vpop.permute.xlu0 %2732
  %2734 = vrot.lane.b32.xlu0 %v2548, 20
  %v2735 = vpop.permute.xlu0 %2734
  %2736 = vrot.lane.b32.xlu0 %v2549, 20
  %v2737 = vpop.permute.xlu0 %2736
  %2738 = vrot.lane.b32.xlu0 %v2550, 20
  %v2739 = vpop.permute.xlu0 %2738
  %2740 = vrot.lane.b32.xlu0 %v2551, 20
  %v2741 = vpop.permute.xlu0 %2740
  %2742 = vrot.lane.b32.xlu0 %v2552, 20
  %v2743 = vpop.permute.xlu0 %2742
  %2744 = vrot.lane.b32.xlu0 %v2553, 20
  %v2745 = vpop.permute.xlu0 %2744
  %vm2810 = vcmask 195744
  %2811 = vst.msk [vmem:[#allocation3] sm:$0xff] %vm2810, %v2619
  %2812 = vst.msk [vmem:[#allocation3 + $0x8] sm:$0xff] %vm2810, %v2621
  %2813 = vst.msk [vmem:[#allocation3 + $0x10] sm:$0xff] %vm2810, %v2623
  %2814 = vst.msk [vmem:[#allocation3 + $0x18] sm:$0xff] %vm2810, %v2625
  %2815 = vst.msk [vmem:[#allocation3 + $0x20] sm:$0xff] %vm2810, %v2627
  %2816 = vst.msk [vmem:[#allocation3 + $0x28] sm:$0xff] %vm2810, %v2629
  %2817 = vst.msk [vmem:[#allocation3 + $0x30] sm:$0xff] %vm2810, %v2631
  %2818 = vst.msk [vmem:[#allocation3 + $0x38] sm:$0xff] %vm2810, %v2633
  %2819 = vst.msk [vmem:[#allocation3 + $0x40] sm:$0xff] %vm2810, %v2635
  %2820 = vst.msk [vmem:[#allocation3 + $0x48] sm:$0xff] %vm2810, %v2637
  %2821 = vst.msk [vmem:[#allocation3 + $0x50] sm:$0xff] %vm2810, %v2639
  %2822 = vst.msk [vmem:[#allocation3 + $0x58] sm:$0xff] %vm2810, %v2641
  %2823 = vst.msk [vmem:[#allocation3 + $0x60] sm:$0xff] %vm2810, %v2643
  %2824 = vst.msk [vmem:[#allocation3 + $0x68] sm:$0xff] %vm2810, %v2645
  %2825 = vst.msk [vmem:[#allocation3 + $0x70] sm:$0xff] %vm2810, %v2647
  %2826 = vst.msk [vmem:[#allocation3 + $0x78] sm:$0xff] %vm2810, %v2649
  %2827 = vst.msk [vmem:[#allocation3 + $0x80] sm:$0xff] %vm2810, %v2651
  %2828 = vst.msk [vmem:[#allocation3 + $0x88] sm:$0xff] %vm2810, %v2653
  %2829 = vst.msk [vmem:[#allocation3 + $0x90] sm:$0xff] %vm2810, %v2655
  %2830 = vst.msk [vmem:[#allocation3 + $0x98] sm:$0xff] %vm2810, %v2657
  %2831 = vst.msk [vmem:[#allocation3 + $0xa0] sm:$0xff] %vm2810, %v2659
  %2832 = vst.msk [vmem:[#allocation3 + $0xa8] sm:$0xff] %vm2810, %v2661
  %2833 = vst.msk [vmem:[#allocation3 + $0xb0] sm:$0xff] %vm2810, %v2663
  %2834 = vst.msk [vmem:[#allocation3 + $0xb8] sm:$0xff] %vm2810, %v2665
  %2835 = vst.msk [vmem:[#allocation3 + $0xc0] sm:$0xff] %vm2810, %v2667
  %2836 = vst.msk [vmem:[#allocation3 + $0xc8] sm:$0xff] %vm2810, %v2669
  %2837 = vst.msk [vmem:[#allocation3 + $0xd0] sm:$0xff] %vm2810, %v2671
  %2838 = vst.msk [vmem:[#allocation3 + $0xd8] sm:$0xff] %vm2810, %v2673
  %2839 = vst.msk [vmem:[#allocation3 + $0xe0] sm:$0xff] %vm2810, %v2675
  %2840 = vst.msk [vmem:[#allocation3 + $0xe8] sm:$0xff] %vm2810, %v2677
  %2841 = vst.msk [vmem:[#allocation3 + $0xf0] sm:$0xff] %vm2810, %v2679
  %2842 = vst.msk [vmem:[#allocation3 + $0xf8] sm:$0xff] %vm2810, %v2681
  %2843 = vst.msk [vmem:[#allocation3 + $0x100] sm:$0xff] %vm2810, %v2683
  %2844 = vst.msk [vmem:[#allocation3 + $0x108] sm:$0xff] %vm2810, %v2685
  %2845 = vst.msk [vmem:[#allocation3 + $0x110] sm:$0xff] %vm2810, %v2687
  %2846 = vst.msk [vmem:[#allocation3 + $0x118] sm:$0xff] %vm2810, %v2689
  %2847 = vst.msk [vmem:[#allocation3 + $0x120] sm:$0xff] %vm2810, %v2691
  %2848 = vst.msk [vmem:[#allocation3 + $0x128] sm:$0xff] %vm2810, %v2693
  %2849 = vst.msk [vmem:[#allocation3 + $0x130] sm:$0xff] %vm2810, %v2695
  %2850 = vst.msk [vmem:[#allocation3 + $0x138] sm:$0xff] %vm2810, %v2697
  %2851 = vst.msk [vmem:[#allocation3 + $0x140] sm:$0xff] %vm2810, %v2699
  %2852 = vst.msk [vmem:[#allocation3 + $0x148] sm:$0xff] %vm2810, %v2701
  %2853 = vst.msk [vmem:[#allocation3 + $0x150] sm:$0xff] %vm2810, %v2703
  %2854 = vst.msk [vmem:[#allocation3 + $0x158] sm:$0xff] %vm2810, %v2705
  %2855 = vst.msk [vmem:[#allocation3 + $0x160] sm:$0xff] %vm2810, %v2707
  %2856 = vst.msk [vmem:[#allocation3 + $0x168] sm:$0xff] %vm2810, %v2709
  %2857 = vst.msk [vmem:[#allocation3 + $0x170] sm:$0xff] %vm2810, %v2711
  %2858 = vst.msk [vmem:[#allocation3 + $0x178] sm:$0xff] %vm2810, %v2713
  %2859 = vst.msk [vmem:[#allocation3 + $0x180] sm:$0xff] %vm2810, %v2715
  %2860 = vst.msk [vmem:[#allocation3 + $0x188] sm:$0xff] %vm2810, %v2717
  %2861 = vst.msk [vmem:[#allocation3 + $0x190] sm:$0xff] %vm2810, %v2719
  %2862 = vst.msk [vmem:[#allocation3 + $0x198] sm:$0xff] %vm2810, %v2721
  %2863 = vst.msk [vmem:[#allocation3 + $0x1a0] sm:$0xff] %vm2810, %v2723
  %2864 = vst.msk [vmem:[#allocation3 + $0x1a8] sm:$0xff] %vm2810, %v2725
  %2865 = vst.msk [vmem:[#allocation3 + $0x1b0] sm:$0xff] %vm2810, %v2727
  %2866 = vst.msk [vmem:[#allocation3 + $0x1b8] sm:$0xff] %vm2810, %v2729
  %2867 = vst.msk [vmem:[#allocation3 + $0x1c0] sm:$0xff] %vm2810, %v2731
  %2868 = vst.msk [vmem:[#allocation3 + $0x1c8] sm:$0xff] %vm2810, %v2733
  %2869 = vst.msk [vmem:[#allocation3 + $0x1d0] sm:$0xff] %vm2810, %v2735
  %2870 = vst.msk [vmem:[#allocation3 + $0x1d8] sm:$0xff] %vm2810, %v2737
  %2871 = vst.msk [vmem:[#allocation3 + $0x1e0] sm:$0xff] %vm2810, %v2739
  %2872 = vst.msk [vmem:[#allocation3 + $0x1e8] sm:$0xff] %vm2810, %v2741
  %2873 = vst.msk [vmem:[#allocation3 + $0x1f0] sm:$0xff] %vm2810, %v2743
  %2874 = vst.msk [vmem:[#allocation3 + $0x1f8] sm:$0xff] %vm2810, %v2745
  %s2875 = scalar_lea.vmem [#allocation2], 48
  %v2876 = vld [vmem:[%s2875] sm:$0xff]
  %v2877 = vld [vmem:[%s2875 + $0x8] sm:$0xff]
  %v2878 = vld [vmem:[%s2875 + $0x18] sm:$0xff]
  %v2879 = vld [vmem:[%s2875 + $0x20] sm:$0xff]
  %v2880 = vld [vmem:[%s2875 + $0x30] sm:$0xff]
  %v2881 = vld [vmem:[%s2875 + $0x38] sm:$0xff]
  %v2882 = vld [vmem:[%s2875 + $0x48] sm:$0xff]
  %v2883 = vld [vmem:[%s2875 + $0x50] sm:$0xff]
  %v2884 = vld [vmem:[%s2875 + $0x60] sm:$0xff]
  %v2885 = vld [vmem:[%s2875 + $0x68] sm:$0xff]
  %v2886 = vld [vmem:[%s2875 + $0x78] sm:$0xff]
  %v2887 = vld [vmem:[%s2875 + $0x80] sm:$0xff]
  %v2888 = vld [vmem:[%s2875 + $0x90] sm:$0xff]
  %v2889 = vld [vmem:[%s2875 + $0x98] sm:$0xff]
  %v2890 = vld [vmem:[%s2875 + $0xa8] sm:$0xff]
  %v2891 = vld [vmem:[%s2875 + $0xb0] sm:$0xff]
  %v2892 = vld [vmem:[%s2875 + $0xc0] sm:$0xff]
  %v2893 = vld [vmem:[%s2875 + $0xc8] sm:$0xff]
  %v2894 = vld [vmem:[%s2875 + $0xd8] sm:$0xff]
  %v2895 = vld [vmem:[%s2875 + $0xe0] sm:$0xff]
  %v2896 = vld [vmem:[%s2875 + $0xf0] sm:$0xff]
  %v2897 = vld [vmem:[%s2875 + $0xf8] sm:$0xff]
  %v2898 = vld [vmem:[%s2875 + $0x108] sm:$0xff]
  %v2899 = vld [vmem:[%s2875 + $0x110] sm:$0xff]
  %v2900 = vld [vmem:[%s2875 + $0x120] sm:$0xff]
  %v2901 = vld [vmem:[%s2875 + $0x128] sm:$0xff]
  %v2902 = vld [vmem:[%s2875 + $0x138] sm:$0xff]
  %v2903 = vld [vmem:[%s2875 + $0x140] sm:$0xff]
  %v2904 = vld [vmem:[%s2875 + $0x150] sm:$0xff]
  %v2905 = vld [vmem:[%s2875 + $0x158] sm:$0xff]
  %v2906 = vld [vmem:[%s2875 + $0x168] sm:$0xff]
  %v2907 = vld [vmem:[%s2875 + $0x170] sm:$0xff]
  %v2908 = vld [vmem:[%s2875 + $0x1b0] sm:$0xff]
  %v2909 = vld [vmem:[%s2875 + $0x1b8] sm:$0xff]
  %v2910 = vld [vmem:[%s2875 + $0x1c8] sm:$0xff]
  %v2911 = vld [vmem:[%s2875 + $0x1d0] sm:$0xff]
  %v2912 = vld [vmem:[%s2875 + $0x1e0] sm:$0xff]
  %v2913 = vld [vmem:[%s2875 + $0x1e8] sm:$0xff]
  %v2914 = vld [vmem:[%s2875 + $0x1f8] sm:$0xff]
  %v2915 = vld [vmem:[%s2875 + $0x200] sm:$0xff]
  %v2916 = vld [vmem:[%s2875 + $0x210] sm:$0xff]
  %v2917 = vld [vmem:[%s2875 + $0x218] sm:$0xff]
  %v2918 = vld [vmem:[%s2875 + $0x228] sm:$0xff]
  %v2919 = vld [vmem:[%s2875 + $0x230] sm:$0xff]
  %v2920 = vld [vmem:[%s2875 + $0x240] sm:$0xff]
  %v2921 = vld [vmem:[%s2875 + $0x248] sm:$0xff]
  %v2922 = vld [vmem:[%s2875 + $0x258] sm:$0xff]
  %v2923 = vld [vmem:[%s2875 + $0x260] sm:$0xff]
  %v2924 = vld [vmem:[%s2875 + $0x270] sm:$0xff]
  %v2925 = vld [vmem:[%s2875 + $0x278] sm:$0xff]
  %v2926 = vld [vmem:[%s2875 + $0x288] sm:$0xff]
  %v2927 = vld [vmem:[%s2875 + $0x290] sm:$0xff]
  %v2928 = vld [vmem:[%s2875 + $0x2a0] sm:$0xff]
  %v2929 = vld [vmem:[%s2875 + $0x2a8] sm:$0xff]
  %v2930 = vld [vmem:[%s2875 + $0x2b8] sm:$0xff]
  %v2931 = vld [vmem:[%s2875 + $0x2c0] sm:$0xff]
  %v2932 = vld [vmem:[%s2875 + $0x2d0] sm:$0xff]
  %v2933 = vld [vmem:[%s2875 + $0x2d8] sm:$0xff]
  %v2934 = vld [vmem:[%s2875 + $0x2e8] sm:$0xff]
  %v2935 = vld [vmem:[%s2875 + $0x2f0] sm:$0xff]
  %v2936 = vld [vmem:[%s2875 + $0x300] sm:$0xff]
  %v2937 = vld [vmem:[%s2875 + $0x308] sm:$0xff]
  %v2938 = vld [vmem:[%s2875 + $0x318] sm:$0xff]
  %v2939 = vld [vmem:[%s2875 + $0x320] sm:$0xff]
  %3004 = vrot.lane.b32.xlu0 %v2876, 24
  %v3005 = vpop.permute.xlu0 %3004
  %3006 = vrot.lane.b32.xlu0 %v2877, 24
  %v3007 = vpop.permute.xlu0 %3006
  %3008 = vrot.lane.b32.xlu0 %v2878, 24
  %v3009 = vpop.permute.xlu0 %3008
  %3010 = vrot.lane.b32.xlu0 %v2879, 24
  %v3011 = vpop.permute.xlu0 %3010
  %3012 = vrot.lane.b32.xlu0 %v2880, 24
  %v3013 = vpop.permute.xlu0 %3012
  %3014 = vrot.lane.b32.xlu0 %v2881, 24
  %v3015 = vpop.permute.xlu0 %3014
  %3016 = vrot.lane.b32.xlu0 %v2882, 24
  %v3017 = vpop.permute.xlu0 %3016
  %3018 = vrot.lane.b32.xlu0 %v2883, 24
  %v3019 = vpop.permute.xlu0 %3018
  %3020 = vrot.lane.b32.xlu0 %v2884, 24
  %v3021 = vpop.permute.xlu0 %3020
  %3022 = vrot.lane.b32.xlu0 %v2885, 24
  %v3023 = vpop.permute.xlu0 %3022
  %3024 = vrot.lane.b32.xlu0 %v2886, 24
  %v3025 = vpop.permute.xlu0 %3024
  %3026 = vrot.lane.b32.xlu0 %v2887, 24
  %v3027 = vpop.permute.xlu0 %3026
  %3028 = vrot.lane.b32.xlu0 %v2888, 24
  %v3029 = vpop.permute.xlu0 %3028
  %3030 = vrot.lane.b32.xlu0 %v2889, 24
  %v3031 = vpop.permute.xlu0 %3030
  %3032 = vrot.lane.b32.xlu0 %v2890, 24
  %v3033 = vpop.permute.xlu0 %3032
  %3034 = vrot.lane.b32.xlu0 %v2891, 24
  %v3035 = vpop.permute.xlu0 %3034
  %3036 = vrot.lane.b32.xlu0 %v2892, 24
  %v3037 = vpop.permute.xlu0 %3036
  %3038 = vrot.lane.b32.xlu0 %v2893, 24
  %v3039 = vpop.permute.xlu0 %3038
  %3040 = vrot.lane.b32.xlu0 %v2894, 24
  %v3041 = vpop.permute.xlu0 %3040
  %3042 = vrot.lane.b32.xlu0 %v2895, 24
  %v3043 = vpop.permute.xlu0 %3042
  %3044 = vrot.lane.b32.xlu0 %v2896, 24
  %v3045 = vpop.permute.xlu0 %3044
  %3046 = vrot.lane.b32.xlu0 %v2897, 24
  %v3047 = vpop.permute.xlu0 %3046
  %3048 = vrot.lane.b32.xlu0 %v2898, 24
  %v3049 = vpop.permute.xlu0 %3048
  %3050 = vrot.lane.b32.xlu0 %v2899, 24
  %v3051 = vpop.permute.xlu0 %3050
  %3052 = vrot.lane.b32.xlu0 %v2900, 24
  %v3053 = vpop.permute.xlu0 %3052
  %3054 = vrot.lane.b32.xlu0 %v2901, 24
  %v3055 = vpop.permute.xlu0 %3054
  %3056 = vrot.lane.b32.xlu0 %v2902, 24
  %v3057 = vpop.permute.xlu0 %3056
  %3058 = vrot.lane.b32.xlu0 %v2903, 24
  %v3059 = vpop.permute.xlu0 %3058
  %3060 = vrot.lane.b32.xlu0 %v2904, 24
  %v3061 = vpop.permute.xlu0 %3060
  %3062 = vrot.lane.b32.xlu0 %v2905, 24
  %v3063 = vpop.permute.xlu0 %3062
  %3064 = vrot.lane.b32.xlu0 %v2906, 24
  %v3065 = vpop.permute.xlu0 %3064
  %3066 = vrot.lane.b32.xlu0 %v2907, 24
  %v3067 = vpop.permute.xlu0 %3066
  %3068 = vrot.lane.b32.xlu0 %v2908, 24
  %v3069 = vpop.permute.xlu0 %3068
  %3070 = vrot.lane.b32.xlu0 %v2909, 24
  %v3071 = vpop.permute.xlu0 %3070
  %3072 = vrot.lane.b32.xlu0 %v2910, 24
  %v3073 = vpop.permute.xlu0 %3072
  %3074 = vrot.lane.b32.xlu0 %v2911, 24
  %v3075 = vpop.permute.xlu0 %3074
  %3076 = vrot.lane.b32.xlu0 %v2912, 24
  %v3077 = vpop.permute.xlu0 %3076
  %3078 = vrot.lane.b32.xlu0 %v2913, 24
  %v3079 = vpop.permute.xlu0 %3078
  %3080 = vrot.lane.b32.xlu0 %v2914, 24
  %v3081 = vpop.permute.xlu0 %3080
  %3082 = vrot.lane.b32.xlu0 %v2915, 24
  %v3083 = vpop.permute.xlu0 %3082
  %3084 = vrot.lane.b32.xlu0 %v2916, 24
  %v3085 = vpop.permute.xlu0 %3084
  %3086 = vrot.lane.b32.xlu0 %v2917, 24
  %v3087 = vpop.permute.xlu0 %3086
  %3088 = vrot.lane.b32.xlu0 %v2918, 24
  %v3089 = vpop.permute.xlu0 %3088
  %3090 = vrot.lane.b32.xlu0 %v2919, 24
  %v3091 = vpop.permute.xlu0 %3090
  %3092 = vrot.lane.b32.xlu0 %v2920, 24
  %v3093 = vpop.permute.xlu0 %3092
  %3094 = vrot.lane.b32.xlu0 %v2921, 24
  %v3095 = vpop.permute.xlu0 %3094
  %3096 = vrot.lane.b32.xlu0 %v2922, 24
  %v3097 = vpop.permute.xlu0 %3096
  %3098 = vrot.lane.b32.xlu0 %v2923, 24
  %v3099 = vpop.permute.xlu0 %3098
  %3100 = vrot.lane.b32.xlu0 %v2924, 24
  %v3101 = vpop.permute.xlu0 %3100
  %3102 = vrot.lane.b32.xlu0 %v2925, 24
  %v3103 = vpop.permute.xlu0 %3102
  %3104 = vrot.lane.b32.xlu0 %v2926, 24
  %v3105 = vpop.permute.xlu0 %3104
  %3106 = vrot.lane.b32.xlu0 %v2927, 24
  %v3107 = vpop.permute.xlu0 %3106
  %3108 = vrot.lane.b32.xlu0 %v2928, 24
  %v3109 = vpop.permute.xlu0 %3108
  %3110 = vrot.lane.b32.xlu0 %v2929, 24
  %v3111 = vpop.permute.xlu0 %3110
  %3112 = vrot.lane.b32.xlu0 %v2930, 24
  %v3113 = vpop.permute.xlu0 %3112
  %3114 = vrot.lane.b32.xlu0 %v2931, 24
  %v3115 = vpop.permute.xlu0 %3114
  %3116 = vrot.lane.b32.xlu0 %v2932, 24
  %v3117 = vpop.permute.xlu0 %3116
  %3118 = vrot.lane.b32.xlu0 %v2933, 24
  %v3119 = vpop.permute.xlu0 %3118
  %3120 = vrot.lane.b32.xlu0 %v2934, 24
  %v3121 = vpop.permute.xlu0 %3120
  %3122 = vrot.lane.b32.xlu0 %v2935, 24
  %v3123 = vpop.permute.xlu0 %3122
  %3124 = vrot.lane.b32.xlu0 %v2936, 24
  %v3125 = vpop.permute.xlu0 %3124
  %3126 = vrot.lane.b32.xlu0 %v2937, 24
  %v3127 = vpop.permute.xlu0 %3126
  %3128 = vrot.lane.b32.xlu0 %v2938, 24
  %v3129 = vpop.permute.xlu0 %3128
  %3130 = vrot.lane.b32.xlu0 %v2939, 24
  %v3131 = vpop.permute.xlu0 %3130
  %vm3196 = vcmask 228544
  %3197 = vst.msk [vmem:[#allocation3] sm:$0xff] %vm3196, %v3005
  %3198 = vst.msk [vmem:[#allocation3 + $0x8] sm:$0xff] %vm3196, %v3007
  %3199 = vst.msk [vmem:[#allocation3 + $0x10] sm:$0xff] %vm3196, %v3009
  %3200 = vst.msk [vmem:[#allocation3 + $0x18] sm:$0xff] %vm3196, %v3011
  %3201 = vst.msk [vmem:[#allocation3 + $0x20] sm:$0xff] %vm3196, %v3013
  %3202 = vst.msk [vmem:[#allocation3 + $0x28] sm:$0xff] %vm3196, %v3015
  %3203 = vst.msk [vmem:[#allocation3 + $0x30] sm:$0xff] %vm3196, %v3017
  %3204 = vst.msk [vmem:[#allocation3 + $0x38] sm:$0xff] %vm3196, %v3019
  %3205 = vst.msk [vmem:[#allocation3 + $0x40] sm:$0xff] %vm3196, %v3021
  %3206 = vst.msk [vmem:[#allocation3 + $0x48] sm:$0xff] %vm3196, %v3023
  %3207 = vst.msk [vmem:[#allocation3 + $0x50] sm:$0xff] %vm3196, %v3025
  %3208 = vst.msk [vmem:[#allocation3 + $0x58] sm:$0xff] %vm3196, %v3027
  %3209 = vst.msk [vmem:[#allocation3 + $0x60] sm:$0xff] %vm3196, %v3029
  %3210 = vst.msk [vmem:[#allocation3 + $0x68] sm:$0xff] %vm3196, %v3031
  %3211 = vst.msk [vmem:[#allocation3 + $0x70] sm:$0xff] %vm3196, %v3033
  %3212 = vst.msk [vmem:[#allocation3 + $0x78] sm:$0xff] %vm3196, %v3035
  %3213 = vst.msk [vmem:[#allocation3 + $0x80] sm:$0xff] %vm3196, %v3037
  %3214 = vst.msk [vmem:[#allocation3 + $0x88] sm:$0xff] %vm3196, %v3039
  %3215 = vst.msk [vmem:[#allocation3 + $0x90] sm:$0xff] %vm3196, %v3041
  %3216 = vst.msk [vmem:[#allocation3 + $0x98] sm:$0xff] %vm3196, %v3043
  %3217 = vst.msk [vmem:[#allocation3 + $0xa0] sm:$0xff] %vm3196, %v3045
  %3218 = vst.msk [vmem:[#allocation3 + $0xa8] sm:$0xff] %vm3196, %v3047
  %3219 = vst.msk [vmem:[#allocation3 + $0xb0] sm:$0xff] %vm3196, %v3049
  %3220 = vst.msk [vmem:[#allocation3 + $0xb8] sm:$0xff] %vm3196, %v3051
  %3221 = vst.msk [vmem:[#allocation3 + $0xc0] sm:$0xff] %vm3196, %v3053
  %3222 = vst.msk [vmem:[#allocation3 + $0xc8] sm:$0xff] %vm3196, %v3055
  %3223 = vst.msk [vmem:[#allocation3 + $0xd0] sm:$0xff] %vm3196, %v3057
  %3224 = vst.msk [vmem:[#allocation3 + $0xd8] sm:$0xff] %vm3196, %v3059
  %3225 = vst.msk [vmem:[#allocation3 + $0xe0] sm:$0xff] %vm3196, %v3061
  %3226 = vst.msk [vmem:[#allocation3 + $0xe8] sm:$0xff] %vm3196, %v3063
  %3227 = vst.msk [vmem:[#allocation3 + $0xf0] sm:$0xff] %vm3196, %v3065
  %3228 = vst.msk [vmem:[#allocation3 + $0xf8] sm:$0xff] %vm3196, %v3067
  %3229 = vst.msk [vmem:[#allocation3 + $0x100] sm:$0xff] %vm3196, %v3069
  %3230 = vst.msk [vmem:[#allocation3 + $0x108] sm:$0xff] %vm3196, %v3071
  %3231 = vst.msk [vmem:[#allocation3 + $0x110] sm:$0xff] %vm3196, %v3073
  %3232 = vst.msk [vmem:[#allocation3 + $0x118] sm:$0xff] %vm3196, %v3075
  %3233 = vst.msk [vmem:[#allocation3 + $0x120] sm:$0xff] %vm3196, %v3077
  %3234 = vst.msk [vmem:[#allocation3 + $0x128] sm:$0xff] %vm3196, %v3079
  %3235 = vst.msk [vmem:[#allocation3 + $0x130] sm:$0xff] %vm3196, %v3081
  %3236 = vst.msk [vmem:[#allocation3 + $0x138] sm:$0xff] %vm3196, %v3083
  %3237 = vst.msk [vmem:[#allocation3 + $0x140] sm:$0xff] %vm3196, %v3085
  %3238 = vst.msk [vmem:[#allocation3 + $0x148] sm:$0xff] %vm3196, %v3087
  %3239 = vst.msk [vmem:[#allocation3 + $0x150] sm:$0xff] %vm3196, %v3089
  %3240 = vst.msk [vmem:[#allocation3 + $0x158] sm:$0xff] %vm3196, %v3091
  %3241 = vst.msk [vmem:[#allocation3 + $0x160] sm:$0xff] %vm3196, %v3093
  %3242 = vst.msk [vmem:[#allocation3 + $0x168] sm:$0xff] %vm3196, %v3095
  %3243 = vst.msk [vmem:[#allocation3 + $0x170] sm:$0xff] %vm3196, %v3097
  %3244 = vst.msk [vmem:[#allocation3 + $0x178] sm:$0xff] %vm3196, %v3099
  %3245 = vst.msk [vmem:[#allocation3 + $0x180] sm:$0xff] %vm3196, %v3101
  %3246 = vst.msk [vmem:[#allocation3 + $0x188] sm:$0xff] %vm3196, %v3103
  %3247 = vst.msk [vmem:[#allocation3 + $0x190] sm:$0xff] %vm3196, %v3105
  %3248 = vst.msk [vmem:[#allocation3 + $0x198] sm:$0xff] %vm3196, %v3107
  %3249 = vst.msk [vmem:[#allocation3 + $0x1a0] sm:$0xff] %vm3196, %v3109
  %3250 = vst.msk [vmem:[#allocation3 + $0x1a8] sm:$0xff] %vm3196, %v3111
  %3251 = vst.msk [vmem:[#allocation3 + $0x1b0] sm:$0xff] %vm3196, %v3113
  %3252 = vst.msk [vmem:[#allocation3 + $0x1b8] sm:$0xff] %vm3196, %v3115
  %3253 = vst.msk [vmem:[#allocation3 + $0x1c0] sm:$0xff] %vm3196, %v3117
  %3254 = vst.msk [vmem:[#allocation3 + $0x1c8] sm:$0xff] %vm3196, %v3119
  %3255 = vst.msk [vmem:[#allocation3 + $0x1d0] sm:$0xff] %vm3196, %v3121
  %3256 = vst.msk [vmem:[#allocation3 + $0x1d8] sm:$0xff] %vm3196, %v3123
  %3257 = vst.msk [vmem:[#allocation3 + $0x1e0] sm:$0xff] %vm3196, %v3125
  %3258 = vst.msk [vmem:[#allocation3 + $0x1e8] sm:$0xff] %vm3196, %v3127
  %3259 = vst.msk [vmem:[#allocation3 + $0x1f0] sm:$0xff] %vm3196, %v3129
  %3260 = vst.msk [vmem:[#allocation3 + $0x1f8] sm:$0xff] %vm3196, %v3131
  %v3261 = vld [vmem:[%s2875 + $0x1] sm:$0xff]
  %v3262 = vld [vmem:[%s2875 + $0x9] sm:$0xff]
  %v3263 = vld [vmem:[%s2875 + $0x19] sm:$0xff]
  %v3264 = vld [vmem:[%s2875 + $0x21] sm:$0xff]
  %v3265 = vld [vmem:[%s2875 + $0x31] sm:$0xff]
  %v3266 = vld [vmem:[%s2875 + $0x39] sm:$0xff]
  %v3267 = vld [vmem:[%s2875 + $0x49] sm:$0xff]
  %v3268 = vld [vmem:[%s2875 + $0x51] sm:$0xff]
  %v3269 = vld [vmem:[%s2875 + $0x61] sm:$0xff]
  %v3270 = vld [vmem:[%s2875 + $0x69] sm:$0xff]
  %v3271 = vld [vmem:[%s2875 + $0x79] sm:$0xff]
  %v3272 = vld [vmem:[%s2875 + $0x81] sm:$0xff]
  %v3273 = vld [vmem:[%s2875 + $0x91] sm:$0xff]
  %v3274 = vld [vmem:[%s2875 + $0x99] sm:$0xff]
  %v3275 = vld [vmem:[%s2875 + $0xa9] sm:$0xff]
  %v3276 = vld [vmem:[%s2875 + $0xb1] sm:$0xff]
  %v3277 = vld [vmem:[%s2875 + $0xc1] sm:$0xff]
  %v3278 = vld [vmem:[%s2875 + $0xc9] sm:$0xff]
  %v3279 = vld [vmem:[%s2875 + $0xd9] sm:$0xff]
  %v3280 = vld [vmem:[%s2875 + $0xe1] sm:$0xff]
  %v3281 = vld [vmem:[%s2875 + $0xf1] sm:$0xff]
  %v3282 = vld [vmem:[%s2875 + $0xf9] sm:$0xff]
  %v3283 = vld [vmem:[%s2875 + $0x109] sm:$0xff]
  %v3284 = vld [vmem:[%s2875 + $0x111] sm:$0xff]
  %v3285 = vld [vmem:[%s2875 + $0x121] sm:$0xff]
  %v3286 = vld [vmem:[%s2875 + $0x129] sm:$0xff]
  %v3287 = vld [vmem:[%s2875 + $0x139] sm:$0xff]
  %v3288 = vld [vmem:[%s2875 + $0x141] sm:$0xff]
  %v3289 = vld [vmem:[%s2875 + $0x151] sm:$0xff]
  %v3290 = vld [vmem:[%s2875 + $0x159] sm:$0xff]
  %v3291 = vld [vmem:[%s2875 + $0x169] sm:$0xff]
  %v3292 = vld [vmem:[%s2875 + $0x171] sm:$0xff]
  %v3293 = vld [vmem:[%s2875 + $0x1b1] sm:$0xff]
  %v3294 = vld [vmem:[%s2875 + $0x1b9] sm:$0xff]
  %v3295 = vld [vmem:[%s2875 + $0x1c9] sm:$0xff]
  %v3296 = vld [vmem:[%s2875 + $0x1d1] sm:$0xff]
  %v3297 = vld [vmem:[%s2875 + $0x1e1] sm:$0xff]
  %v3298 = vld [vmem:[%s2875 + $0x1e9] sm:$0xff]
  %v3299 = vld [vmem:[%s2875 + $0x1f9] sm:$0xff]
  %v3300 = vld [vmem:[%s2875 + $0x201] sm:$0xff]
  %v3301 = vld [vmem:[%s2875 + $0x211] sm:$0xff]
  %v3302 = vld [vmem:[%s2875 + $0x219] sm:$0xff]
  %v3303 = vld [vmem:[%s2875 + $0x229] sm:$0xff]
  %v3304 = vld [vmem:[%s2875 + $0x231] sm:$0xff]
  %v3305 = vld [vmem:[%s2875 + $0x241] sm:$0xff]
  %v3306 = vld [vmem:[%s2875 + $0x249] sm:$0xff]
  %v3307 = vld [vmem:[%s2875 + $0x259] sm:$0xff]
  %v3308 = vld [vmem:[%s2875 + $0x261] sm:$0xff]
  %v3309 = vld [vmem:[%s2875 + $0x271] sm:$0xff]
  %v3310 = vld [vmem:[%s2875 + $0x279] sm:$0xff]
  %v3311 = vld [vmem:[%s2875 + $0x289] sm:$0xff]
  %v3312 = vld [vmem:[%s2875 + $0x291] sm:$0xff]
  %v3313 = vld [vmem:[%s2875 + $0x2a1] sm:$0xff]
  %v3314 = vld [vmem:[%s2875 + $0x2a9] sm:$0xff]
  %v3315 = vld [vmem:[%s2875 + $0x2b9] sm:$0xff]
  %v3316 = vld [vmem:[%s2875 + $0x2c1] sm:$0xff]
  %v3317 = vld [vmem:[%s2875 + $0x2d1] sm:$0xff]
  %v3318 = vld [vmem:[%s2875 + $0x2d9] sm:$0xff]
  %v3319 = vld [vmem:[%s2875 + $0x2e9] sm:$0xff]
  %v3320 = vld [vmem:[%s2875 + $0x2f1] sm:$0xff]
  %v3321 = vld [vmem:[%s2875 + $0x301] sm:$0xff]
  %v3322 = vld [vmem:[%s2875 + $0x309] sm:$0xff]
  %v3323 = vld [vmem:[%s2875 + $0x319] sm:$0xff]
  %v3324 = vld [vmem:[%s2875 + $0x321] sm:$0xff]
  %3389 = vrot.lane.b32.xlu0 %v3261, 28
  %v3390 = vpop.permute.xlu0 %3389
  %3391 = vrot.lane.b32.xlu0 %v3262, 28
  %v3392 = vpop.permute.xlu0 %3391
  %3393 = vrot.lane.b32.xlu0 %v3263, 28
  %v3394 = vpop.permute.xlu0 %3393
  %3395 = vrot.lane.b32.xlu0 %v3264, 28
  %v3396 = vpop.permute.xlu0 %3395
  %3397 = vrot.lane.b32.xlu0 %v3265, 28
  %v3398 = vpop.permute.xlu0 %3397
  %3399 = vrot.lane.b32.xlu0 %v3266, 28
  %v3400 = vpop.permute.xlu0 %3399
  %3401 = vrot.lane.b32.xlu0 %v3267, 28
  %v3402 = vpop.permute.xlu0 %3401
  %3403 = vrot.lane.b32.xlu0 %v3268, 28
  %v3404 = vpop.permute.xlu0 %3403
  %3405 = vrot.lane.b32.xlu0 %v3269, 28
  %v3406 = vpop.permute.xlu0 %3405
  %3407 = vrot.lane.b32.xlu0 %v3270, 28
  %v3408 = vpop.permute.xlu0 %3407
  %3409 = vrot.lane.b32.xlu0 %v3271, 28
  %v3410 = vpop.permute.xlu0 %3409
  %3411 = vrot.lane.b32.xlu0 %v3272, 28
  %v3412 = vpop.permute.xlu0 %3411
  %3413 = vrot.lane.b32.xlu0 %v3273, 28
  %v3414 = vpop.permute.xlu0 %3413
  %3415 = vrot.lane.b32.xlu0 %v3274, 28
  %v3416 = vpop.permute.xlu0 %3415
  %3417 = vrot.lane.b32.xlu0 %v3275, 28
  %v3418 = vpop.permute.xlu0 %3417
  %3419 = vrot.lane.b32.xlu0 %v3276, 28
  %v3420 = vpop.permute.xlu0 %3419
  %3421 = vrot.lane.b32.xlu0 %v3277, 28
  %v3422 = vpop.permute.xlu0 %3421
  %3423 = vrot.lane.b32.xlu0 %v3278, 28
  %v3424 = vpop.permute.xlu0 %3423
  %3425 = vrot.lane.b32.xlu0 %v3279, 28
  %v3426 = vpop.permute.xlu0 %3425
  %3427 = vrot.lane.b32.xlu0 %v3280, 28
  %v3428 = vpop.permute.xlu0 %3427
  %3429 = vrot.lane.b32.xlu0 %v3281, 28
  %v3430 = vpop.permute.xlu0 %3429
  %3431 = vrot.lane.b32.xlu0 %v3282, 28
  %v3432 = vpop.permute.xlu0 %3431
  %3433 = vrot.lane.b32.xlu0 %v3283, 28
  %v3434 = vpop.permute.xlu0 %3433
  %3435 = vrot.lane.b32.xlu0 %v3284, 28
  %v3436 = vpop.permute.xlu0 %3435
  %3437 = vrot.lane.b32.xlu0 %v3285, 28
  %v3438 = vpop.permute.xlu0 %3437
  %3439 = vrot.lane.b32.xlu0 %v3286, 28
  %v3440 = vpop.permute.xlu0 %3439
  %3441 = vrot.lane.b32.xlu0 %v3287, 28
  %v3442 = vpop.permute.xlu0 %3441
  %3443 = vrot.lane.b32.xlu0 %v3288, 28
  %v3444 = vpop.permute.xlu0 %3443
  %3445 = vrot.lane.b32.xlu0 %v3289, 28
  %v3446 = vpop.permute.xlu0 %3445
  %3447 = vrot.lane.b32.xlu0 %v3290, 28
  %v3448 = vpop.permute.xlu0 %3447
  %3449 = vrot.lane.b32.xlu0 %v3291, 28
  %v3450 = vpop.permute.xlu0 %3449
  %3451 = vrot.lane.b32.xlu0 %v3292, 28
  %v3452 = vpop.permute.xlu0 %3451
  %3453 = vrot.lane.b32.xlu0 %v3293, 28
  %v3454 = vpop.permute.xlu0 %3453
  %3455 = vrot.lane.b32.xlu0 %v3294, 28
  %v3456 = vpop.permute.xlu0 %3455
  %3457 = vrot.lane.b32.xlu0 %v3295, 28
  %v3458 = vpop.permute.xlu0 %3457
  %3459 = vrot.lane.b32.xlu0 %v3296, 28
  %v3460 = vpop.permute.xlu0 %3459
  %3461 = vrot.lane.b32.xlu0 %v3297, 28
  %v3462 = vpop.permute.xlu0 %3461
  %3463 = vrot.lane.b32.xlu0 %v3298, 28
  %v3464 = vpop.permute.xlu0 %3463
  %3465 = vrot.lane.b32.xlu0 %v3299, 28
  %v3466 = vpop.permute.xlu0 %3465
  %3467 = vrot.lane.b32.xlu0 %v3300, 28
  %v3468 = vpop.permute.xlu0 %3467
  %3469 = vrot.lane.b32.xlu0 %v3301, 28
  %v3470 = vpop.permute.xlu0 %3469
  %3471 = vrot.lane.b32.xlu0 %v3302, 28
  %v3472 = vpop.permute.xlu0 %3471
  %3473 = vrot.lane.b32.xlu0 %v3303, 28
  %v3474 = vpop.permute.xlu0 %3473
  %3475 = vrot.lane.b32.xlu0 %v3304, 28
  %v3476 = vpop.permute.xlu0 %3475
  %3477 = vrot.lane.b32.xlu0 %v3305, 28
  %v3478 = vpop.permute.xlu0 %3477
  %3479 = vrot.lane.b32.xlu0 %v3306, 28
  %v3480 = vpop.permute.xlu0 %3479
  %3481 = vrot.lane.b32.xlu0 %v3307, 28
  %v3482 = vpop.permute.xlu0 %3481
  %3483 = vrot.lane.b32.xlu0 %v3308, 28
  %v3484 = vpop.permute.xlu0 %3483
  %3485 = vrot.lane.b32.xlu0 %v3309, 28
  %v3486 = vpop.permute.xlu0 %3485
  %3487 = vrot.lane.b32.xlu0 %v3310, 28
  %v3488 = vpop.permute.xlu0 %3487
  %3489 = vrot.lane.b32.xlu0 %v3311, 28
  %v3490 = vpop.permute.xlu0 %3489
  %3491 = vrot.lane.b32.xlu0 %v3312, 28
  %v3492 = vpop.permute.xlu0 %3491
  %3493 = vrot.lane.b32.xlu0 %v3313, 28
  %v3494 = vpop.permute.xlu0 %3493
  %3495 = vrot.lane.b32.xlu0 %v3314, 28
  %v3496 = vpop.permute.xlu0 %3495
  %3497 = vrot.lane.b32.xlu0 %v3315, 28
  %v3498 = vpop.permute.xlu0 %3497
  %3499 = vrot.lane.b32.xlu0 %v3316, 28
  %v3500 = vpop.permute.xlu0 %3499
  %3501 = vrot.lane.b32.xlu0 %v3317, 28
  %v3502 = vpop.permute.xlu0 %3501
  %3503 = vrot.lane.b32.xlu0 %v3318, 28
  %v3504 = vpop.permute.xlu0 %3503
  %3505 = vrot.lane.b32.xlu0 %v3319, 28
  %v3506 = vpop.permute.xlu0 %3505
  %3507 = vrot.lane.b32.xlu0 %v3320, 28
  %v3508 = vpop.permute.xlu0 %3507
  %3509 = vrot.lane.b32.xlu0 %v3321, 28
  %v3510 = vpop.permute.xlu0 %3509
  %3511 = vrot.lane.b32.xlu0 %v3322, 28
  %v3512 = vpop.permute.xlu0 %3511
  %3513 = vrot.lane.b32.xlu0 %v3323, 28
  %v3514 = vpop.permute.xlu0 %3513
  %3515 = vrot.lane.b32.xlu0 %v3324, 28
  %v3516 = vpop.permute.xlu0 %3515
  %vm3581 = vcmask 261344
  %3582 = vst.msk [vmem:[#allocation3] sm:$0xff] %vm3581, %v3390
  %3583 = vst.msk [vmem:[#allocation3 + $0x8] sm:$0xff] %vm3581, %v3392
  %3584 = vst.msk [vmem:[#allocation3 + $0x10] sm:$0xff] %vm3581, %v3394
  %3585 = vst.msk [vmem:[#allocation3 + $0x18] sm:$0xff] %vm3581, %v3396
  %3586 = vst.msk [vmem:[#allocation3 + $0x20] sm:$0xff] %vm3581, %v3398
  %3587 = vst.msk [vmem:[#allocation3 + $0x28] sm:$0xff] %vm3581, %v3400
  %3588 = vst.msk [vmem:[#allocation3 + $0x30] sm:$0xff] %vm3581, %v3402
  %3589 = vst.msk [vmem:[#allocation3 + $0x38] sm:$0xff] %vm3581, %v3404
  %3590 = vst.msk [vmem:[#allocation3 + $0x40] sm:$0xff] %vm3581, %v3406
  %3591 = vst.msk [vmem:[#allocation3 + $0x48] sm:$0xff] %vm3581, %v3408
  %3592 = vst.msk [vmem:[#allocation3 + $0x50] sm:$0xff] %vm3581, %v3410
  %3593 = vst.msk [vmem:[#allocation3 + $0x58] sm:$0xff] %vm3581, %v3412
  %3594 = vst.msk [vmem:[#allocation3 + $0x60] sm:$0xff] %vm3581, %v3414
  %3595 = vst.msk [vmem:[#allocation3 + $0x68] sm:$0xff] %vm3581, %v3416
  %3596 = vst.msk [vmem:[#allocation3 + $0x70] sm:$0xff] %vm3581, %v3418
  %3597 = vst.msk [vmem:[#allocation3 + $0x78] sm:$0xff] %vm3581, %v3420
  %3598 = vst.msk [vmem:[#allocation3 + $0x80] sm:$0xff] %vm3581, %v3422
  %3599 = vst.msk [vmem:[#allocation3 + $0x88] sm:$0xff] %vm3581, %v3424
  %3600 = vst.msk [vmem:[#allocation3 + $0x90] sm:$0xff] %vm3581, %v3426
  %3601 = vst.msk [vmem:[#allocation3 + $0x98] sm:$0xff] %vm3581, %v3428
  %3602 = vst.msk [vmem:[#allocation3 + $0xa0] sm:$0xff] %vm3581, %v3430
  %3603 = vst.msk [vmem:[#allocation3 + $0xa8] sm:$0xff] %vm3581, %v3432
  %3604 = vst.msk [vmem:[#allocation3 + $0xb0] sm:$0xff] %vm3581, %v3434
  %3605 = vst.msk [vmem:[#allocation3 + $0xb8] sm:$0xff] %vm3581, %v3436
  %3606 = vst.msk [vmem:[#allocation3 + $0xc0] sm:$0xff] %vm3581, %v3438
  %3607 = vst.msk [vmem:[#allocation3 + $0xc8] sm:$0xff] %vm3581, %v3440
  %3608 = vst.msk [vmem:[#allocation3 + $0xd0] sm:$0xff] %vm3581, %v3442
  %3609 = vst.msk [vmem:[#allocation3 + $0xd8] sm:$0xff] %vm3581, %v3444
  %3610 = vst.msk [vmem:[#allocation3 + $0xe0] sm:$0xff] %vm3581, %v3446
  %3611 = vst.msk [vmem:[#allocation3 + $0xe8] sm:$0xff] %vm3581, %v3448
  %3612 = vst.msk [vmem:[#allocation3 + $0xf0] sm:$0xff] %vm3581, %v3450
  %3613 = vst.msk [vmem:[#allocation3 + $0xf8] sm:$0xff] %vm3581, %v3452
  %3614 = vst.msk [vmem:[#allocation3 + $0x100] sm:$0xff] %vm3581, %v3454
  %3615 = vst.msk [vmem:[#allocation3 + $0x108] sm:$0xff] %vm3581, %v3456
  %3616 = vst.msk [vmem:[#allocation3 + $0x110] sm:$0xff] %vm3581, %v3458
  %3617 = vst.msk [vmem:[#allocation3 + $0x118] sm:$0xff] %vm3581, %v3460
  %3618 = vst.msk [vmem:[#allocation3 + $0x120] sm:$0xff] %vm3581, %v3462
  %3619 = vst.msk [vmem:[#allocation3 + $0x128] sm:$0xff] %vm3581, %v3464
  %3620 = vst.msk [vmem:[#allocation3 + $0x130] sm:$0xff] %vm3581, %v3466
  %3621 = vst.msk [vmem:[#allocation3 + $0x138] sm:$0xff] %vm3581, %v3468
  %3622 = vst.msk [vmem:[#allocation3 + $0x140] sm:$0xff] %vm3581, %v3470
  %3623 = vst.msk [vmem:[#allocation3 + $0x148] sm:$0xff] %vm3581, %v3472
  %3624 = vst.msk [vmem:[#allocation3 + $0x150] sm:$0xff] %vm3581, %v3474
  %3625 = vst.msk [vmem:[#allocation3 + $0x158] sm:$0xff] %vm3581, %v3476
  %3626 = vst.msk [vmem:[#allocation3 + $0x160] sm:$0xff] %vm3581, %v3478
  %3627 = vst.msk [vmem:[#allocation3 + $0x168] sm:$0xff] %vm3581, %v3480
  %3628 = vst.msk [vmem:[#allocation3 + $0x170] sm:$0xff] %vm3581, %v3482
  %3629 = vst.msk [vmem:[#allocation3 + $0x178] sm:$0xff] %vm3581, %v3484
  %3630 = vst.msk [vmem:[#allocation3 + $0x180] sm:$0xff] %vm3581, %v3486
  %3631 = vst.msk [vmem:[#allocation3 + $0x188] sm:$0xff] %vm3581, %v3488
  %3632 = vst.msk [vmem:[#allocation3 + $0x190] sm:$0xff] %vm3581, %v3490
  %3633 = vst.msk [vmem:[#allocation3 + $0x198] sm:$0xff] %vm3581, %v3492
  %3634 = vst.msk [vmem:[#allocation3 + $0x1a0] sm:$0xff] %vm3581, %v3494
  %3635 = vst.msk [vmem:[#allocation3 + $0x1a8] sm:$0xff] %vm3581, %v3496
  %3636 = vst.msk [vmem:[#allocation3 + $0x1b0] sm:$0xff] %vm3581, %v3498
  %3637 = vst.msk [vmem:[#allocation3 + $0x1b8] sm:$0xff] %vm3581, %v3500
  %3638 = vst.msk [vmem:[#allocation3 + $0x1c0] sm:$0xff] %vm3581, %v3502
  %3639 = vst.msk [vmem:[#allocation3 + $0x1c8] sm:$0xff] %vm3581, %v3504
  %3640 = vst.msk [vmem:[#allocation3 + $0x1d0] sm:$0xff] %vm3581, %v3506
  %3641 = vst.msk [vmem:[#allocation3 + $0x1d8] sm:$0xff] %vm3581, %v3508
  %3642 = vst.msk [vmem:[#allocation3 + $0x1e0] sm:$0xff] %vm3581, %v3510
  %3643 = vst.msk [vmem:[#allocation3 + $0x1e8] sm:$0xff] %vm3581, %v3512
  %3644 = vst.msk [vmem:[#allocation3 + $0x1f0] sm:$0xff] %vm3581, %v3514
  %3645 = vst.msk [vmem:[#allocation3 + $0x1f8] sm:$0xff] %vm3581, %v3516
  %v3646 = vld [vmem:[%s2875 + $0x2] sm:$0xff]
  %v3647 = vld [vmem:[%s2875 + $0xa] sm:$0xff]
  %v3648 = vld [vmem:[%s2875 + $0x1a] sm:$0xff]
  %v3649 = vld [vmem:[%s2875 + $0x22] sm:$0xff]
  %v3650 = vld [vmem:[%s2875 + $0x32] sm:$0xff]
  %v3651 = vld [vmem:[%s2875 + $0x3a] sm:$0xff]
  %v3652 = vld [vmem:[%s2875 + $0x4a] sm:$0xff]
  %v3653 = vld [vmem:[%s2875 + $0x52] sm:$0xff]
  %v3654 = vld [vmem:[%s2875 + $0x62] sm:$0xff]
  %v3655 = vld [vmem:[%s2875 + $0x6a] sm:$0xff]
  %v3656 = vld [vmem:[%s2875 + $0x7a] sm:$0xff]
  %v3657 = vld [vmem:[%s2875 + $0x82] sm:$0xff]
  %v3658 = vld [vmem:[%s2875 + $0x92] sm:$0xff]
  %v3659 = vld [vmem:[%s2875 + $0x9a] sm:$0xff]
  %v3660 = vld [vmem:[%s2875 + $0xaa] sm:$0xff]
  %v3661 = vld [vmem:[%s2875 + $0xb2] sm:$0xff]
  %v3662 = vld [vmem:[%s2875 + $0xc2] sm:$0xff]
  %v3663 = vld [vmem:[%s2875 + $0xca] sm:$0xff]
  %v3664 = vld [vmem:[%s2875 + $0xda] sm:$0xff]
  %v3665 = vld [vmem:[%s2875 + $0xe2] sm:$0xff]
  %v3666 = vld [vmem:[%s2875 + $0xf2] sm:$0xff]
  %v3667 = vld [vmem:[%s2875 + $0xfa] sm:$0xff]
  %v3668 = vld [vmem:[%s2875 + $0x10a] sm:$0xff]
  %v3669 = vld [vmem:[%s2875 + $0x112] sm:$0xff]
  %v3670 = vld [vmem:[%s2875 + $0x122] sm:$0xff]
  %v3671 = vld [vmem:[%s2875 + $0x12a] sm:$0xff]
  %v3672 = vld [vmem:[%s2875 + $0x13a] sm:$0xff]
  %v3673 = vld [vmem:[%s2875 + $0x142] sm:$0xff]
  %v3674 = vld [vmem:[%s2875 + $0x152] sm:$0xff]
  %v3675 = vld [vmem:[%s2875 + $0x15a] sm:$0xff]
  %v3676 = vld [vmem:[%s2875 + $0x16a] sm:$0xff]
  %v3677 = vld [vmem:[%s2875 + $0x172] sm:$0xff]
  %v3678 = vld [vmem:[%s2875 + $0x1b2] sm:$0xff]
  %v3679 = vld [vmem:[%s2875 + $0x1ba] sm:$0xff]
  %v3680 = vld [vmem:[%s2875 + $0x1ca] sm:$0xff]
  %v3681 = vld [vmem:[%s2875 + $0x1d2] sm:$0xff]
  %v3682 = vld [vmem:[%s2875 + $0x1e2] sm:$0xff]
  %v3683 = vld [vmem:[%s2875 + $0x1ea] sm:$0xff]
  %v3684 = vld [vmem:[%s2875 + $0x1fa] sm:$0xff]
  %v3685 = vld [vmem:[%s2875 + $0x202] sm:$0xff]
  %v3686 = vld [vmem:[%s2875 + $0x212] sm:$0xff]
  %v3687 = vld [vmem:[%s2875 + $0x21a] sm:$0xff]
  %v3688 = vld [vmem:[%s2875 + $0x22a] sm:$0xff]
  %v3689 = vld [vmem:[%s2875 + $0x232] sm:$0xff]
  %v3690 = vld [vmem:[%s2875 + $0x242] sm:$0xff]
  %v3691 = vld [vmem:[%s2875 + $0x24a] sm:$0xff]
  %v3692 = vld [vmem:[%s2875 + $0x25a] sm:$0xff]
  %v3693 = vld [vmem:[%s2875 + $0x262] sm:$0xff]
  %v3694 = vld [vmem:[%s2875 + $0x272] sm:$0xff]
  %v3695 = vld [vmem:[%s2875 + $0x27a] sm:$0xff]
  %v3696 = vld [vmem:[%s2875 + $0x28a] sm:$0xff]
  %v3697 = vld [vmem:[%s2875 + $0x292] sm:$0xff]
  %v3698 = vld [vmem:[%s2875 + $0x2a2] sm:$0xff]
  %v3699 = vld [vmem:[%s2875 + $0x2aa] sm:$0xff]
  %v3700 = vld [vmem:[%s2875 + $0x2ba] sm:$0xff]
  %v3701 = vld [vmem:[%s2875 + $0x2c2] sm:$0xff]
  %v3702 = vld [vmem:[%s2875 + $0x2d2] sm:$0xff]
  %v3703 = vld [vmem:[%s2875 + $0x2da] sm:$0xff]
  %v3704 = vld [vmem:[%s2875 + $0x2ea] sm:$0xff]
  %v3705 = vld [vmem:[%s2875 + $0x2f2] sm:$0xff]
  %v3706 = vld [vmem:[%s2875 + $0x302] sm:$0xff]
  %v3707 = vld [vmem:[%s2875 + $0x30a] sm:$0xff]
  %v3708 = vld [vmem:[%s2875 + $0x31a] sm:$0xff]
  %v3709 = vld [vmem:[%s2875 + $0x322] sm:$0xff]
  %3774 = vrot.lane.b32.xlu0 %v3646, 32
  %v3775 = vpop.permute.xlu0 %3774
  %3776 = vrot.lane.b32.xlu0 %v3647, 32
  %v3777 = vpop.permute.xlu0 %3776
  %3778 = vrot.lane.b32.xlu0 %v3648, 32
  %v3779 = vpop.permute.xlu0 %3778
  %3780 = vrot.lane.b32.xlu0 %v3649, 32
  %v3781 = vpop.permute.xlu0 %3780
  %3782 = vrot.lane.b32.xlu0 %v3650, 32
  %v3783 = vpop.permute.xlu0 %3782
  %3784 = vrot.lane.b32.xlu0 %v3651, 32
  %v3785 = vpop.permute.xlu0 %3784
  %3786 = vrot.lane.b32.xlu0 %v3652, 32
  %v3787 = vpop.permute.xlu0 %3786
  %3788 = vrot.lane.b32.xlu0 %v3653, 32
  %v3789 = vpop.permute.xlu0 %3788
  %3790 = vrot.lane.b32.xlu0 %v3654, 32
  %v3791 = vpop.permute.xlu0 %3790
  %3792 = vrot.lane.b32.xlu0 %v3655, 32
  %v3793 = vpop.permute.xlu0 %3792
  %3794 = vrot.lane.b32.xlu0 %v3656, 32
  %v3795 = vpop.permute.xlu0 %3794
  %3796 = vrot.lane.b32.xlu0 %v3657, 32
  %v3797 = vpop.permute.xlu0 %3796
  %3798 = vrot.lane.b32.xlu0 %v3658, 32
  %v3799 = vpop.permute.xlu0 %3798
  %3800 = vrot.lane.b32.xlu0 %v3659, 32
  %v3801 = vpop.permute.xlu0 %3800
  %3802 = vrot.lane.b32.xlu0 %v3660, 32
  %v3803 = vpop.permute.xlu0 %3802
  %3804 = vrot.lane.b32.xlu0 %v3661, 32
  %v3805 = vpop.permute.xlu0 %3804
  %3806 = vrot.lane.b32.xlu0 %v3662, 32
  %v3807 = vpop.permute.xlu0 %3806
  %3808 = vrot.lane.b32.xlu0 %v3663, 32
  %v3809 = vpop.permute.xlu0 %3808
  %3810 = vrot.lane.b32.xlu0 %v3664, 32
  %v3811 = vpop.permute.xlu0 %3810
  %3812 = vrot.lane.b32.xlu0 %v3665, 32
  %v3813 = vpop.permute.xlu0 %3812
  %3814 = vrot.lane.b32.xlu0 %v3666, 32
  %v3815 = vpop.permute.xlu0 %3814
  %3816 = vrot.lane.b32.xlu0 %v3667, 32
  %v3817 = vpop.permute.xlu0 %3816
  %3818 = vrot.lane.b32.xlu0 %v3668, 32
  %v3819 = vpop.permute.xlu0 %3818
  %3820 = vrot.lane.b32.xlu0 %v3669, 32
  %v3821 = vpop.permute.xlu0 %3820
  %3822 = vrot.lane.b32.xlu0 %v3670, 32
  %v3823 = vpop.permute.xlu0 %3822
  %3824 = vrot.lane.b32.xlu0 %v3671, 32
  %v3825 = vpop.permute.xlu0 %3824
  %3826 = vrot.lane.b32.xlu0 %v3672, 32
  %v3827 = vpop.permute.xlu0 %3826
  %3828 = vrot.lane.b32.xlu0 %v3673, 32
  %v3829 = vpop.permute.xlu0 %3828
  %3830 = vrot.lane.b32.xlu0 %v3674, 32
  %v3831 = vpop.permute.xlu0 %3830
  %3832 = vrot.lane.b32.xlu0 %v3675, 32
  %v3833 = vpop.permute.xlu0 %3832
  %3834 = vrot.lane.b32.xlu0 %v3676, 32
  %v3835 = vpop.permute.xlu0 %3834
  %3836 = vrot.lane.b32.xlu0 %v3677, 32
  %v3837 = vpop.permute.xlu0 %3836
  %3838 = vrot.lane.b32.xlu0 %v3678, 32
  %v3839 = vpop.permute.xlu0 %3838
  %3840 = vrot.lane.b32.xlu0 %v3679, 32
  %v3841 = vpop.permute.xlu0 %3840
  %3842 = vrot.lane.b32.xlu0 %v3680, 32
  %v3843 = vpop.permute.xlu0 %3842
  %3844 = vrot.lane.b32.xlu0 %v3681, 32
  %v3845 = vpop.permute.xlu0 %3844
  %3846 = vrot.lane.b32.xlu0 %v3682, 32
  %v3847 = vpop.permute.xlu0 %3846
  %3848 = vrot.lane.b32.xlu0 %v3683, 32
  %v3849 = vpop.permute.xlu0 %3848
  %3850 = vrot.lane.b32.xlu0 %v3684, 32
  %v3851 = vpop.permute.xlu0 %3850
  %3852 = vrot.lane.b32.xlu0 %v3685, 32
  %v3853 = vpop.permute.xlu0 %3852
  %3854 = vrot.lane.b32.xlu0 %v3686, 32
  %v3855 = vpop.permute.xlu0 %3854
  %3856 = vrot.lane.b32.xlu0 %v3687, 32
  %v3857 = vpop.permute.xlu0 %3856
  %3858 = vrot.lane.b32.xlu0 %v3688, 32
  %v3859 = vpop.permute.xlu0 %3858
  %3860 = vrot.lane.b32.xlu0 %v3689, 32
  %v3861 = vpop.permute.xlu0 %3860
  %3862 = vrot.lane.b32.xlu0 %v3690, 32
  %v3863 = vpop.permute.xlu0 %3862
  %3864 = vrot.lane.b32.xlu0 %v3691, 32
  %v3865 = vpop.permute.xlu0 %3864
  %3866 = vrot.lane.b32.xlu0 %v3692, 32
  %v3867 = vpop.permute.xlu0 %3866
  %3868 = vrot.lane.b32.xlu0 %v3693, 32
  %v3869 = vpop.permute.xlu0 %3868
  %3870 = vrot.lane.b32.xlu0 %v3694, 32
  %v3871 = vpop.permute.xlu0 %3870
  %3872 = vrot.lane.b32.xlu0 %v3695, 32
  %v3873 = vpop.permute.xlu0 %3872
  %3874 = vrot.lane.b32.xlu0 %v3696, 32
  %v3875 = vpop.permute.xlu0 %3874
  %3876 = vrot.lane.b32.xlu0 %v3697, 32
  %v3877 = vpop.permute.xlu0 %3876
  %3878 = vrot.lane.b32.xlu0 %v3698, 32
  %v3879 = vpop.permute.xlu0 %3878
  %3880 = vrot.lane.b32.xlu0 %v3699, 32
  %v3881 = vpop.permute.xlu0 %3880
  %3882 = vrot.lane.b32.xlu0 %v3700, 32
  %v3883 = vpop.permute.xlu0 %3882
  %3884 = vrot.lane.b32.xlu0 %v3701, 32
  %v3885 = vpop.permute.xlu0 %3884
  %3886 = vrot.lane.b32.xlu0 %v3702, 32
  %v3887 = vpop.permute.xlu0 %3886
  %3888 = vrot.lane.b32.xlu0 %v3703, 32
  %v3889 = vpop.permute.xlu0 %3888
  %3890 = vrot.lane.b32.xlu0 %v3704, 32
  %v3891 = vpop.permute.xlu0 %3890
  %3892 = vrot.lane.b32.xlu0 %v3705, 32
  %v3893 = vpop.permute.xlu0 %3892
  %3894 = vrot.lane.b32.xlu0 %v3706, 32
  %v3895 = vpop.permute.xlu0 %3894
  %3896 = vrot.lane.b32.xlu0 %v3707, 32
  %v3897 = vpop.permute.xlu0 %3896
  %3898 = vrot.lane.b32.xlu0 %v3708, 32
  %v3899 = vpop.permute.xlu0 %3898
  %3900 = vrot.lane.b32.xlu0 %v3709, 32
  %v3901 = vpop.permute.xlu0 %3900
  %vm3966 = vcmask 294144
  %3967 = vst.msk [vmem:[#allocation3] sm:$0xff] %vm3966, %v3775
  %3968 = vst.msk [vmem:[#allocation3 + $0x8] sm:$0xff] %vm3966, %v3777
  %3969 = vst.msk [vmem:[#allocation3 + $0x10] sm:$0xff] %vm3966, %v3779
  %3970 = vst.msk [vmem:[#allocation3 + $0x18] sm:$0xff] %vm3966, %v3781
  %3971 = vst.msk [vmem:[#allocation3 + $0x20] sm:$0xff] %vm3966, %v3783
  %3972 = vst.msk [vmem:[#allocation3 + $0x28] sm:$0xff] %vm3966, %v3785
  %3973 = vst.msk [vmem:[#allocation3 + $0x30] sm:$0xff] %vm3966, %v3787
  %3974 = vst.msk [vmem:[#allocation3 + $0x38] sm:$0xff] %vm3966, %v3789
  %3975 = vst.msk [vmem:[#allocation3 + $0x40] sm:$0xff] %vm3966, %v3791
  %3976 = vst.msk [vmem:[#allocation3 + $0x48] sm:$0xff] %vm3966, %v3793
  %3977 = vst.msk [vmem:[#allocation3 + $0x50] sm:$0xff] %vm3966, %v3795
  %3978 = vst.msk [vmem:[#allocation3 + $0x58] sm:$0xff] %vm3966, %v3797
  %3979 = vst.msk [vmem:[#allocation3 + $0x60] sm:$0xff] %vm3966, %v3799
  %3980 = vst.msk [vmem:[#allocation3 + $0x68] sm:$0xff] %vm3966, %v3801
  %3981 = vst.msk [vmem:[#allocation3 + $0x70] sm:$0xff] %vm3966, %v3803
  %3982 = vst.msk [vmem:[#allocation3 + $0x78] sm:$0xff] %vm3966, %v3805
  %3983 = vst.msk [vmem:[#allocation3 + $0x80] sm:$0xff] %vm3966, %v3807
  %3984 = vst.msk [vmem:[#allocation3 + $0x88] sm:$0xff] %vm3966, %v3809
  %3985 = vst.msk [vmem:[#allocation3 + $0x90] sm:$0xff] %vm3966, %v3811
  %3986 = vst.msk [vmem:[#allocation3 + $0x98] sm:$0xff] %vm3966, %v3813
  %3987 = vst.msk [vmem:[#allocation3 + $0xa0] sm:$0xff] %vm3966, %v3815
  %3988 = vst.msk [vmem:[#allocation3 + $0xa8] sm:$0xff] %vm3966, %v3817
  %3989 = vst.msk [vmem:[#allocation3 + $0xb0] sm:$0xff] %vm3966, %v3819
  %3990 = vst.msk [vmem:[#allocation3 + $0xb8] sm:$0xff] %vm3966, %v3821
  %3991 = vst.msk [vmem:[#allocation3 + $0xc0] sm:$0xff] %vm3966, %v3823
  %3992 = vst.msk [vmem:[#allocation3 + $0xc8] sm:$0xff] %vm3966, %v3825
  %3993 = vst.msk [vmem:[#allocation3 + $0xd0] sm:$0xff] %vm3966, %v3827
  %3994 = vst.msk [vmem:[#allocation3 + $0xd8] sm:$0xff] %vm3966, %v3829
  %3995 = vst.msk [vmem:[#allocation3 + $0xe0] sm:$0xff] %vm3966, %v3831
  %3996 = vst.msk [vmem:[#allocation3 + $0xe8] sm:$0xff] %vm3966, %v3833
  %3997 = vst.msk [vmem:[#allocation3 + $0xf0] sm:$0xff] %vm3966, %v3835
  %3998 = vst.msk [vmem:[#allocation3 + $0xf8] sm:$0xff] %vm3966, %v3837
  %3999 = vst.msk [vmem:[#allocation3 + $0x100] sm:$0xff] %vm3966, %v3839
  %4000 = vst.msk [vmem:[#allocation3 + $0x108] sm:$0xff] %vm3966, %v3841
  %4001 = vst.msk [vmem:[#allocation3 + $0x110] sm:$0xff] %vm3966, %v3843
  %4002 = vst.msk [vmem:[#allocation3 + $0x118] sm:$0xff] %vm3966, %v3845
  %4003 = vst.msk [vmem:[#allocation3 + $0x120] sm:$0xff] %vm3966, %v3847
  %4004 = vst.msk [vmem:[#allocation3 + $0x128] sm:$0xff] %vm3966, %v3849
  %4005 = vst.msk [vmem:[#allocation3 + $0x130] sm:$0xff] %vm3966, %v3851
  %4006 = vst.msk [vmem:[#allocation3 + $0x138] sm:$0xff] %vm3966, %v3853
  %4007 = vst.msk [vmem:[#allocation3 + $0x140] sm:$0xff] %vm3966, %v3855
  %4008 = vst.msk [vmem:[#allocation3 + $0x148] sm:$0xff] %vm3966, %v3857
  %4009 = vst.msk [vmem:[#allocation3 + $0x150] sm:$0xff] %vm3966, %v3859
  %4010 = vst.msk [vmem:[#allocation3 + $0x158] sm:$0xff] %vm3966, %v3861
  %4011 = vst.msk [vmem:[#allocation3 + $0x160] sm:$0xff] %vm3966, %v3863
  %4012 = vst.msk [vmem:[#allocation3 + $0x168] sm:$0xff] %vm3966, %v3865
  %4013 = vst.msk [vmem:[#allocation3 + $0x170] sm:$0xff] %vm3966, %v3867
  %4014 = vst.msk [vmem:[#allocation3 + $0x178] sm:$0xff] %vm3966, %v3869
  %4015 = vst.msk [vmem:[#allocation3 + $0x180] sm:$0xff] %vm3966, %v3871
  %4016 = vst.msk [vmem:[#allocation3 + $0x188] sm:$0xff] %vm3966, %v3873
  %4017 = vst.msk [vmem:[#allocation3 + $0x190] sm:$0xff] %vm3966, %v3875
  %4018 = vst.msk [vmem:[#allocation3 + $0x198] sm:$0xff] %vm3966, %v3877
  %4019 = vst.msk [vmem:[#allocation3 + $0x1a0] sm:$0xff] %vm3966, %v3879
  %4020 = vst.msk [vmem:[#allocation3 + $0x1a8] sm:$0xff] %vm3966, %v3881
  %4021 = vst.msk [vmem:[#allocation3 + $0x1b0] sm:$0xff] %vm3966, %v3883
  %4022 = vst.msk [vmem:[#allocation3 + $0x1b8] sm:$0xff] %vm3966, %v3885
  %4023 = vst.msk [vmem:[#allocation3 + $0x1c0] sm:$0xff] %vm3966, %v3887
  %4024 = vst.msk [vmem:[#allocation3 + $0x1c8] sm:$0xff] %vm3966, %v3889
  %4025 = vst.msk [vmem:[#allocation3 + $0x1d0] sm:$0xff] %vm3966, %v3891
  %4026 = vst.msk [vmem:[#allocation3 + $0x1d8] sm:$0xff] %vm3966, %v3893
  %4027 = vst.msk [vmem:[#allocation3 + $0x1e0] sm:$0xff] %vm3966, %v3895
  %4028 = vst.msk [vmem:[#allocation3 + $0x1e8] sm:$0xff] %vm3966, %v3897
  %4029 = vst.msk [vmem:[#allocation3 + $0x1f0] sm:$0xff] %vm3966, %v3899
  %4030 = vst.msk [vmem:[#allocation3 + $0x1f8] sm:$0xff] %vm3966, %v3901
  %v4031 = vld [vmem:[#allocation3] sm:$0xff]
  %v4032 = vld [vmem:[#allocation3 + $0x8] sm:$0xff]
  %v4033 = vld [vmem:[#allocation3 + $0x10] sm:$0xff]
  %v4034 = vld [vmem:[#allocation3 + $0x18] sm:$0xff]
  %v4035 = vld [vmem:[#allocation3 + $0x20] sm:$0xff]
  %v4036 = vld [vmem:[#allocation3 + $0x28] sm:$0xff]
  %v4037 = vld [vmem:[#allocation3 + $0x30] sm:$0xff]
  %v4038 = vld [vmem:[#allocation3 + $0x38] sm:$0xff]
  %v4039 = vld [vmem:[#allocation3 + $0x40] sm:$0xff]
  %v4040 = vld [vmem:[#allocation3 + $0x48] sm:$0xff]
  %v4041 = vld [vmem:[#allocation3 + $0x50] sm:$0xff]
  %v4042 = vld [vmem:[#allocation3 + $0x58] sm:$0xff]
  %v4043 = vld [vmem:[#allocation3 + $0x60] sm:$0xff]
  %v4044 = vld [vmem:[#allocation3 + $0x68] sm:$0xff]
  %v4045 = vld [vmem:[#allocation3 + $0x70] sm:$0xff]
  %v4046 = vld [vmem:[#allocation3 + $0x78] sm:$0xff]
  %v4047 = vld [vmem:[#allocation3 + $0x80] sm:$0xff]
  %v4048 = vld [vmem:[#allocation3 + $0x88] sm:$0xff]
  %v4049 = vld [vmem:[#allocation3 + $0x90] sm:$0xff]
  %v4050 = vld [vmem:[#allocation3 + $0x98] sm:$0xff]
  %v4051 = vld [vmem:[#allocation3 + $0xa0] sm:$0xff]
  %v4052 = vld [vmem:[#allocation3 + $0xa8] sm:$0xff]
  %v4053 = vld [vmem:[#allocation3 + $0xb0] sm:$0xff]
  %v4054 = vld [vmem:[#allocation3 + $0xb8] sm:$0xff]
  %v4055 = vld [vmem:[#allocation3 + $0xc0] sm:$0xff]
  %v4056 = vld [vmem:[#allocation3 + $0xc8] sm:$0xff]
  %v4057 = vld [vmem:[#allocation3 + $0xd0] sm:$0xff]
  %v4058 = vld [vmem:[#allocation3 + $0xd8] sm:$0xff]
  %v4059 = vld [vmem:[#allocation3 + $0xe0] sm:$0xff]
  %v4060 = vld [vmem:[#allocation3 + $0xe8] sm:$0xff]
  %v4061 = vld [vmem:[#allocation3 + $0xf0] sm:$0xff]
  %v4062 = vld [vmem:[#allocation3 + $0xf8] sm:$0xff]
  %v4063 = vld [vmem:[#allocation3 + $0x100] sm:$0xff]
  %v4064 = vld [vmem:[#allocation3 + $0x108] sm:$0xff]
  %v4065 = vld [vmem:[#allocation3 + $0x110] sm:$0xff]
  %v4066 = vld [vmem:[#allocation3 + $0x118] sm:$0xff]
  %v4067 = vld [vmem:[#allocation3 + $0x120] sm:$0xff]
  %v4068 = vld [vmem:[#allocation3 + $0x128] sm:$0xff]
  %v4069 = vld [vmem:[#allocation3 + $0x130] sm:$0xff]
  %v4070 = vld [vmem:[#allocation3 + $0x138] sm:$0xff]
  %v4071 = vld [vmem:[#allocation3 + $0x140] sm:$0xff]
  %v4072 = vld [vmem:[#allocation3 + $0x148] sm:$0xff]
  %v4073 = vld [vmem:[#allocation3 + $0x150] sm:$0xff]
  %v4074 = vld [vmem:[#allocation3 + $0x158] sm:$0xff]
  %v4075 = vld [vmem:[#allocation3 + $0x160] sm:$0xff]
  %v4076 = vld [vmem:[#allocation3 + $0x168] sm:$0xff]
  %v4077 = vld [vmem:[#allocation3 + $0x170] sm:$0xff]
  %v4078 = vld [vmem:[#allocation3 + $0x178] sm:$0xff]
  %v4079 = vld [vmem:[#allocation3 + $0x180] sm:$0xff]
  %v4080 = vld [vmem:[#allocation3 + $0x188] sm:$0xff]
  %v4081 = vld [vmem:[#allocation3 + $0x190] sm:$0xff]
  %v4082 = vld [vmem:[#allocation3 + $0x198] sm:$0xff]
  %v4083 = vld [vmem:[#allocation3 + $0x1a0] sm:$0xff]
  %v4084 = vld [vmem:[#allocation3 + $0x1a8] sm:$0xff]
  %v4085 = vld [vmem:[#allocation3 + $0x1b0] sm:$0xff]
  %v4086 = vld [vmem:[#allocation3 + $0x1b8] sm:$0xff]
  %v4087 = vld [vmem:[#allocation3 + $0x1c0] sm:$0xff]
  %v4088 = vld [vmem:[#allocation3 + $0x1c8] sm:$0xff]
  %v4089 = vld [vmem:[#allocation3 + $0x1d0] sm:$0xff]
  %v4090 = vld [vmem:[#allocation3 + $0x1d8] sm:$0xff]
  %v4091 = vld [vmem:[#allocation3 + $0x1e0] sm:$0xff]
  %v4092 = vld [vmem:[#allocation3 + $0x1e8] sm:$0xff]
  %v4093 = vld [vmem:[#allocation3 + $0x1f0] sm:$0xff]
  %v4094 = vld [vmem:[#allocation3 + $0x1f8] sm:$0xff]
  %v4095 = vld [vmem:[%s3] sm:$0xff]
  %v4096 = vld [vmem:[%s3 + $0x8] sm:$0xff]
  %v4097 = vld [vmem:[%s3 + $0x10] sm:$0xff]
  %v4098 = vld [vmem:[%s3 + $0x18] sm:$0xff]
  %v4099 = vld [vmem:[%s3 + $0x20] sm:$0xf]
  %v4100 = vld [vmem:[%s4] sm:$0x1]
  %v4102 = vlaneseq
  %v4103 = vshrl.u32 %v4102, 7
  %v4104 = vsub.s32 0, %v4103
  %v4105 = vrot.slane %v4100, %v4104
  %vm4107 = vcmask 293888
  %v4109 = vsel %vm4107, %v4031, 0
  %v4112 = vsel %vm4107, %v4032, 0
  %v4115 = vsel %vm4107, %v4033, 0
  %v4118 = vsel %vm4107, %v4034, 0
  %v4121 = vsel %vm4107, %v4035, 0
  %v4124 = vsel %vm4107, %v4036, 0
  %v4127 = vsel %vm4107, %v4037, 0
  %v4130 = vsel %vm4107, %v4038, 0
  %v4133 = vsel %vm4107, %v4039, 0
  %v4136 = vsel %vm4107, %v4040, 0
  %v4139 = vsel %vm4107, %v4041, 0
  %v4142 = vsel %vm4107, %v4042, 0
  %v4145 = vsel %vm4107, %v4043, 0
  %v4148 = vsel %vm4107, %v4044, 0
  %v4151 = vsel %vm4107, %v4045, 0
  %v4154 = vsel %vm4107, %v4046, 0
  %v4157 = vsel %vm4107, %v4047, 0
  %v4160 = vsel %vm4107, %v4048, 0
  %v4163 = vsel %vm4107, %v4049, 0
  %v4166 = vsel %vm4107, %v4050, 0
  %v4169 = vsel %vm4107, %v4051, 0
  %v4172 = vsel %vm4107, %v4052, 0
  %v4175 = vsel %vm4107, %v4053, 0
  %v4178 = vsel %vm4107, %v4054, 0
  %v4181 = vsel %vm4107, %v4055, 0
  %v4184 = vsel %vm4107, %v4056, 0
  %v4187 = vsel %vm4107, %v4057, 0
  %v4190 = vsel %vm4107, %v4058, 0
  %v4193 = vsel %vm4107, %v4059, 0
  %v4196 = vsel %vm4107, %v4060, 0
  %v4199 = vsel %vm4107, %v4061, 0
  %v4202 = vsel %vm4107, %v4062, 0
  %v4205 = vsel %vm4107, %v4063, 0
  %v4208 = vsel %vm4107, %v4064, 0
  %v4211 = vsel %vm4107, %v4065, 0
  %v4214 = vsel %vm4107, %v4066, 0
  %v4217 = vsel %vm4107, %v4067, 0
  %v4220 = vsel %vm4107, %v4068, 0
  %v4223 = vsel %vm4107, %v4069, 0
  %v4226 = vsel %vm4107, %v4070, 0
  %v4229 = vsel %vm4107, %v4071, 0
  %v4232 = vsel %vm4107, %v4072, 0
  %v4235 = vsel %vm4107, %v4073, 0
  %v4238 = vsel %vm4107, %v4074, 0
  %v4241 = vsel %vm4107, %v4075, 0
  %v4244 = vsel %vm4107, %v4076, 0
  %v4247 = vsel %vm4107, %v4077, 0
  %v4250 = vsel %vm4107, %v4078, 0
  %v4253 = vsel %vm4107, %v4079, 0
  %v4256 = vsel %vm4107, %v4080, 0
  %v4259 = vsel %vm4107, %v4081, 0
  %v4262 = vsel %vm4107, %v4082, 0
  %v4265 = vsel %vm4107, %v4083, 0
  %v4268 = vsel %vm4107, %v4084, 0
  %v4271 = vsel %vm4107, %v4085, 0
  %v4274 = vsel %vm4107, %v4086, 0
  %v4277 = vsel %vm4107, %v4087, 0
  %v4280 = vsel %vm4107, %v4088, 0
  %v4283 = vsel %vm4107, %v4089, 0
  %v4286 = vsel %vm4107, %v4090, 0
  %v4289 = vsel %vm4107, %v4091, 0
  %v4292 = vsel %vm4107, %v4092, 0
  %v4295 = vsel %vm4107, %v4093, 0
  %v4298 = vsel %vm4107, %v4094, 0
  %vm4300 = vcmask 1043456
  %v4302 = vsel %vm4300, %v4099, 0
  %4304 = vmatprep.subr.mxu0 0.0
  %4305 = vmatpush1.msra.mxu0 %v4095
  %4306 = vmatprep.subr.mxu0 0.0
  %4307 = vmatpush1.msra.mxu0 %v4096
  %4308 = vmatprep.subr.mxu0 0.0
  %4309 = vmatpush1.msra.mxu0 %v4097
  %4310 = vmatprep.subr.mxu0 0.0
  %4311 = vmatpush1.msra.mxu0 %v4098
  %4312 = vmatprep.subr.mxu0 0.0
  %4313 = vmatpush1.msra.mxu0 %v4302
  %4314 = vmatprep.subr.mxu0 0.0
  %4315 = vmatpush1.msra.mxu0 0.0
  %4316 = vmatprep.subr.mxu0 0.0
  %4317 = vmatpush1.msra.mxu0 0.0
  %4318 = vmatprep.subr.mxu0 0.0
  %4319 = vmatpush1.msra.mxu0 0.0
  %4320 = vmatprep.subr.mxu0 0.0
  %4321 = vmatpush1.msra.mxu0 0.0
  %4322 = vmatprep.subr.mxu0 0.0
  %4323 = vmatpush1.msra.mxu0 0.0
  %4324 = vmatprep.subr.mxu0 0.0
  %4325 = vmatpush1.msra.mxu0 0.0
  %4326 = vmatprep.subr.mxu0 0.0
  %4327 = vmatpush1.msra.mxu0 0.0
  %4328 = vmatprep.subr.mxu0 0.0
  %4329 = vmatpush1.msra.mxu0 0.0
  %4330 = vmatprep.subr.mxu0 0.0
  %4331 = vmatpush1.msra.mxu0 0.0
  %4332 = vmatprep.subr.mxu0 0.0
  %4333 = vmatpush1.msra.mxu0 0.0
  %4334 = vmatprep.subr.mxu0 0.0
  %4335 = vmatpush1.msra.mxu0 0.0
  %4336 = vmatprep.subr.mxu0 0.0
  %4337 = vmatpush1.msra.mxu0 0.0
  %4338 = vmatprep.subr.mxu0 0.0
  %4339 = vmatpush1.msra.mxu0 0.0
  %4340 = vmatprep.subr.mxu0 0.0
  %4341 = vmatpush1.msra.mxu0 0.0
  %4342 = vmatprep.subr.mxu0 0.0
  %4343 = vmatpush1.msra.mxu0 0.0
  %4344 = vmatprep.subr.mxu0 0.0
  %4345 = vmatpush1.msra.mxu0 0.0
  %4346 = vmatprep.subr.mxu0 0.0
  %4347 = vmatpush1.msra.mxu0 0.0
  %4348 = vmatprep.subr.mxu0 0.0
  %4349 = vmatpush1.msra.mxu0 0.0
  %4350 = vmatprep.subr.mxu0 0.0
  %4351 = vmatpush1.msra.mxu0 0.0
  %4352 = vmatprep.subr.mxu0 0.0
  %4353 = vmatpush1.msra.mxu0 0.0
  %4354 = vmatprep.subr.mxu0 0.0
  %4355 = vmatpush1.msra.mxu0 0.0
  %4356 = vmatprep.subr.mxu0 0.0
  %4357 = vmatpush1.msra.mxu0 0.0
  %4358 = vmatprep.subr.mxu0 0.0
  %4359 = vmatpush1.msra.mxu0 0.0
  %4360 = vmatprep.subr.mxu0 0.0
  %4361 = vmatpush1.msra.mxu0 0.0
  %4362 = vmatprep.subr.mxu0 0.0
  %4363 = vmatpush1.msra.mxu0 0.0
  %4364 = vmatprep.subr.mxu0 0.0
  %4365 = vmatpush1.msra.mxu0 0.0
  %4366 = vmatprep.subr.mxu0 0.0
  %4367 = vmatpush1.msra.mxu0 0.0
  %4368 = vmatprep.mubr.f32.mxu0 0.0
  %4369 = vmatmul.mubr.f32.gmra.mrb[0].mxu0 %v4109
  %v4370 = vpop.f32.mrb[0].mxu0
  %v4371 = vadd.f32 %v4105, %v4370
  %v4372 = vpop.f32.mrb[0].mxu0
  %4373 = vmatprep.mubr.f32.mxu0 0.0
  %4374 = vmatmul.mubr.f32.gmra.mrb[0].mxu0 %v4112
  %v4375 = vpop.f32.mrb[0].mxu0
  %v4376 = vadd.f32 %v4105, %v4375
  %v4377 = vpop.f32.mrb[0].mxu0
  %4378 = vmatprep.mubr.f32.mxu0 0.0
  %4379 = vmatmul.mubr.f32.gmra.mrb[0].mxu0 %v4115
  %v4380 = vpop.f32.mrb[0].mxu0
  %v4381 = vadd.f32 %v4105, %v4380
  %v4382 = vpop.f32.mrb[0].mxu0
  %4383 = vmatprep.mubr.f32.mxu0 0.0
  %4384 = vmatmul.mubr.f32.gmra.mrb[0].mxu0 %v4118
  %v4385 = vpop.f32.mrb[0].mxu0
  %v4386 = vadd.f32 %v4105, %v4385
  %v4387 = vpop.f32.mrb[0].mxu0
  %4388 = vmatprep.mubr.f32.mxu0 0.0
  %4389 = vmatmul.mubr.f32.gmra.mrb[0].mxu0 %v4121
  %v4390 = vpop.f32.mrb[0].mxu0
  %v4391 = vadd.f32 %v4105, %v4390
  %v4392 = vpop.f32.mrb[0].mxu0
  %4393 = vmatprep.mubr.f32.mxu0 0.0
  %4394 = vmatmul.mubr.f32.gmra.mrb[0].mxu0 %v4124
  %v4395 = vpop.f32.mrb[0].mxu0
  %v4396 = vadd.f32 %v4105, %v4395
  %v4397 = vpop.f32.mrb[0].mxu0
  %4398 = vmatprep.mubr.f32.mxu0 0.0
  %4399 = vmatmul.mubr.f32.gmra.mrb[0].mxu0 %v4127
  %v4400 = vpop.f32.mrb[0].mxu0
  %v4401 = vadd.f32 %v4105, %v4400
  %v4402 = vpop.f32.mrb[0].mxu0
  %4403 = vmatprep.mubr.f32.mxu0 0.0
  %4404 = vmatmul.mubr.f32.gmra.mrb[0].mxu0 %v4130
  %v4405 = vpop.f32.mrb[0].mxu0
  %v4406 = vadd.f32 %v4105, %v4405
  %v4407 = vpop.f32.mrb[0].mxu0
  %4408 = vmatprep.mubr.f32.mxu0 0.0
  %4409 = vmatmul.mubr.f32.gmra.mrb[0].mxu0 %v4133
  %v4410 = vpop.f32.mrb[0].mxu0
  %v4411 = vadd.f32 %v4105, %v4410
  %v4412 = vpop.f32.mrb[0].mxu0
  %4413 = vmatprep.mubr.f32.mxu0 0.0
  %4414 = vmatmul.mubr.f32.gmra.mrb[0].mxu0 %v4136
  %v4415 = vpop.f32.mrb[0].mxu0
  %v4416 = vadd.f32 %v4105, %v4415
  %v4417 = vpop.f32.mrb[0].mxu0
  %4418 = vmatprep.mubr.f32.mxu0 0.0
  %4419 = vmatmul.mubr.f32.gmra.mrb[0].mxu0 %v4139
  %v4420 = vpop.f32.mrb[0].mxu0
  %v4421 = vadd.f32 %v4105, %v4420
  %v4422 = vpop.f32.mrb[0].mxu0
  %4423 = vmatprep.mubr.f32.mxu0 0.0
  %4424 = vmatmul.mubr.f32.gmra.mrb[0].mxu0 %v4142
  %v4425 = vpop.f32.mrb[0].mxu0
  %v4426 = vadd.f32 %v4105, %v4425
  %v4427 = vpop.f32.mrb[0].mxu0
  %4428 = vmatprep.mubr.f32.mxu0 0.0
  %4429 = vmatmul.mubr.f32.gmra.mrb[0].mxu0 %v4145
  %v4430 = vpop.f32.mrb[0].mxu0
  %v4431 = vadd.f32 %v4105, %v4430
  %v4432 = vpop.f32.mrb[0].mxu0
  %4433 = vmatprep.mubr.f32.mxu0 0.0
  %4434 = vmatmul.mubr.f32.gmra.mrb[0].mxu0 %v4148
  %v4435 = vpop.f32.mrb[0].mxu0
  %v4436 = vadd.f32 %v4105, %v4435
  %v4437 = vpop.f32.mrb[0].mxu0
  %4438 = vmatprep.mubr.f32.mxu0 0.0
  %4439 = vmatmul.mubr.f32.gmra.mrb[0].mxu0 %v4151
  %v4440 = vpop.f32.mrb[0].mxu0
  %v4441 = vadd.f32 %v4105, %v4440
  %v4442 = vpop.f32.mrb[0].mxu0
  %4443 = vmatprep.mubr.f32.mxu0 0.0
  %4444 = vmatmul.mubr.f32.gmra.mrb[0].mxu0 %v4154
  %v4445 = vpop.f32.mrb[0].mxu0
  %v4446 = vadd.f32 %v4105, %v4445
  %v4447 = vpop.f32.mrb[0].mxu0
  %4448 = vmatprep.mubr.f32.mxu0 0.0
  %4449 = vmatmul.mubr.f32.gmra.mrb[0].mxu0 %v4157
  %v4450 = vpop.f32.mrb[0].mxu0
  %v4451 = vadd.f32 %v4105, %v4450
  %v4452 = vpop.f32.mrb[0].mxu0
  %4453 = vmatprep.mubr.f32.mxu0 0.0
  %4454 = vmatmul.mubr.f32.gmra.mrb[0].mxu0 %v4160
  %v4455 = vpop.f32.mrb[0].mxu0
  %v4456 = vadd.f32 %v4105, %v4455
  %v4457 = vpop.f32.mrb[0].mxu0
  %4458 = vmatprep.mubr.f32.mxu0 0.0
  %4459 = vmatmul.mubr.f32.gmra.mrb[0].mxu0 %v4163
  %v4460 = vpop.f32.mrb[0].mxu0
  %v4461 = vadd.f32 %v4105, %v4460
  %v4462 = vpop.f32.mrb[0].mxu0
  %4463 = vmatprep.mubr.f32.mxu0 0.0
  %4464 = vmatmul.mubr.f32.gmra.mrb[0].mxu0 %v4166
  %v4465 = vpop.f32.mrb[0].mxu0
  %v4466 = vadd.f32 %v4105, %v4465
  %v4467 = vpop.f32.mrb[0].mxu0
  %4468 = vmatprep.mubr.f32.mxu0 0.0
  %4469 = vmatmul.mubr.f32.gmra.mrb[0].mxu0 %v4169
  %v4470 = vpop.f32.mrb[0].mxu0
  %v4471 = vadd.f32 %v4105, %v4470
  %v4472 = vpop.f32.mrb[0].mxu0
  %4473 = vmatprep.mubr.f32.mxu0 0.0
  %4474 = vmatmul.mubr.f32.gmra.mrb[0].mxu0 %v4172
  %v4475 = vpop.f32.mrb[0].mxu0
  %v4476 = vadd.f32 %v4105, %v4475
  %v4477 = vpop.f32.mrb[0].mxu0
  %4478 = vmatprep.mubr.f32.mxu0 0.0
  %4479 = vmatmul.mubr.f32.gmra.mrb[0].mxu0 %v4175
  %v4480 = vpop.f32.mrb[0].mxu0
  %v4481 = vadd.f32 %v4105, %v4480
  %v4482 = vpop.f32.mrb[0].mxu0
  %4483 = vmatprep.mubr.f32.mxu0 0.0
  %4484 = vmatmul.mubr.f32.gmra.mrb[0].mxu0 %v4178
  %v4485 = vpop.f32.mrb[0].mxu0
  %v4486 = vadd.f32 %v4105, %v4485
  %v4487 = vpop.f32.mrb[0].mxu0
  %4488 = vmatprep.mubr.f32.mxu0 0.0
  %4489 = vmatmul.mubr.f32.gmra.mrb[0].mxu0 %v4181
  %v4490 = vpop.f32.mrb[0].mxu0
  %v4491 = vadd.f32 %v4105, %v4490
  %v4492 = vpop.f32.mrb[0].mxu0
  %4493 = vmatprep.mubr.f32.mxu0 0.0
  %4494 = vmatmul.mubr.f32.gmra.mrb[0].mxu0 %v4184
  %v4495 = vpop.f32.mrb[0].mxu0
  %v4496 = vadd.f32 %v4105, %v4495
  %v4497 = vpop.f32.mrb[0].mxu0
  %4498 = vmatprep.mubr.f32.mxu0 0.0
  %4499 = vmatmul.mubr.f32.gmra.mrb[0].mxu0 %v4187
  %v4500 = vpop.f32.mrb[0].mxu0
  %v4501 = vadd.f32 %v4105, %v4500
  %v4502 = vpop.f32.mrb[0].mxu0
  %4503 = vmatprep.mubr.f32.mxu0 0.0
  %4504 = vmatmul.mubr.f32.gmra.mrb[0].mxu0 %v4190
  %v4505 = vpop.f32.mrb[0].mxu0
  %v4506 = vadd.f32 %v4105, %v4505
  %v4507 = vpop.f32.mrb[0].mxu0
  %4508 = vmatprep.mubr.f32.mxu0 0.0
  %4509 = vmatmul.mubr.f32.gmra.mrb[0].mxu0 %v4193
  %v4510 = vpop.f32.mrb[0].mxu0
  %v4511 = vadd.f32 %v4105, %v4510
  %v4512 = vpop.f32.mrb[0].mxu0
  %4513 = vmatprep.mubr.f32.mxu0 0.0
  %4514 = vmatmul.mubr.f32.gmra.mrb[0].mxu0 %v4196
  %v4515 = vpop.f32.mrb[0].mxu0
  %v4516 = vadd.f32 %v4105, %v4515
  %v4517 = vpop.f32.mrb[0].mxu0
  %4518 = vmatprep.mubr.f32.mxu0 0.0
  %4519 = vmatmul.mubr.f32.gmra.mrb[0].mxu0 %v4199
  %v4520 = vpop.f32.mrb[0].mxu0
  %v4521 = vadd.f32 %v4105, %v4520
  %v4522 = vpop.f32.mrb[0].mxu0
  %4523 = vmatprep.mubr.f32.mxu0 0.0
  %4524 = vmatmul.mubr.f32.gmra.mrb[0].mxu0 %v4202
  %v4525 = vpop.f32.mrb[0].mxu0
  %v4526 = vadd.f32 %v4105, %v4525
  %v4527 = vpop.f32.mrb[0].mxu0
  %4528 = vmatprep.mubr.f32.mxu0 0.0
  %4529 = vmatmul.mubr.f32.gmra.mrb[0].mxu0 %v4205
  %v4530 = vpop.f32.mrb[0].mxu0
  %v4531 = vadd.f32 %v4105, %v4530
  %v4532 = vpop.f32.mrb[0].mxu0
  %4533 = vmatprep.mubr.f32.mxu0 0.0
  %4534 = vmatmul.mubr.f32.gmra.mrb[0].mxu0 %v4208
  %v4535 = vpop.f32.mrb[0].mxu0
  %v4536 = vadd.f32 %v4105, %v4535
  %v4537 = vpop.f32.mrb[0].mxu0
  %4538 = vmatprep.mubr.f32.mxu0 0.0
  %4539 = vmatmul.mubr.f32.gmra.mrb[0].mxu0 %v4211
  %v4540 = vpop.f32.mrb[0].mxu0
  %v4541 = vadd.f32 %v4105, %v4540
  %v4542 = vpop.f32.mrb[0].mxu0
  %4543 = vmatprep.mubr.f32.mxu0 0.0
  %4544 = vmatmul.mubr.f32.gmra.mrb[0].mxu0 %v4214
  %v4545 = vpop.f32.mrb[0].mxu0
  %v4546 = vadd.f32 %v4105, %v4545
  %v4547 = vpop.f32.mrb[0].mxu0
  %4548 = vmatprep.mubr.f32.mxu0 0.0
  %4549 = vmatmul.mubr.f32.gmra.mrb[0].mxu0 %v4217
  %v4550 = vpop.f32.mrb[0].mxu0
  %v4551 = vadd.f32 %v4105, %v4550
  %v4552 = vpop.f32.mrb[0].mxu0
  %4553 = vmatprep.mubr.f32.mxu0 0.0
  %4554 = vmatmul.mubr.f32.gmra.mrb[0].mxu0 %v4220
  %v4555 = vpop.f32.mrb[0].mxu0
  %v4556 = vadd.f32 %v4105, %v4555
  %v4557 = vpop.f32.mrb[0].mxu0
  %4558 = vmatprep.mubr.f32.mxu0 0.0
  %4559 = vmatmul.mubr.f32.gmra.mrb[0].mxu0 %v4223
  %v4560 = vpop.f32.mrb[0].mxu0
  %v4561 = vadd.f32 %v4105, %v4560
  %v4562 = vpop.f32.mrb[0].mxu0
  %4563 = vmatprep.mubr.f32.mxu0 0.0
  %4564 = vmatmul.mubr.f32.gmra.mrb[0].mxu0 %v4226
  %v4565 = vpop.f32.mrb[0].mxu0
  %v4566 = vadd.f32 %v4105, %v4565
  %v4567 = vpop.f32.mrb[0].mxu0
  %4568 = vmatprep.mubr.f32.mxu0 0.0
  %4569 = vmatmul.mubr.f32.gmra.mrb[0].mxu0 %v4229
  %v4570 = vpop.f32.mrb[0].mxu0
  %v4571 = vadd.f32 %v4105, %v4570
  %v4572 = vpop.f32.mrb[0].mxu0
  %4573 = vmatprep.mubr.f32.mxu0 0.0
  %4574 = vmatmul.mubr.f32.gmra.mrb[0].mxu0 %v4232
  %v4575 = vpop.f32.mrb[0].mxu0
  %v4576 = vadd.f32 %v4105, %v4575
  %v4577 = vpop.f32.mrb[0].mxu0
  %4578 = vmatprep.mubr.f32.mxu0 0.0
  %4579 = vmatmul.mubr.f32.gmra.mrb[0].mxu0 %v4235
  %v4580 = vpop.f32.mrb[0].mxu0
  %v4581 = vadd.f32 %v4105, %v4580
  %v4582 = vpop.f32.mrb[0].mxu0
  %4583 = vmatprep.mubr.f32.mxu0 0.0
  %4584 = vmatmul.mubr.f32.gmra.mrb[0].mxu0 %v4238
  %v4585 = vpop.f32.mrb[0].mxu0
  %v4586 = vadd.f32 %v4105, %v4585
  %v4587 = vpop.f32.mrb[0].mxu0
  %4588 = vmatprep.mubr.f32.mxu0 0.0
  %4589 = vmatmul.mubr.f32.gmra.mrb[0].mxu0 %v4241
  %v4590 = vpop.f32.mrb[0].mxu0
  %v4591 = vadd.f32 %v4105, %v4590
  %v4592 = vpop.f32.mrb[0].mxu0
  %4593 = vmatprep.mubr.f32.mxu0 0.0
  %4594 = vmatmul.mubr.f32.gmra.mrb[0].mxu0 %v4244
  %v4595 = vpop.f32.mrb[0].mxu0
  %v4596 = vadd.f32 %v4105, %v4595
  %v4597 = vpop.f32.mrb[0].mxu0
  %4598 = vmatprep.mubr.f32.mxu0 0.0
  %4599 = vmatmul.mubr.f32.gmra.mrb[0].mxu0 %v4247
  %v4600 = vpop.f32.mrb[0].mxu0
  %v4601 = vadd.f32 %v4105, %v4600
  %v4602 = vpop.f32.mrb[0].mxu0
  %4603 = vmatprep.mubr.f32.mxu0 0.0
  %4604 = vmatmul.mubr.f32.gmra.mrb[0].mxu0 %v4250
  %v4605 = vpop.f32.mrb[0].mxu0
  %v4606 = vadd.f32 %v4105, %v4605
  %v4607 = vpop.f32.mrb[0].mxu0
  %4608 = vmatprep.mubr.f32.mxu0 0.0
  %4609 = vmatmul.mubr.f32.gmra.mrb[0].mxu0 %v4253
  %v4610 = vpop.f32.mrb[0].mxu0
  %v4611 = vadd.f32 %v4105, %v4610
  %v4612 = vpop.f32.mrb[0].mxu0
  %4613 = vmatprep.mubr.f32.mxu0 0.0
  %4614 = vmatmul.mubr.f32.gmra.mrb[0].mxu0 %v4256
  %v4615 = vpop.f32.mrb[0].mxu0
  %v4616 = vadd.f32 %v4105, %v4615
  %v4617 = vpop.f32.mrb[0].mxu0
  %4618 = vmatprep.mubr.f32.mxu0 0.0
  %4619 = vmatmul.mubr.f32.gmra.mrb[0].mxu0 %v4259
  %v4620 = vpop.f32.mrb[0].mxu0
  %v4621 = vadd.f32 %v4105, %v4620
  %v4622 = vpop.f32.mrb[0].mxu0
  %4623 = vmatprep.mubr.f32.mxu0 0.0
  %4624 = vmatmul.mubr.f32.gmra.mrb[0].mxu0 %v4262
  %v4625 = vpop.f32.mrb[0].mxu0
  %v4626 = vadd.f32 %v4105, %v4625
  %v4627 = vpop.f32.mrb[0].mxu0
  %4628 = vmatprep.mubr.f32.mxu0 0.0
  %4629 = vmatmul.mubr.f32.gmra.mrb[0].mxu0 %v4265
  %v4630 = vpop.f32.mrb[0].mxu0
  %v4631 = vadd.f32 %v4105, %v4630
  %v4632 = vpop.f32.mrb[0].mxu0
  %4633 = vmatprep.mubr.f32.mxu0 0.0
  %4634 = vmatmul.mubr.f32.gmra.mrb[0].mxu0 %v4268
  %v4635 = vpop.f32.mrb[0].mxu0
  %v4636 = vadd.f32 %v4105, %v4635
  %v4637 = vpop.f32.mrb[0].mxu0
  %4638 = vmatprep.mubr.f32.mxu0 0.0
  %4639 = vmatmul.mubr.f32.gmra.mrb[0].mxu0 %v4271
  %v4640 = vpop.f32.mrb[0].mxu0
  %v4641 = vadd.f32 %v4105, %v4640
  %v4642 = vpop.f32.mrb[0].mxu0
  %4643 = vmatprep.mubr.f32.mxu0 0.0
  %4644 = vmatmul.mubr.f32.gmra.mrb[0].mxu0 %v4274
  %v4645 = vpop.f32.mrb[0].mxu0
  %v4646 = vadd.f32 %v4105, %v4645
  %v4647 = vpop.f32.mrb[0].mxu0
  %4648 = vmatprep.mubr.f32.mxu0 0.0
  %4649 = vmatmul.mubr.f32.gmra.mrb[0].mxu0 %v4277
  %v4650 = vpop.f32.mrb[0].mxu0
  %v4651 = vadd.f32 %v4105, %v4650
  %v4652 = vpop.f32.mrb[0].mxu0
  %4653 = vmatprep.mubr.f32.mxu0 0.0
  %4654 = vmatmul.mubr.f32.gmra.mrb[0].mxu0 %v4280
  %v4655 = vpop.f32.mrb[0].mxu0
  %v4656 = vadd.f32 %v4105, %v4655
  %v4657 = vpop.f32.mrb[0].mxu0
  %4658 = vmatprep.mubr.f32.mxu0 0.0
  %4659 = vmatmul.mubr.f32.gmra.mrb[0].mxu0 %v4283
  %v4660 = vpop.f32.mrb[0].mxu0
  %v4661 = vadd.f32 %v4105, %v4660
  %v4662 = vpop.f32.mrb[0].mxu0
  %4663 = vmatprep.mubr.f32.mxu0 0.0
  %4664 = vmatmul.mubr.f32.gmra.mrb[0].mxu0 %v4286
  %v4665 = vpop.f32.mrb[0].mxu0
  %v4666 = vadd.f32 %v4105, %v4665
  %v4667 = vpop.f32.mrb[0].mxu0
  %4668 = vmatprep.mubr.f32.mxu0 0.0
  %4669 = vmatmul.mubr.f32.gmra.mrb[0].mxu0 %v4289
  %v4670 = vpop.f32.mrb[0].mxu0
  %v4671 = vadd.f32 %v4105, %v4670
  %v4672 = vpop.f32.mrb[0].mxu0
  %4673 = vmatprep.mubr.f32.mxu0 0.0
  %4674 = vmatmul.mubr.f32.gmra.mrb[0].mxu0 %v4292
  %v4675 = vpop.f32.mrb[0].mxu0
  %v4676 = vadd.f32 %v4105, %v4675
  %v4677 = vpop.f32.mrb[0].mxu0
  %4678 = vmatprep.mubr.f32.mxu0 0.0
  %4679 = vmatmul.mubr.f32.gmra.mrb[0].mxu0 %v4295
  %v4680 = vpop.f32.mrb[0].mxu0
  %v4681 = vadd.f32 %v4105, %v4680
  %v4682 = vpop.f32.mrb[0].mxu0
  %4683 = vmatprep.mubr.f32.mxu0 0.0
  %4684 = vmatmul.mubr.f32.gmra.mrb[0].mxu0 %v4298
  %v4685 = vpop.f32.mrb[0].mxu0
  %v4686 = vadd.f32 %v4105, %v4685
  %v4687 = vpop.f32.mrb[0].mxu0
  %4688 = vdwg.mxu0
  %v4689 = vmax.f32 %v4371, 0.0
  %v4690 = vmax.f32 %v4376, 0.0
  %v4691 = vmax.f32 %v4381, 0.0
  %v4692 = vmax.f32 %v4386, 0.0
  %v4693 = vmax.f32 %v4391, 0.0
  %v4694 = vmax.f32 %v4396, 0.0
  %v4695 = vmax.f32 %v4401, 0.0
  %v4696 = vmax.f32 %v4406, 0.0
  %v4697 = vmax.f32 %v4411, 0.0
  %v4698 = vmax.f32 %v4416, 0.0
  %v4699 = vmax.f32 %v4421, 0.0
  %v4700 = vmax.f32 %v4426, 0.0
  %v4701 = vmax.f32 %v4431, 0.0
  %v4702 = vmax.f32 %v4436, 0.0
  %v4703 = vmax.f32 %v4441, 0.0
  %v4704 = vmax.f32 %v4446, 0.0
  %v4705 = vmax.f32 %v4451, 0.0
  %v4706 = vmax.f32 %v4456, 0.0
  %v4707 = vmax.f32 %v4461, 0.0
  %v4708 = vmax.f32 %v4466, 0.0
  %v4709 = vmax.f32 %v4471, 0.0
  %v4710 = vmax.f32 %v4476, 0.0
  %v4711 = vmax.f32 %v4481, 0.0
  %v4712 = vmax.f32 %v4486, 0.0
  %v4713 = vmax.f32 %v4491, 0.0
  %v4714 = vmax.f32 %v4496, 0.0
  %v4715 = vmax.f32 %v4501, 0.0
  %v4716 = vmax.f32 %v4506, 0.0
  %v4717 = vmax.f32 %v4511, 0.0
  %v4718 = vmax.f32 %v4516, 0.0
  %v4719 = vmax.f32 %v4521, 0.0
  %v4720 = vmax.f32 %v4526, 0.0
  %v4721 = vmax.f32 %v4531, 0.0
  %v4722 = vmax.f32 %v4536, 0.0
  %v4723 = vmax.f32 %v4541, 0.0
  %v4724 = vmax.f32 %v4546, 0.0
  %v4725 = vmax.f32 %v4551, 0.0
  %v4726 = vmax.f32 %v4556, 0.0
  %v4727 = vmax.f32 %v4561, 0.0
  %v4728 = vmax.f32 %v4566, 0.0
  %v4729 = vmax.f32 %v4571, 0.0
  %v4730 = vmax.f32 %v4576, 0.0
  %v4731 = vmax.f32 %v4581, 0.0
  %v4732 = vmax.f32 %v4586, 0.0
  %v4733 = vmax.f32 %v4591, 0.0
  %v4734 = vmax.f32 %v4596, 0.0
  %v4735 = vmax.f32 %v4601, 0.0
  %v4736 = vmax.f32 %v4606, 0.0
  %v4737 = vmax.f32 %v4611, 0.0
  %v4738 = vmax.f32 %v4616, 0.0
  %v4739 = vmax.f32 %v4621, 0.0
  %v4740 = vmax.f32 %v4626, 0.0
  %v4741 = vmax.f32 %v4631, 0.0
  %v4742 = vmax.f32 %v4636, 0.0
  %v4743 = vmax.f32 %v4641, 0.0
  %v4744 = vmax.f32 %v4646, 0.0
  %v4745 = vmax.f32 %v4651, 0.0
  %v4746 = vmax.f32 %v4656, 0.0
  %v4747 = vmax.f32 %v4661, 0.0
  %v4748 = vmax.f32 %v4666, 0.0
  %v4749 = vmax.f32 %v4671, 0.0
  %v4750 = vmax.f32 %v4676, 0.0
  %v4751 = vmax.f32 %v4681, 0.0
  %v4752 = vmax.f32 %v4686, 0.0
  %v4753 = vld [vmem:[%s5] sm:$0xf]
  %v4754 = vld [vmem:[%s6] sm:$0x1]
  %v4756 = vlaneseq
  %v4757 = vshrl.u32 %v4756, 7
  %v4758 = vsub.s32 0, %v4757
  %v4759 = vrot.slane %v4754, %v4758
  %v4762 = vsel %vm741, %v4689, 0
  %v4765 = vsel %vm741, %v4690, 0
  %v4768 = vsel %vm741, %v4691, 0
  %v4771 = vsel %vm741, %v4692, 0
  %v4774 = vsel %vm741, %v4693, 0
  %v4777 = vsel %vm741, %v4694, 0
  %v4780 = vsel %vm741, %v4695, 0
  %v4783 = vsel %vm741, %v4696, 0
  %v4786 = vsel %vm741, %v4697, 0
  %v4789 = vsel %vm741, %v4698, 0
  %v4792 = vsel %vm741, %v4699, 0
  %v4795 = vsel %vm741, %v4700, 0
  %v4798 = vsel %vm741, %v4701, 0
  %v4801 = vsel %vm741, %v4702, 0
  %v4804 = vsel %vm741, %v4703, 0
  %v4807 = vsel %vm741, %v4704, 0
  %v4810 = vsel %vm741, %v4705, 0
  %v4813 = vsel %vm741, %v4706, 0
  %v4816 = vsel %vm741, %v4707, 0
  %v4819 = vsel %vm741, %v4708, 0
  %v4822 = vsel %vm741, %v4709, 0
  %v4825 = vsel %vm741, %v4710, 0
  %v4828 = vsel %vm741, %v4711, 0
  %v4831 = vsel %vm741, %v4712, 0
  %v4834 = vsel %vm741, %v4713, 0
  %v4837 = vsel %vm741, %v4714, 0
  %v4840 = vsel %vm741, %v4715, 0
  %v4843 = vsel %vm741, %v4716, 0
  %v4846 = vsel %vm741, %v4717, 0
  %v4849 = vsel %vm741, %v4718, 0
  %v4852 = vsel %vm741, %v4719, 0
  %v4855 = vsel %vm741, %v4720, 0
  %v4858 = vsel %vm741, %v4721, 0
  %v4861 = vsel %vm741, %v4722, 0
  %v4864 = vsel %vm741, %v4723, 0
  %v4867 = vsel %vm741, %v4724, 0
  %v4870 = vsel %vm741, %v4725, 0
  %v4873 = vsel %vm741, %v4726, 0
  %v4876 = vsel %vm741, %v4727, 0
  %v4879 = vsel %vm741, %v4728, 0
  %v4882 = vsel %vm741, %v4729, 0
  %v4885 = vsel %vm741, %v4730, 0
  %v4888 = vsel %vm741, %v4731, 0
  %v4891 = vsel %vm741, %v4732, 0
  %v4894 = vsel %vm741, %v4733, 0
  %v4897 = vsel %vm741, %v4734, 0
  %v4900 = vsel %vm741, %v4735, 0
  %v4903 = vsel %vm741, %v4736, 0
  %v4906 = vsel %vm741, %v4737, 0
  %v4909 = vsel %vm741, %v4738, 0
  %v4912 = vsel %vm741, %v4739, 0
  %v4915 = vsel %vm741, %v4740, 0
  %v4918 = vsel %vm741, %v4741, 0
  %v4921 = vsel %vm741, %v4742, 0
  %v4924 = vsel %vm741, %v4743, 0
  %v4927 = vsel %vm741, %v4744, 0
  %v4930 = vsel %vm741, %v4745, 0
  %v4933 = vsel %vm741, %v4746, 0
  %v4936 = vsel %vm741, %v4747, 0
  %v4939 = vsel %vm741, %v4748, 0
  %v4942 = vsel %vm741, %v4749, 0
  %v4945 = vsel %vm741, %v4750, 0
  %v4948 = vsel %vm741, %v4751, 0
  %v4951 = vsel %vm741, %v4752, 0
  %v4954 = vsel %vm4300, %v4753, 0
  %4956 = vmatprep.subr.mxu0 0.0
  %4957 = vmatpush1.msra.mxu0 %v4954
  %4958 = vmatprep.subr.mxu0 0.0
  %4959 = vmatpush1.msra.mxu0 0.0
  %4960 = vmatprep.subr.mxu0 0.0
  %4961 = vmatpush1.msra.mxu0 0.0
  %4962 = vmatprep.subr.mxu0 0.0
  %4963 = vmatpush1.msra.mxu0 0.0
  %4964 = vmatprep.subr.mxu0 0.0
  %4965 = vmatpush1.msra.mxu0 0.0
  %4966 = vmatprep.subr.mxu0 0.0
  %4967 = vmatpush1.msra.mxu0 0.0
  %4968 = vmatprep.subr.mxu0 0.0
  %4969 = vmatpush1.msra.mxu0 0.0
  %4970 = vmatprep.subr.mxu0 0.0
  %4971 = vmatpush1.msra.mxu0 0.0
  %4972 = vmatprep.subr.mxu0 0.0
  %4973 = vmatpush1.msra.mxu0 0.0
  %4974 = vmatprep.subr.mxu0 0.0
  %4975 = vmatpush1.msra.mxu0 0.0
  %4976 = vmatprep.subr.mxu0 0.0
  %4977 = vmatpush1.msra.mxu0 0.0
  %4978 = vmatprep.subr.mxu0 0.0
  %4979 = vmatpush1.msra.mxu0 0.0
  %4980 = vmatprep.subr.mxu0 0.0
  %4981 = vmatpush1.msra.mxu0 0.0
  %4982 = vmatprep.subr.mxu0 0.0
  %4983 = vmatpush1.msra.mxu0 0.0
  %4984 = vmatprep.subr.mxu0 0.0
  %4985 = vmatpush1.msra.mxu0 0.0
  %4986 = vmatprep.subr.mxu0 0.0
  %4987 = vmatpush1.msra.mxu0 0.0
  %4988 = vmatprep.subr.mxu0 0.0
  %4989 = vmatpush1.msra.mxu0 0.0
  %4990 = vmatprep.subr.mxu0 0.0
  %4991 = vmatpush1.msra.mxu0 0.0
  %4992 = vmatprep.subr.mxu0 0.0
  %4993 = vmatpush1.msra.mxu0 0.0
  %4994 = vmatprep.subr.mxu0 0.0
  %4995 = vmatpush1.msra.mxu0 0.0
  %4996 = vmatprep.subr.mxu0 0.0
  %4997 = vmatpush1.msra.mxu0 0.0
  %4998 = vmatprep.subr.mxu0 0.0
  %4999 = vmatpush1.msra.mxu0 0.0
  %5000 = vmatprep.subr.mxu0 0.0
  %5001 = vmatpush1.msra.mxu0 0.0
  %5002 = vmatprep.subr.mxu0 0.0
  %5003 = vmatpush1.msra.mxu0 0.0
  %5004 = vmatprep.subr.mxu0 0.0
  %5005 = vmatpush1.msra.mxu0 0.0
  %5006 = vmatprep.subr.mxu0 0.0
  %5007 = vmatpush1.msra.mxu0 0.0
  %5008 = vmatprep.subr.mxu0 0.0
  %5009 = vmatpush1.msra.mxu0 0.0
  %5010 = vmatprep.subr.mxu0 0.0
  %5011 = vmatpush1.msra.mxu0 0.0
  %5012 = vmatprep.subr.mxu0 0.0
  %5013 = vmatpush1.msra.mxu0 0.0
  %5014 = vmatprep.subr.mxu0 0.0
  %5015 = vmatpush1.msra.mxu0 0.0
  %5016 = vmatprep.subr.mxu0 0.0
  %5017 = vmatpush1.msra.mxu0 0.0
  %5018 = vmatprep.subr.mxu0 0.0
  %5019 = vmatpush1.msra.mxu0 0.0
  %5020 = vmatprep.mubr.f32.mxu0 0.0
  %5021 = vmatmul.mubr.f32.gmra.mrb[0].mxu0 %v4762
  %v5022 = vpop.f32.mrb[0].mxu0
  %v5023 = vadd.f32 %v4759, %v5022
  %v5024 = vpop.f32.mrb[0].mxu0
  %5025 = vmatprep.mubr.f32.mxu0 0.0
  %5026 = vmatmul.mubr.f32.gmra.mrb[0].mxu0 %v4765
  %v5027 = vpop.f32.mrb[0].mxu0
  %v5028 = vadd.f32 %v4759, %v5027
  %v5029 = vpop.f32.mrb[0].mxu0
  %5030 = vmatprep.mubr.f32.mxu0 0.0
  %5031 = vmatmul.mubr.f32.gmra.mrb[0].mxu0 %v4768
  %v5032 = vpop.f32.mrb[0].mxu0
  %v5033 = vadd.f32 %v4759, %v5032
  %v5034 = vpop.f32.mrb[0].mxu0
  %5035 = vmatprep.mubr.f32.mxu0 0.0
  %5036 = vmatmul.mubr.f32.gmra.mrb[0].mxu0 %v4771
  %v5037 = vpop.f32.mrb[0].mxu0
  %v5038 = vadd.f32 %v4759, %v5037
  %v5039 = vpop.f32.mrb[0].mxu0
  %5040 = vmatprep.mubr.f32.mxu0 0.0
  %5041 = vmatmul.mubr.f32.gmra.mrb[0].mxu0 %v4774
  %v5042 = vpop.f32.mrb[0].mxu0
  %v5043 = vadd.f32 %v4759, %v5042
  %v5044 = vpop.f32.mrb[0].mxu0
  %5045 = vmatprep.mubr.f32.mxu0 0.0
  %5046 = vmatmul.mubr.f32.gmra.mrb[0].mxu0 %v4777
  %v5047 = vpop.f32.mrb[0].mxu0
  %v5048 = vadd.f32 %v4759, %v5047
  %v5049 = vpop.f32.mrb[0].mxu0
  %5050 = vmatprep.mubr.f32.mxu0 0.0
  %5051 = vmatmul.mubr.f32.gmra.mrb[0].mxu0 %v4780
  %v5052 = vpop.f32.mrb[0].mxu0
  %v5053 = vadd.f32 %v4759, %v5052
  %v5054 = vpop.f32.mrb[0].mxu0
  %5055 = vmatprep.mubr.f32.mxu0 0.0
  %5056 = vmatmul.mubr.f32.gmra.mrb[0].mxu0 %v4783
  %v5057 = vpop.f32.mrb[0].mxu0
  %v5058 = vadd.f32 %v4759, %v5057
  %v5059 = vpop.f32.mrb[0].mxu0
  %5060 = vmatprep.mubr.f32.mxu0 0.0
  %5061 = vmatmul.mubr.f32.gmra.mrb[0].mxu0 %v4786
  %v5062 = vpop.f32.mrb[0].mxu0
  %v5063 = vadd.f32 %v4759, %v5062
  %v5064 = vpop.f32.mrb[0].mxu0
  %5065 = vmatprep.mubr.f32.mxu0 0.0
  %5066 = vmatmul.mubr.f32.gmra.mrb[0].mxu0 %v4789
  %v5067 = vpop.f32.mrb[0].mxu0
  %v5068 = vadd.f32 %v4759, %v5067
  %v5069 = vpop.f32.mrb[0].mxu0
  %5070 = vmatprep.mubr.f32.mxu0 0.0
  %5071 = vmatmul.mubr.f32.gmra.mrb[0].mxu0 %v4792
  %v5072 = vpop.f32.mrb[0].mxu0
  %v5073 = vadd.f32 %v4759, %v5072
  %v5074 = vpop.f32.mrb[0].mxu0
  %5075 = vmatprep.mubr.f32.mxu0 0.0
  %5076 = vmatmul.mubr.f32.gmra.mrb[0].mxu0 %v4795
  %v5077 = vpop.f32.mrb[0].mxu0
  %v5078 = vadd.f32 %v4759, %v5077
  %v5079 = vpop.f32.mrb[0].mxu0
  %5080 = vmatprep.mubr.f32.mxu0 0.0
  %5081 = vmatmul.mubr.f32.gmra.mrb[0].mxu0 %v4798
  %v5082 = vpop.f32.mrb[0].mxu0
  %v5083 = vadd.f32 %v4759, %v5082
  %v5084 = vpop.f32.mrb[0].mxu0
  %5085 = vmatprep.mubr.f32.mxu0 0.0
  %5086 = vmatmul.mubr.f32.gmra.mrb[0].mxu0 %v4801
  %v5087 = vpop.f32.mrb[0].mxu0
  %v5088 = vadd.f32 %v4759, %v5087
  %v5089 = vpop.f32.mrb[0].mxu0
  %5090 = vmatprep.mubr.f32.mxu0 0.0
  %5091 = vmatmul.mubr.f32.gmra.mrb[0].mxu0 %v4804
  %v5092 = vpop.f32.mrb[0].mxu0
  %v5093 = vadd.f32 %v4759, %v5092
  %v5094 = vpop.f32.mrb[0].mxu0
  %5095 = vmatprep.mubr.f32.mxu0 0.0
  %5096 = vmatmul.mubr.f32.gmra.mrb[0].mxu0 %v4807
  %v5097 = vpop.f32.mrb[0].mxu0
  %v5098 = vadd.f32 %v4759, %v5097
  %v5099 = vpop.f32.mrb[0].mxu0
  %5100 = vmatprep.mubr.f32.mxu0 0.0
  %5101 = vmatmul.mubr.f32.gmra.mrb[0].mxu0 %v4810
  %v5102 = vpop.f32.mrb[0].mxu0
  %v5103 = vadd.f32 %v4759, %v5102
  %v5104 = vpop.f32.mrb[0].mxu0
  %5105 = vmatprep.mubr.f32.mxu0 0.0
  %5106 = vmatmul.mubr.f32.gmra.mrb[0].mxu0 %v4813
  %v5107 = vpop.f32.mrb[0].mxu0
  %v5108 = vadd.f32 %v4759, %v5107
  %v5109 = vpop.f32.mrb[0].mxu0
  %5110 = vmatprep.mubr.f32.mxu0 0.0
  %5111 = vmatmul.mubr.f32.gmra.mrb[0].mxu0 %v4816
  %v5112 = vpop.f32.mrb[0].mxu0
  %v5113 = vadd.f32 %v4759, %v5112
  %v5114 = vpop.f32.mrb[0].mxu0
  %5115 = vmatprep.mubr.f32.mxu0 0.0
  %5116 = vmatmul.mubr.f32.gmra.mrb[0].mxu0 %v4819
  %v5117 = vpop.f32.mrb[0].mxu0
  %v5118 = vadd.f32 %v4759, %v5117
  %v5119 = vpop.f32.mrb[0].mxu0
  %5120 = vmatprep.mubr.f32.mxu0 0.0
  %5121 = vmatmul.mubr.f32.gmra.mrb[0].mxu0 %v4822
  %v5122 = vpop.f32.mrb[0].mxu0
  %v5123 = vadd.f32 %v4759, %v5122
  %v5124 = vpop.f32.mrb[0].mxu0
  %5125 = vmatprep.mubr.f32.mxu0 0.0
  %5126 = vmatmul.mubr.f32.gmra.mrb[0].mxu0 %v4825
  %v5127 = vpop.f32.mrb[0].mxu0
  %v5128 = vadd.f32 %v4759, %v5127
  %v5129 = vpop.f32.mrb[0].mxu0
  %5130 = vmatprep.mubr.f32.mxu0 0.0
  %5131 = vmatmul.mubr.f32.gmra.mrb[0].mxu0 %v4828
  %v5132 = vpop.f32.mrb[0].mxu0
  %v5133 = vadd.f32 %v4759, %v5132
  %v5134 = vpop.f32.mrb[0].mxu0
  %5135 = vmatprep.mubr.f32.mxu0 0.0
  %5136 = vmatmul.mubr.f32.gmra.mrb[0].mxu0 %v4831
  %v5137 = vpop.f32.mrb[0].mxu0
  %v5138 = vadd.f32 %v4759, %v5137
  %v5139 = vpop.f32.mrb[0].mxu0
  %5140 = vmatprep.mubr.f32.mxu0 0.0
  %5141 = vmatmul.mubr.f32.gmra.mrb[0].mxu0 %v4834
  %v5142 = vpop.f32.mrb[0].mxu0
  %v5143 = vadd.f32 %v4759, %v5142
  %v5144 = vpop.f32.mrb[0].mxu0
  %5145 = vmatprep.mubr.f32.mxu0 0.0
  %5146 = vmatmul.mubr.f32.gmra.mrb[0].mxu0 %v4837
  %v5147 = vpop.f32.mrb[0].mxu0
  %v5148 = vadd.f32 %v4759, %v5147
  %v5149 = vpop.f32.mrb[0].mxu0
  %5150 = vmatprep.mubr.f32.mxu0 0.0
  %5151 = vmatmul.mubr.f32.gmra.mrb[0].mxu0 %v4840
  %v5152 = vpop.f32.mrb[0].mxu0
  %v5153 = vadd.f32 %v4759, %v5152
  %v5154 = vpop.f32.mrb[0].mxu0
  %5155 = vmatprep.mubr.f32.mxu0 0.0
  %5156 = vmatmul.mubr.f32.gmra.mrb[0].mxu0 %v4843
  %v5157 = vpop.f32.mrb[0].mxu0
  %v5158 = vadd.f32 %v4759, %v5157
  %v5159 = vpop.f32.mrb[0].mxu0
  %5160 = vmatprep.mubr.f32.mxu0 0.0
  %5161 = vmatmul.mubr.f32.gmra.mrb[0].mxu0 %v4846
  %v5162 = vpop.f32.mrb[0].mxu0
  %v5163 = vadd.f32 %v4759, %v5162
  %v5164 = vpop.f32.mrb[0].mxu0
  %5165 = vmatprep.mubr.f32.mxu0 0.0
  %5166 = vmatmul.mubr.f32.gmra.mrb[0].mxu0 %v4849
  %v5167 = vpop.f32.mrb[0].mxu0
  %v5168 = vadd.f32 %v4759, %v5167
  %v5169 = vpop.f32.mrb[0].mxu0
  %5170 = vmatprep.mubr.f32.mxu0 0.0
  %5171 = vmatmul.mubr.f32.gmra.mrb[0].mxu0 %v4852
  %v5172 = vpop.f32.mrb[0].mxu0
  %v5173 = vadd.f32 %v4759, %v5172
  %v5174 = vpop.f32.mrb[0].mxu0
  %5175 = vmatprep.mubr.f32.mxu0 0.0
  %5176 = vmatmul.mubr.f32.gmra.mrb[0].mxu0 %v4855
  %v5177 = vpop.f32.mrb[0].mxu0
  %v5178 = vadd.f32 %v4759, %v5177
  %v5179 = vpop.f32.mrb[0].mxu0
  %5180 = vmatprep.mubr.f32.mxu0 0.0
  %5181 = vmatmul.mubr.f32.gmra.mrb[0].mxu0 %v4858
  %v5182 = vpop.f32.mrb[0].mxu0
  %v5183 = vadd.f32 %v4759, %v5182
  %v5184 = vpop.f32.mrb[0].mxu0
  %5185 = vmatprep.mubr.f32.mxu0 0.0
  %5186 = vmatmul.mubr.f32.gmra.mrb[0].mxu0 %v4861
  %v5187 = vpop.f32.mrb[0].mxu0
  %v5188 = vadd.f32 %v4759, %v5187
  %v5189 = vpop.f32.mrb[0].mxu0
  %5190 = vmatprep.mubr.f32.mxu0 0.0
  %5191 = vmatmul.mubr.f32.gmra.mrb[0].mxu0 %v4864
  %v5192 = vpop.f32.mrb[0].mxu0
  %v5193 = vadd.f32 %v4759, %v5192
  %v5194 = vpop.f32.mrb[0].mxu0
  %5195 = vmatprep.mubr.f32.mxu0 0.0
  %5196 = vmatmul.mubr.f32.gmra.mrb[0].mxu0 %v4867
  %v5197 = vpop.f32.mrb[0].mxu0
  %v5198 = vadd.f32 %v4759, %v5197
  %v5199 = vpop.f32.mrb[0].mxu0
  %5200 = vmatprep.mubr.f32.mxu0 0.0
  %5201 = vmatmul.mubr.f32.gmra.mrb[0].mxu0 %v4870
  %v5202 = vpop.f32.mrb[0].mxu0
  %v5203 = vadd.f32 %v4759, %v5202
  %v5204 = vpop.f32.mrb[0].mxu0
  %5205 = vmatprep.mubr.f32.mxu0 0.0
  %5206 = vmatmul.mubr.f32.gmra.mrb[0].mxu0 %v4873
  %v5207 = vpop.f32.mrb[0].mxu0
  %v5208 = vadd.f32 %v4759, %v5207
  %v5209 = vpop.f32.mrb[0].mxu0
  %5210 = vmatprep.mubr.f32.mxu0 0.0
  %5211 = vmatmul.mubr.f32.gmra.mrb[0].mxu0 %v4876
  %v5212 = vpop.f32.mrb[0].mxu0
  %v5213 = vadd.f32 %v4759, %v5212
  %v5214 = vpop.f32.mrb[0].mxu0
  %5215 = vmatprep.mubr.f32.mxu0 0.0
  %5216 = vmatmul.mubr.f32.gmra.mrb[0].mxu0 %v4879
  %v5217 = vpop.f32.mrb[0].mxu0
  %v5218 = vadd.f32 %v4759, %v5217
  %v5219 = vpop.f32.mrb[0].mxu0
  %5220 = vmatprep.mubr.f32.mxu0 0.0
  %5221 = vmatmul.mubr.f32.gmra.mrb[0].mxu0 %v4882
  %v5222 = vpop.f32.mrb[0].mxu0
  %v5223 = vadd.f32 %v4759, %v5222
  %v5224 = vpop.f32.mrb[0].mxu0
  %5225 = vmatprep.mubr.f32.mxu0 0.0
  %5226 = vmatmul.mubr.f32.gmra.mrb[0].mxu0 %v4885
  %v5227 = vpop.f32.mrb[0].mxu0
  %v5228 = vadd.f32 %v4759, %v5227
  %v5229 = vpop.f32.mrb[0].mxu0
  %5230 = vmatprep.mubr.f32.mxu0 0.0
  %5231 = vmatmul.mubr.f32.gmra.mrb[0].mxu0 %v4888
  %v5232 = vpop.f32.mrb[0].mxu0
  %v5233 = vadd.f32 %v4759, %v5232
  %v5234 = vpop.f32.mrb[0].mxu0
  %5235 = vmatprep.mubr.f32.mxu0 0.0
  %5236 = vmatmul.mubr.f32.gmra.mrb[0].mxu0 %v4891
  %v5237 = vpop.f32.mrb[0].mxu0
  %v5238 = vadd.f32 %v4759, %v5237
  %v5239 = vpop.f32.mrb[0].mxu0
  %5240 = vmatprep.mubr.f32.mxu0 0.0
  %5241 = vmatmul.mubr.f32.gmra.mrb[0].mxu0 %v4894
  %v5242 = vpop.f32.mrb[0].mxu0
  %v5243 = vadd.f32 %v4759, %v5242
  %v5244 = vpop.f32.mrb[0].mxu0
  %5245 = vmatprep.mubr.f32.mxu0 0.0
  %5246 = vmatmul.mubr.f32.gmra.mrb[0].mxu0 %v4897
  %v5247 = vpop.f32.mrb[0].mxu0
  %v5248 = vadd.f32 %v4759, %v5247
  %v5249 = vpop.f32.mrb[0].mxu0
  %5250 = vmatprep.mubr.f32.mxu0 0.0
  %5251 = vmatmul.mubr.f32.gmra.mrb[0].mxu0 %v4900
  %v5252 = vpop.f32.mrb[0].mxu0
  %v5253 = vadd.f32 %v4759, %v5252
  %v5254 = vpop.f32.mrb[0].mxu0
  %5255 = vmatprep.mubr.f32.mxu0 0.0
  %5256 = vmatmul.mubr.f32.gmra.mrb[0].mxu0 %v4903
  %v5257 = vpop.f32.mrb[0].mxu0
  %v5258 = vadd.f32 %v4759, %v5257
  %v5259 = vpop.f32.mrb[0].mxu0
  %5260 = vmatprep.mubr.f32.mxu0 0.0
  %5261 = vmatmul.mubr.f32.gmra.mrb[0].mxu0 %v4906
  %v5262 = vpop.f32.mrb[0].mxu0
  %v5263 = vadd.f32 %v4759, %v5262
  %v5264 = vpop.f32.mrb[0].mxu0
  %5265 = vmatprep.mubr.f32.mxu0 0.0
  %5266 = vmatmul.mubr.f32.gmra.mrb[0].mxu0 %v4909
  %v5267 = vpop.f32.mrb[0].mxu0
  %v5268 = vadd.f32 %v4759, %v5267
  %v5269 = vpop.f32.mrb[0].mxu0
  %5270 = vmatprep.mubr.f32.mxu0 0.0
  %5271 = vmatmul.mubr.f32.gmra.mrb[0].mxu0 %v4912
  %v5272 = vpop.f32.mrb[0].mxu0
  %v5273 = vadd.f32 %v4759, %v5272
  %v5274 = vpop.f32.mrb[0].mxu0
  %5275 = vmatprep.mubr.f32.mxu0 0.0
  %5276 = vmatmul.mubr.f32.gmra.mrb[0].mxu0 %v4915
  %v5277 = vpop.f32.mrb[0].mxu0
  %v5278 = vadd.f32 %v4759, %v5277
  %v5279 = vpop.f32.mrb[0].mxu0
  %5280 = vmatprep.mubr.f32.mxu0 0.0
  %5281 = vmatmul.mubr.f32.gmra.mrb[0].mxu0 %v4918
  %v5282 = vpop.f32.mrb[0].mxu0
  %v5283 = vadd.f32 %v4759, %v5282
  %v5284 = vpop.f32.mrb[0].mxu0
  %5285 = vmatprep.mubr.f32.mxu0 0.0
  %5286 = vmatmul.mubr.f32.gmra.mrb[0].mxu0 %v4921
  %v5287 = vpop.f32.mrb[0].mxu0
  %v5288 = vadd.f32 %v4759, %v5287
  %v5289 = vpop.f32.mrb[0].mxu0
  %5290 = vmatprep.mubr.f32.mxu0 0.0
  %5291 = vmatmul.mubr.f32.gmra.mrb[0].mxu0 %v4924
  %v5292 = vpop.f32.mrb[0].mxu0
  %v5293 = vadd.f32 %v4759, %v5292
  %v5294 = vpop.f32.mrb[0].mxu0
  %5295 = vmatprep.mubr.f32.mxu0 0.0
  %5296 = vmatmul.mubr.f32.gmra.mrb[0].mxu0 %v4927
  %v5297 = vpop.f32.mrb[0].mxu0
  %v5298 = vadd.f32 %v4759, %v5297
  %v5299 = vpop.f32.mrb[0].mxu0
  %5300 = vmatprep.mubr.f32.mxu0 0.0
  %5301 = vmatmul.mubr.f32.gmra.mrb[0].mxu0 %v4930
  %v5302 = vpop.f32.mrb[0].mxu0
  %v5303 = vadd.f32 %v4759, %v5302
  %v5304 = vpop.f32.mrb[0].mxu0
  %5305 = vmatprep.mubr.f32.mxu0 0.0
  %5306 = vmatmul.mubr.f32.gmra.mrb[0].mxu0 %v4933
  %v5307 = vpop.f32.mrb[0].mxu0
  %v5308 = vadd.f32 %v4759, %v5307
  %v5309 = vpop.f32.mrb[0].mxu0
  %5310 = vmatprep.mubr.f32.mxu0 0.0
  %5311 = vmatmul.mubr.f32.gmra.mrb[0].mxu0 %v4936
  %v5312 = vpop.f32.mrb[0].mxu0
  %v5313 = vadd.f32 %v4759, %v5312
  %v5314 = vpop.f32.mrb[0].mxu0
  %5315 = vmatprep.mubr.f32.mxu0 0.0
  %5316 = vmatmul.mubr.f32.gmra.mrb[0].mxu0 %v4939
  %v5317 = vpop.f32.mrb[0].mxu0
  %v5318 = vadd.f32 %v4759, %v5317
  %v5319 = vpop.f32.mrb[0].mxu0
  %5320 = vmatprep.mubr.f32.mxu0 0.0
  %5321 = vmatmul.mubr.f32.gmra.mrb[0].mxu0 %v4942
  %v5322 = vpop.f32.mrb[0].mxu0
  %v5323 = vadd.f32 %v4759, %v5322
  %v5324 = vpop.f32.mrb[0].mxu0
  %5325 = vmatprep.mubr.f32.mxu0 0.0
  %5326 = vmatmul.mubr.f32.gmra.mrb[0].mxu0 %v4945
  %v5327 = vpop.f32.mrb[0].mxu0
  %v5328 = vadd.f32 %v4759, %v5327
  %v5329 = vpop.f32.mrb[0].mxu0
  %5330 = vmatprep.mubr.f32.mxu0 0.0
  %5331 = vmatmul.mubr.f32.gmra.mrb[0].mxu0 %v4948
  %v5332 = vpop.f32.mrb[0].mxu0
  %v5333 = vadd.f32 %v4759, %v5332
  %v5334 = vpop.f32.mrb[0].mxu0
  %5335 = vmatprep.mubr.f32.mxu0 0.0
  %5336 = vmatmul.mubr.f32.gmra.mrb[0].mxu0 %v4951
  %v5337 = vpop.f32.mrb[0].mxu0
  %v5338 = vadd.f32 %v4759, %v5337
  %v5339 = vpop.f32.mrb[0].mxu0
  %5340 = vdwg.mxu0
  %v5341 = vadd.f32 %v5023, %v26
  %v5342 = vadd.f32 %v5028, %v27
  %v5343 = vadd.f32 %v5033, %v28
  %v5344 = vadd.f32 %v5038, %v29
  %v5345 = vadd.f32 %v5043, %v30
  %v5346 = vadd.f32 %v5048, %v31
  %v5347 = vadd.f32 %v5053, %v32
  %v5348 = vadd.f32 %v5058, %v33
  %v5349 = vadd.f32 %v5063, %v34
  %v5350 = vadd.f32 %v5068, %v35
  %v5351 = vadd.f32 %v5073, %v36
  %v5352 = vadd.f32 %v5078, %v37
  %v5353 = vadd.f32 %v5083, %v38
  %v5354 = vadd.f32 %v5088, %v39
  %v5355 = vadd.f32 %v5093, %v40
  %v5356 = vadd.f32 %v5098, %v41
  %v5357 = vadd.f32 %v5103, %v42
  %v5358 = vadd.f32 %v5108, %v43
  %v5359 = vadd.f32 %v5113, %v44
  %v5360 = vadd.f32 %v5118, %v45
  %v5361 = vadd.f32 %v5123, %v46
  %v5362 = vadd.f32 %v5128, %v47
  %v5363 = vadd.f32 %v5133, %v48
  %v5364 = vadd.f32 %v5138, %v49
  %v5365 = vadd.f32 %v5143, %v50
  %v5366 = vadd.f32 %v5148, %v51
  %v5367 = vadd.f32 %v5153, %v52
  %v5368 = vadd.f32 %v5158, %v53
  %v5369 = vadd.f32 %v5163, %v54
  %v5370 = vadd.f32 %v5168, %v55
  %v5371 = vadd.f32 %v5173, %v56
  %v5372 = vadd.f32 %v5178, %v57
  %v5373 = vadd.f32 %v5183, %v58
  %v5374 = vadd.f32 %v5188, %v59
  %v5375 = vadd.f32 %v5193, %v60
  %v5376 = vadd.f32 %v5198, %v61
  %v5377 = vadd.f32 %v5203, %v62
  %v5378 = vadd.f32 %v5208, %v63
  %v5379 = vadd.f32 %v5213, %v64
  %v5380 = vadd.f32 %v5218, %v65
  %v5381 = vadd.f32 %v5223, %v66
  %v5382 = vadd.f32 %v5228, %v67
  %v5383 = vadd.f32 %v5233, %v68
  %v5384 = vadd.f32 %v5238, %v69
  %v5385 = vadd.f32 %v5243, %v70
  %v5386 = vadd.f32 %v5248, %v71
  %v5387 = vadd.f32 %v5253, %v72
  %v5388 = vadd.f32 %v5258, %v73
  %v5389 = vadd.f32 %v5263, %v74
  %v5390 = vadd.f32 %v5268, %v75
  %v5391 = vadd.f32 %v5273, %v76
  %v5392 = vadd.f32 %v5278, %v77
  %v5393 = vadd.f32 %v5283, %v78
  %v5394 = vadd.f32 %v5288, %v79
  %v5395 = vadd.f32 %v5293, %v80
  %v5396 = vadd.f32 %v5298, %v81
  %v5397 = vadd.f32 %v5303, %v82
  %v5398 = vadd.f32 %v5308, %v83
  %v5399 = vadd.f32 %v5313, %v84
  %v5400 = vadd.f32 %v5318, %v85
  %v5401 = vadd.f32 %v5323, %v86
  %v5402 = vadd.f32 %v5328, %v87
  %v5403 = vadd.f32 %v5333, %v88
  %v5404 = vadd.f32 %v5338, %v89
  %v5405 = vmax.f32 %v5341, 0.0
  %v5406 = vmax.f32 %v5342, 0.0
  %v5407 = vmax.f32 %v5343, 0.0
  %v5408 = vmax.f32 %v5344, 0.0
  %v5409 = vmax.f32 %v5345, 0.0
  %v5410 = vmax.f32 %v5346, 0.0
  %v5411 = vmax.f32 %v5347, 0.0
  %v5412 = vmax.f32 %v5348, 0.0
  %v5413 = vmax.f32 %v5349, 0.0
  %v5414 = vmax.f32 %v5350, 0.0
  %v5415 = vmax.f32 %v5351, 0.0
  %v5416 = vmax.f32 %v5352, 0.0
  %v5417 = vmax.f32 %v5353, 0.0
  %v5418 = vmax.f32 %v5354, 0.0
  %v5419 = vmax.f32 %v5355, 0.0
  %v5420 = vmax.f32 %v5356, 0.0
  %v5421 = vmax.f32 %v5357, 0.0
  %v5422 = vmax.f32 %v5358, 0.0
  %v5423 = vmax.f32 %v5359, 0.0
  %v5424 = vmax.f32 %v5360, 0.0
  %v5425 = vmax.f32 %v5361, 0.0
  %v5426 = vmax.f32 %v5362, 0.0
  %v5427 = vmax.f32 %v5363, 0.0
  %v5428 = vmax.f32 %v5364, 0.0
  %v5429 = vmax.f32 %v5365, 0.0
  %v5430 = vmax.f32 %v5366, 0.0
  %v5431 = vmax.f32 %v5367, 0.0
  %v5432 = vmax.f32 %v5368, 0.0
  %v5433 = vmax.f32 %v5369, 0.0
  %v5434 = vmax.f32 %v5370, 0.0
  %v5435 = vmax.f32 %v5371, 0.0
  %v5436 = vmax.f32 %v5372, 0.0
  %v5437 = vmax.f32 %v5373, 0.0
  %v5438 = vmax.f32 %v5374, 0.0
  %v5439 = vmax.f32 %v5375, 0.0
  %v5440 = vmax.f32 %v5376, 0.0
  %v5441 = vmax.f32 %v5377, 0.0
  %v5442 = vmax.f32 %v5378, 0.0
  %v5443 = vmax.f32 %v5379, 0.0
  %v5444 = vmax.f32 %v5380, 0.0
  %v5445 = vmax.f32 %v5381, 0.0
  %v5446 = vmax.f32 %v5382, 0.0
  %v5447 = vmax.f32 %v5383, 0.0
  %v5448 = vmax.f32 %v5384, 0.0
  %v5449 = vmax.f32 %v5385, 0.0
  %v5450 = vmax.f32 %v5386, 0.0
  %v5451 = vmax.f32 %v5387, 0.0
  %v5452 = vmax.f32 %v5388, 0.0
  %v5453 = vmax.f32 %v5389, 0.0
  %v5454 = vmax.f32 %v5390, 0.0
  %v5455 = vmax.f32 %v5391, 0.0
  %v5456 = vmax.f32 %v5392, 0.0
  %v5457 = vmax.f32 %v5393, 0.0
  %v5458 = vmax.f32 %v5394, 0.0
  %v5459 = vmax.f32 %v5395, 0.0
  %v5460 = vmax.f32 %v5396, 0.0
  %v5461 = vmax.f32 %v5397, 0.0
  %v5462 = vmax.f32 %v5398, 0.0
  %v5463 = vmax.f32 %v5399, 0.0
  %v5464 = vmax.f32 %v5400, 0.0
  %v5465 = vmax.f32 %v5401, 0.0
  %v5466 = vmax.f32 %v5402, 0.0
  %v5467 = vmax.f32 %v5403, 0.0
  %v5468 = vmax.f32 %v5404, 0.0
  %5469 = vst.msk [vmem:[%s7] sm:$0xff] %vm99, %v5405
  %5470 = vst.msk [vmem:[%s7 + $0x8] sm:$0xff] %vm99, %v5406
  %5471 = vst.msk [vmem:[%s7 + $0x10] sm:$0xff] %vm99, %v5407
  %5472 = vst.msk [vmem:[%s7 + $0x18] sm:$0xff] %vm99, %v5408
  %5473 = vst.msk [vmem:[%s7 + $0x20] sm:$0xff] %vm99, %v5409
  %5474 = vst.msk [vmem:[%s7 + $0x28] sm:$0xff] %vm99, %v5410
  %5475 = vst.msk [vmem:[%s7 + $0x30] sm:$0xff] %vm99, %v5411
  %5476 = vst.msk [vmem:[%s7 + $0x38] sm:$0xff] %vm99, %v5412
  %5477 = vst.msk [vmem:[%s7 + $0x40] sm:$0xff] %vm99, %v5413
  %5478 = vst.msk [vmem:[%s7 + $0x48] sm:$0xff] %vm99, %v5414
  %5479 = vst.msk [vmem:[%s7 + $0x50] sm:$0xff] %vm99, %v5415
  %5480 = vst.msk [vmem:[%s7 + $0x58] sm:$0xff] %vm99, %v5416
  %5481 = vst.msk [vmem:[%s7 + $0x60] sm:$0xff] %vm99, %v5417
  %5482 = vst.msk [vmem:[%s7 + $0x68] sm:$0xff] %vm99, %v5418
  %5483 = vst.msk [vmem:[%s7 + $0x70] sm:$0xff] %vm99, %v5419
  %5484 = vst.msk [vmem:[%s7 + $0x78] sm:$0xff] %vm99, %v5420
  %5485 = vst.msk [vmem:[%s7 + $0x80] sm:$0xff] %vm99, %v5421
  %5486 = vst.msk [vmem:[%s7 + $0x88] sm:$0xff] %vm99, %v5422
  %5487 = vst.msk [vmem:[%s7 + $0x90] sm:$0xff] %vm99, %v5423
  %5488 = vst.msk [vmem:[%s7 + $0x98] sm:$0xff] %vm99, %v5424
  %5489 = vst.msk [vmem:[%s7 + $0xa0] sm:$0xff] %vm99, %v5425
  %5490 = vst.msk [vmem:[%s7 + $0xa8] sm:$0xff] %vm99, %v5426
  %5491 = vst.msk [vmem:[%s7 + $0xb0] sm:$0xff] %vm99, %v5427
  %5492 = vst.msk [vmem:[%s7 + $0xb8] sm:$0xff] %vm99, %v5428
  %5493 = vst.msk [vmem:[%s7 + $0xc0] sm:$0xff] %vm99, %v5429
  %5494 = vst.msk [vmem:[%s7 + $0xc8] sm:$0xff] %vm99, %v5430
  %5495 = vst.msk [vmem:[%s7 + $0xd0] sm:$0xff] %vm99, %v5431
  %5496 = vst.msk [vmem:[%s7 + $0xd8] sm:$0xff] %vm99, %v5432
  %5497 = vst.msk [vmem:[%s7 + $0xe0] sm:$0xff] %vm99, %v5433
  %5498 = vst.msk [vmem:[%s7 + $0xe8] sm:$0xff] %vm99, %v5434
  %5499 = vst.msk [vmem:[%s7 + $0xf0] sm:$0xff] %vm99, %v5435
  %5500 = vst.msk [vmem:[%s7 + $0xf8] sm:$0xff] %vm99, %v5436
  %5501 = vst.msk [vmem:[%s7 + $0x100] sm:$0xff] %vm99, %v5437
  %5502 = vst.msk [vmem:[%s7 + $0x108] sm:$0xff] %vm99, %v5438
  %5503 = vst.msk [vmem:[%s7 + $0x110] sm:$0xff] %vm99, %v5439
  %5504 = vst.msk [vmem:[%s7 + $0x118] sm:$0xff] %vm99, %v5440
  %5505 = vst.msk [vmem:[%s7 + $0x120] sm:$0xff] %vm99, %v5441
  %5506 = vst.msk [vmem:[%s7 + $0x128] sm:$0xff] %vm99, %v5442
  %5507 = vst.msk [vmem:[%s7 + $0x130] sm:$0xff] %vm99, %v5443
  %5508 = vst.msk [vmem:[%s7 + $0x138] sm:$0xff] %vm99, %v5444
  %5509 = vst.msk [vmem:[%s7 + $0x140] sm:$0xff] %vm99, %v5445
  %5510 = vst.msk [vmem:[%s7 + $0x148] sm:$0xff] %vm99, %v5446
  %5511 = vst.msk [vmem:[%s7 + $0x150] sm:$0xff] %vm99, %v5447
  %5512 = vst.msk [vmem:[%s7 + $0x158] sm:$0xff] %vm99, %v5448
  %5513 = vst.msk [vmem:[%s7 + $0x160] sm:$0xff] %vm99, %v5449
  %5514 = vst.msk [vmem:[%s7 + $0x168] sm:$0xff] %vm99, %v5450
  %5515 = vst.msk [vmem:[%s7 + $0x170] sm:$0xff] %vm99, %v5451
  %5516 = vst.msk [vmem:[%s7 + $0x178] sm:$0xff] %vm99, %v5452
  %5517 = vst.msk [vmem:[%s7 + $0x180] sm:$0xff] %vm99, %v5453
  %5518 = vst.msk [vmem:[%s7 + $0x188] sm:$0xff] %vm99, %v5454
  %5519 = vst.msk [vmem:[%s7 + $0x190] sm:$0xff] %vm99, %v5455
  %5520 = vst.msk [vmem:[%s7 + $0x198] sm:$0xff] %vm99, %v5456
  %5521 = vst.msk [vmem:[%s7 + $0x1a0] sm:$0xff] %vm99, %v5457
  %5522 = vst.msk [vmem:[%s7 + $0x1a8] sm:$0xff] %vm99, %v5458
  %5523 = vst.msk [vmem:[%s7 + $0x1b0] sm:$0xff] %vm99, %v5459
  %5524 = vst.msk [vmem:[%s7 + $0x1b8] sm:$0xff] %vm99, %v5460
  %5525 = vst.msk [vmem:[%s7 + $0x1c0] sm:$0xff] %vm99, %v5461
  %5526 = vst.msk [vmem:[%s7 + $0x1c8] sm:$0xff] %vm99, %v5462
  %5527 = vst.msk [vmem:[%s7 + $0x1d0] sm:$0xff] %vm99, %v5463
  %5528 = vst.msk [vmem:[%s7 + $0x1d8] sm:$0xff] %vm99, %v5464
  %5529 = vst.msk [vmem:[%s7 + $0x1e0] sm:$0xff] %vm99, %v5465
  %5530 = vst.msk [vmem:[%s7 + $0x1e8] sm:$0xff] %vm99, %v5466
  %5531 = vst.msk [vmem:[%s7 + $0x1f0] sm:$0xff] %vm99, %v5467
  %5532 = vst.msk [vmem:[%s7 + $0x1f8] sm:$0xff] %vm99, %v5468
  // Predicated region
  $region30: #{tpu_custom_call.1} parent=0 // pred_check
    _
  $region31: #{tpu_custom_call.1} parent=0 // pred_check_branch
    %5534 = sbr.rel (0) target = $region33
  $region32: #{tpu_custom_call.1} parent=0 // pred_region
    _
  $region33: #{tpu_custom_call.1} parent=0 // pred_fallthru
    _
  // Predicated region
  $region34: #{tpu_custom_call.1} parent=0 // pred_check
    _
  $region35: #{tpu_custom_call.1} parent=0 // pred_check_branch
    %5536 = sbr.rel (0) target = $region37
  $region36: #{tpu_custom_call.1} parent=0 // pred_region
    _
  $region37: #{tpu_custom_call.1} parent=0 // pred_fallthru
    _

</llo_original>
